<compile_context>
chip_gen: v6e
topology: v6e:2x2x1
jax: 0.10.0
libtpu: 0.0.40
codegen_flags: <defaults>
</compile_context>

<pallas_src>
import functools

import jax
import jax.numpy as jnp
from jax.experimental import pallas as pl
from jax.experimental.pallas import tpu as pltpu


def _scl_kernel(x_ref, tri_ref, out_ref, *, num_views, dot_precision):
    """One grid step processes TB whole batches laid out as (TB*V, F) rows."""
    rows, F = x_ref.shape
    V = num_views

    x = x_ref[...].astype(jnp.float32)            # (rows, F), sublane-dense
    tri = tri_ref[...]                            # (F, F) inclusive upper-tri 0/1

    # Inclusive cumulative sum along F with a single MXU matmul:
    #   c[r, f] = sum_{k <= f} x[r, k]
    c = jnp.dot(x, tri, preferred_element_type=jnp.float32,
                precision=dot_precision)

    # --- probe pltpu.roll's rotation direction once (convention-agnostic) ----
    p_row = jax.lax.broadcasted_iota(jnp.int32, (8, 128), 0)
    p_lane = jax.lax.broadcasted_iota(jnp.int32, (8, 128), 1)
    probe = pltpu.roll(p_row.astype(jnp.float32), shift=1, axis=0)
    first = jnp.sum(jnp.where((p_row == 0) & (p_lane == 0), probe, 0.0))
    fwd = first > 3.5   # True -> roll(x, s)[r] == x[(r - s) mod rows] (jnp.roll)

    # --- positive pairs: elementwise accumulation, ONE reduction per block ---
    # Flat row r = t*V + i (batch t, view i).  Rolling by rows-k pairs row r
    # with row r+k (fwd) or r-k (otherwise); the mask keeps only same-batch
    # pairs, each unordered (i, j) pair exactly once.
    rmod = jax.lax.broadcasted_iota(jnp.int32, (rows, F), 0) % V
    acc = jnp.zeros((rows, F), jnp.float32)
    for k in range(1, V):                          # statically unrolled, V small
        partner = pltpu.roll(c, shift=rows - k, axis=0)
        mask_fwd = (rmod < (V - k)).astype(jnp.float32)
        mask_bwd = (rmod >= k).astype(jnp.float32)
        mask = jnp.where(fwd, mask_fwd, mask_bwd)
        acc = acc + mask * jnp.abs(c - partner)    # VPU work only
    pos_partial = jnp.sum(acc)                     # single cross-lane reduction

    # --- negative pairs: rows 0..V-1 (batch 0) vs rows V..2V-1 (batch 1) -----
    # Only the block owning batches 0 and 1 (block 0, since TB >= 2) emits it.
    neg_all = jnp.sum(jnp.abs(c[0:V, :] - c[V:2 * V, :]))
    neg_partial = jnp.where(pl.program_id(0) == 0, neg_all, 0.0)

    # --- lane-dense per-block partial output: lane 0 = pos, lane 1 = neg -----
    o_row = jax.lax.broadcasted_iota(jnp.int32, (1, 8, 128), 1)
    o_lane = jax.lax.broadcasted_iota(jnp.int32, (1, 8, 128), 2)
    out_ref[...] = (jnp.where((o_row == 0) & (o_lane == 0), pos_partial, 0.0)
                    + jnp.where((o_row == 0) & (o_lane == 1), neg_partial, 0.0))


def _vmem_budgets():
    """(pipeline budget, vmem-limit floor, vmem-limit cap) in bytes, per gen."""
    kind = ""
    try:
        kind = jax.devices()[0].device_kind.lower()
    except Exception:                                   # noqa: BLE001
        pass
    if "v7" in kind:                       # 64 MiB physical VMEM per TensorCore
        return 26 * 2**20, 32 * 2**20, 56 * 2**20
    if any(t in kind for t in ("v3", "v4", "v5", "v6")):   # 128 MiB physical
        return 48 * 2**20, 64 * 2**20, 100 * 2**20
    return 26 * 2**20, 32 * 2**20, 56 * 2**20   # unknown: assume tightest (v7x)


def _choose_batch_tile(B, V, F, pipeline_budget):
    """Largest TB (>=2, divides B, TB*V % 8 == 0 or TB == B) fitting VMEM."""
    bytes_per_batch = V * F * 4
    tri_bytes = 2 * F * F * 4                 # worst case: double-buffered tri
    per_block_cap = max(0, pipeline_budget - tri_bytes - 2 * 2**20) // 2
    cands = [tb for tb in range(2, B + 1)
             if B % tb == 0 and ((tb * V) % 8 == 0 or tb == B)]
    if not cands:
        cands = [B]
    fitting = [tb for tb in cands if tb * bytes_per_batch <= per_block_cap]
    if not fitting:
        # No legal tile fits the budget (huge V*F, or prime B with no other
        # divisor): take the smallest legal one and let vmem_limit stretch.
        # TODO(synk): mask ragged tail blocks to allow non-divisor tiles.
        return min(cands)
    best = max(fitting)
    aligned = [tb for tb in fitting if (tb * V) % 128 == 0]   # MXU-height rows
    if aligned and max(aligned) * 2 >= best:
        best = max(aligned)
    return best


def _tri_spec(F, single_buffered):
    """BlockSpec for the resident (F, F) triangular matrix."""
    if single_buffered:
        buffered = getattr(pl, "Buffered", None)
        if buffered is None:
            raise TypeError("pl.Buffered not available in this jax version")
        return pl.BlockSpec((F, F), lambda b: (0, 0), pipeline_mode=buffered(1))
    return pl.BlockSpec((F, F), lambda b: (0, 0))


def _compiler_params(vmem_limit_bytes):
    cls = getattr(pltpu, "CompilerParams", None) or getattr(
        pltpu, "TPUCompilerParams", None)
    if cls is None:
        return None
    return cls(dimension_semantics=("parallel",),    # per-block partial outputs
               vmem_limit_bytes=int(vmem_limit_bytes))


def spectral_contrastive_loss(psds, margin, scaling, batch_tile=None):
    """psds: (B, V, F) float array, B >= 2, V >= 2. Returns scalar loss (f32)."""
    B, V, F = psds.shape
    assert B >= 2, "negative term needs at least two batch elements"
    assert V >= 2, "positive term needs at least two views"

    pipeline_budget, vmem_floor, vmem_cap = _vmem_budgets()
    if batch_tile is None:
        TB = _choose_batch_tile(B, V, F, pipeline_budget)
    else:
        TB = int(batch_tile)
        assert B % TB == 0 and TB >= 2 and ((TB * V) % 8 == 0 or TB == B)
    num_blocks = B // TB
    rows = TB * V

    # Sublane-dense layout: (B, V, F) -> (B*V, F) is a free, contiguous reshape.
    x_flat = psds.reshape(B * V, F)

    # Inclusive upper-triangular ones matrix for the cumsum matmul (built once).
    row_i = jnp.arange(F, dtype=jnp.int32)[:, None]
    col_i = jnp.arange(F, dtype=jnp.int32)[None, :]
    tri = (row_i <= col_i).astype(jnp.float32)                     # (F, F)

    need = 2 * rows * F * 4 + 2 * F * F * 4 + 4 * 2**20
    vmem_limit = int(min(max(vmem_floor, need), vmem_cap))

    def run(tri_single_buffered, dot_precision):
        kern = functools.partial(_scl_kernel, num_views=V,
                                 dot_precision=dot_precision)
        return pl.pallas_call(
            kern,
            out_shape=jax.ShapeDtypeStruct((num_blocks, 8, 128), jnp.float32),
            grid_spec=pltpu.PrefetchScalarGridSpec(
                num_scalar_prefetch=0,
                grid=(num_blocks,),
                in_specs=[
                    pl.BlockSpec((rows, F), lambda b: (b, 0)),   # streamed tile
                    _tri_spec(F, tri_single_buffered),           # resident tri
                ],
                out_specs=pl.BlockSpec((1, 8, 128), lambda b: (b, 0, 0)),
            ),
            compiler_params=_compiler_params(vmem_limit),
        )(x_flat, tri)

    # Preferred config first; fall back if this jax build rejects Buffered(1)
    # single-buffering or HIGHEST-precision dot lowering.  (Eager call, so
    # lowering errors are catchable here.)
    configs = [(True, jax.lax.Precision.HIGHEST),
               (False, jax.lax.Precision.HIGHEST),
               (False, None)]
    partials, last_err = None, None
    for single_buf, prec in configs:
        try:
            partials = run(single_buf, prec)
            break
        except Exception as err:                       # noqa: BLE001
            last_err = err
    if partials is None:
        raise last_err

    # Tiny scalar combine left to XLA (sums over num_blocks partials).
    pos_sum = jnp.sum(partials[:, 0, 0])
    neg_sum = jnp.sum(partials[:, 0, 1])
    num_pairs = V * (V - 1) // 2
    pos = pos_sum * (float(scaling) / (float(F) * float(num_pairs)))
    neg = neg_sum * (float(scaling) / (float(F) * float(V)))
    return jnp.maximum(pos - neg + float(margin), 0.0)


def _reference_loss(psds, margin, scaling):
    """Pure-JAX reference mirroring the PyTorch forward (with the assumed EMD)."""
    B, V, F = psds.shape
    c = jnp.cumsum(psds.astype(jnp.float32), axis=-1)

    def emd(p, q):
        return scaling * jnp.mean(jnp.abs(p - q))

    pos = 0.0
    for b in range(B):
        for i in range(V):
            for j in range(i + 1, V):
                pos = pos + emd(c[b, i], c[b, j])
    pos = pos / (V * (V - 1) // 2)

    # zip(view_ind, view_ind) -> each (v, v) pair V times, divided by V*V.
    neg = sum(emd(c[0, v], c[1, v]) for v in range(V)) / V
    return jnp.maximum(pos - neg + margin, 0.0)


if __name__ == "__main__":
    key = jax.random.PRNGKey(0)
    B, V, F = 8, 4, 128                     # small: batch=8, views=4, freq bins=128
    margin, scaling = 1.0, 0.1

    # PSDs are non-negative power spectra.
    psds = jnp.abs(jax.random.normal(key, (B, V, F), dtype=jnp.float32))

    ref = jax.block_until_ready(_reference_loss(psds, margin, scaling))

    # Default tiling (single block at this toy size).
    loss = jax.block_until_ready(spectral_contrastive_loss(psds, margin, scaling))
    assert jnp.allclose(loss, ref, rtol=1e-3, atol=1e-3), (loss, ref)

    # Force a multi-block grid to exercise the "parallel" per-block-partial path.
    loss2 = jax.block_until_ready(
        spectral_contrastive_loss(psds, margin, scaling, batch_tile=2))
    assert jnp.allclose(loss2, ref, rtol=1e-3, atol=1e-3), (loss2, ref)

    print("KERNEL_OK")
</pallas_src>

<mosaic_0001>
module attributes {stable_mosaic.version = 11 : i64} {
  func.func @_scl_kernel(%arg0: i32, %arg1: memref<32x128xf32, #tpu.memory_space<vmem>>, %arg2: memref<128x128xf32, #tpu.memory_space<vmem>>, %arg3: memref<1x8x128xf32, #tpu.memory_space<vmem>>) attributes {dimension_semantics = [#tpu.dimension_semantics<parallel>], iteration_bounds = array<i64: 1>, scalar_prefetch = 0 : i64, scratch_operands = 0 : i64, tpu.core_type = #tpu.core_type<tc>, window_params = [{transform_indices = @transform_0, window_bounds = array<i64: 32, 128>}, {pipeline_mode = #tpu.pipeline_mode<synchronous>, transform_indices = @transform_1, window_bounds = array<i64: 128, 128>}, {transform_indices = @transform_2, window_bounds = array<i64: 1, 8, 128>}]} {
    %c0 = arith.constant 0 : index
    %c0_0 = arith.constant 0 : index
    %0 = vector.load %arg1[%c0, %c0_0] : memref<32x128xf32, #tpu.memory_space<vmem>>, vector<32x128xf32>
    %c0_1 = arith.constant 0 : index
    %c0_2 = arith.constant 0 : index
    %1 = vector.load %arg2[%c0_1, %c0_2] : memref<128x128xf32, #tpu.memory_space<vmem>>, vector<128x128xf32>
    %cst = arith.constant dense<0.000000e+00> : vector<32x128xf32>
    %2 = tpu.matmul %0, %1, %cst {dimension_numbers = #tpu.dot_dimension_numbers<[1], [0], [0], [1], [0, 0, 1, 1], [], []>, precision = #tpu.contract_precision<fp32>} : vector<32x128xf32>, vector<128x128xf32>, vector<32x128xf32> -> vector<32x128xf32>
    %3 = tpu.iota {dimensions = array<i32: 0>} : vector<8x128xi32>
    %4 = tpu.iota {dimensions = array<i32: 1>} : vector<8x128xi32>
    %5 = arith.sitofp %3 : vector<8x128xi32> to vector<8x128xf32>
    %c1_i32 = arith.constant 1 : i32
    %6 = tpu.dynamic_rotate %5 by %c1_i32 dim 0 : vector<8x128xf32>, i32 -> vector<8x128xf32>
    %c0_i32 = arith.constant 0 : i32
    %7 = vector.broadcast %c0_i32 : i32 to vector<8x128xi32>
    %8 = arith.cmpi eq, %3, %7 : vector<8x128xi32>
    %c0_i32_3 = arith.constant 0 : i32
    %9 = vector.broadcast %c0_i32_3 : i32 to vector<8x128xi32>
    %10 = arith.cmpi eq, %4, %9 : vector<8x128xi32>
    %11 = arith.andi %8, %10 : vector<8x128xi1>
    %cst_4 = arith.constant 0.000000e+00 : f32
    %12 = vector.broadcast %cst_4 : f32 to vector<8x128xf32>
    %13 = arith.select %11, %6, %12 : vector<8x128xi1>, vector<8x128xf32>
    %14 = vector.shape_cast %13 : vector<8x128xf32> to vector<1x8x128xf32>
    %cst_5 = arith.constant dense<0.000000e+00> : vector<1xf32>
    %15 = vector.multi_reduction <add>, %14, %cst_5 [1, 2] : vector<1x8x128xf32> to vector<1xf32>
    %16 = vector.shape_cast %15 : vector<1xf32> to vector<1x1x1xf32>
    %17 = vector.extract %16[0, 0, 0] : f32 from vector<1x1x1xf32>
    %cst_6 = arith.constant 3.500000e+00 : f32
    %18 = arith.cmpf ogt, %17, %cst_6 : f32
    %19 = tpu.iota {dimensions = array<i32: 0>} : vector<32x128xi32>
    %c4_i32 = arith.constant 4 : i32
    %c0_i32_7 = arith.constant 0 : i32
    %20 = arith.cmpi eq, %c4_i32, %c0_i32_7 : i32
    %c1_i32_8 = arith.constant 1 : i32
    %21 = arith.select %20, %c1_i32_8, %c4_i32 : i32
    %22 = vector.broadcast %21 : i32 to vector<32x128xi32>
    %23 = arith.remsi %19, %22 : vector<32x128xi32>
    %c0_i32_9 = arith.constant 0 : i32
    %24 = vector.broadcast %c0_i32_9 : i32 to vector<32x128xi32>
    %25 = arith.cmpi ne, %23, %24 : vector<32x128xi32>
    %c0_i32_10 = arith.constant 0 : i32
    %26 = vector.broadcast %c0_i32_10 : i32 to vector<32x128xi32>
    %27 = arith.cmpi slt, %23, %26 : vector<32x128xi32>
    %c0_i32_11 = arith.constant 0 : i32
    %28 = arith.cmpi slt, %21, %c0_i32_11 : i32
    %29 = vector.broadcast %28 : i1 to vector<32x128xi1>
    %30 = vector.broadcast %29 : vector<32x128xi1> to vector<32x128xi1>
    %31 = arith.xori %27, %30 : vector<32x128xi1>
    %32 = arith.andi %31, %25 : vector<32x128xi1>
    %33 = vector.broadcast %21 : i32 to vector<32x128xi32>
    %34 = arith.addi %23, %33 : vector<32x128xi32>
    %35 = arith.select %32, %34, %23 : vector<32x128xi1>, vector<32x128xi32>
    %cst_12 = arith.constant 0.000000e+00 : f32
    %36 = vector.broadcast %cst_12 : f32 to vector<32x128xf32>
    %c31_i32 = arith.constant 31 : i32
    %37 = tpu.dynamic_rotate %2 by %c31_i32 dim 0 : vector<32x128xf32>, i32 -> vector<32x128xf32>
    %c3_i32 = arith.constant 3 : i32
    %38 = vector.broadcast %c3_i32 : i32 to vector<32x128xi32>
    %39 = arith.cmpi slt, %35, %38 : vector<32x128xi32>
    %40 = arith.extui %39 : vector<32x128xi1> to vector<32x128xi32>
    %41 = arith.sitofp %40 : vector<32x128xi32> to vector<32x128xf32>
    %c1_i32_13 = arith.constant 1 : i32
    %42 = vector.broadcast %c1_i32_13 : i32 to vector<32x128xi32>
    %43 = arith.cmpi sge, %35, %42 : vector<32x128xi32>
    %44 = arith.extui %43 : vector<32x128xi1> to vector<32x128xi32>
    %45 = arith.sitofp %44 : vector<32x128xi32> to vector<32x128xf32>
    %46 = arith.select %18, %41, %45 : vector<32x128xf32>
    %47 = arith.subf %2, %37 : vector<32x128xf32>
    %48 = math.absf %47 : vector<32x128xf32>
    %49 = arith.mulf %46, %48 : vector<32x128xf32>
    %50 = arith.addf %36, %49 : vector<32x128xf32>
    %c30_i32 = arith.constant 30 : i32
    %51 = tpu.dynamic_rotate %2 by %c30_i32 dim 0 : vector<32x128xf32>, i32 -> vector<32x128xf32>
    %c2_i32 = arith.constant 2 : i32
    %52 = vector.broadcast %c2_i32 : i32 to vector<32x128xi32>
    %53 = arith.cmpi slt, %35, %52 : vector<32x128xi32>
    %54 = arith.extui %53 : vector<32x128xi1> to vector<32x128xi32>
    %55 = arith.sitofp %54 : vector<32x128xi32> to vector<32x128xf32>
    %c2_i32_14 = arith.constant 2 : i32
    %56 = vector.broadcast %c2_i32_14 : i32 to vector<32x128xi32>
    %57 = arith.cmpi sge, %35, %56 : vector<32x128xi32>
    %58 = arith.extui %57 : vector<32x128xi1> to vector<32x128xi32>
    %59 = arith.sitofp %58 : vector<32x128xi32> to vector<32x128xf32>
    %60 = arith.select %18, %55, %59 : vector<32x128xf32>
    %61 = arith.subf %2, %51 : vector<32x128xf32>
    %62 = math.absf %61 : vector<32x128xf32>
    %63 = arith.mulf %60, %62 : vector<32x128xf32>
    %64 = arith.addf %50, %63 : vector<32x128xf32>
    %c29_i32 = arith.constant 29 : i32
    %65 = tpu.dynamic_rotate %2 by %c29_i32 dim 0 : vector<32x128xf32>, i32 -> vector<32x128xf32>
    %c1_i32_15 = arith.constant 1 : i32
    %66 = vector.broadcast %c1_i32_15 : i32 to vector<32x128xi32>
    %67 = arith.cmpi slt, %35, %66 : vector<32x128xi32>
    %68 = arith.extui %67 : vector<32x128xi1> to vector<32x128xi32>
    %69 = arith.sitofp %68 : vector<32x128xi32> to vector<32x128xf32>
    %c3_i32_16 = arith.constant 3 : i32
    %70 = vector.broadcast %c3_i32_16 : i32 to vector<32x128xi32>
    %71 = arith.cmpi sge, %35, %70 : vector<32x128xi32>
    %72 = arith.extui %71 : vector<32x128xi1> to vector<32x128xi32>
    %73 = arith.sitofp %72 : vector<32x128xi32> to vector<32x128xf32>
    %74 = arith.select %18, %69, %73 : vector<32x128xf32>
    %75 = arith.subf %2, %65 : vector<32x128xf32>
    %76 = math.absf %75 : vector<32x128xf32>
    %77 = arith.mulf %74, %76 : vector<32x128xf32>
    %78 = arith.addf %64, %77 : vector<32x128xf32>
    %79 = vector.shape_cast %78 : vector<32x128xf32> to vector<1x32x128xf32>
    %cst_17 = arith.constant dense<0.000000e+00> : vector<1xf32>
    %80 = vector.multi_reduction <add>, %79, %cst_17 [1, 2] : vector<1x32x128xf32> to vector<1xf32>
    %81 = vector.shape_cast %80 : vector<1xf32> to vector<1x1x1xf32>
    %82 = vector.extract %81[0, 0, 0] : f32 from vector<1x1x1xf32>
    %83 = vector.extract_strided_slice %2 {offsets = [0, 0], sizes = [4, 128], strides = [1, 1]} : vector<32x128xf32> to vector<4x128xf32>
    %84 = vector.extract_strided_slice %2 {offsets = [4, 0], sizes = [4, 128], strides = [1, 1]} : vector<32x128xf32> to vector<4x128xf32>
    %85 = arith.subf %83, %84 : vector<4x128xf32>
    %86 = math.absf %85 : vector<4x128xf32>
    %87 = vector.shape_cast %86 : vector<4x128xf32> to vector<1x4x128xf32>
    %cst_18 = arith.constant dense<0.000000e+00> : vector<1xf32>
    %88 = vector.multi_reduction <add>, %87, %cst_18 [1, 2] : vector<1x4x128xf32> to vector<1xf32>
    %89 = vector.shape_cast %88 : vector<1xf32> to vector<1x1x1xf32>
    %90 = vector.extract %89[0, 0, 0] : f32 from vector<1x1x1xf32>
    %c0_i32_19 = arith.constant 0 : i32
    %91 = arith.cmpi eq, %arg0, %c0_i32_19 : i32
    %cst_20 = arith.constant 0.000000e+00 : f32
    %92 = arith.select %91, %90, %cst_20 : f32
    %93 = tpu.iota {dimensions = array<i32: 1>} : vector<1x8x128xi32>
    %94 = tpu.iota {dimensions = array<i32: 2>} : vector<1x8x128xi32>
    %c0_i32_21 = arith.constant 0 : i32
    %95 = vector.broadcast %c0_i32_21 : i32 to vector<1x8x128xi32>
    %96 = arith.cmpi eq, %93, %95 : vector<1x8x128xi32>
    %c0_i32_22 = arith.constant 0 : i32
    %97 = vector.broadcast %c0_i32_22 : i32 to vector<1x8x128xi32>
    %98 = arith.cmpi eq, %94, %97 : vector<1x8x128xi32>
    %99 = arith.andi %96, %98 : vector<1x8x128xi1>
    %cst_23 = arith.constant 0.000000e+00 : f32
    %100 = vector.broadcast %82 : f32 to vector<1x8x128xf32>
    %101 = vector.broadcast %cst_23 : f32 to vector<1x8x128xf32>
    %102 = arith.select %99, %100, %101 : vector<1x8x128xi1>, vector<1x8x128xf32>
    %c0_i32_24 = arith.constant 0 : i32
    %103 = vector.broadcast %c0_i32_24 : i32 to vector<1x8x128xi32>
    %104 = arith.cmpi eq, %93, %103 : vector<1x8x128xi32>
    %c1_i32_25 = arith.constant 1 : i32
    %105 = vector.broadcast %c1_i32_25 : i32 to vector<1x8x128xi32>
    %106 = arith.cmpi eq, %94, %105 : vector<1x8x128xi32>
    %107 = arith.andi %104, %106 : vector<1x8x128xi1>
    %cst_26 = arith.constant 0.000000e+00 : f32
    %108 = vector.broadcast %92 : f32 to vector<1x8x128xf32>
    %109 = vector.broadcast %cst_26 : f32 to vector<1x8x128xf32>
    %110 = arith.select %107, %108, %109 : vector<1x8x128xi1>, vector<1x8x128xf32>
    %111 = arith.addf %102, %110 : vector<1x8x128xf32>
    %c0_27 = arith.constant 0 : index
    %c0_28 = arith.constant 0 : index
    %c0_29 = arith.constant 0 : index
    %112 = vector.load %arg3[%c0_27, %c0_28, %c0_29] : memref<1x8x128xf32, #tpu.memory_space<vmem>>, vector<1x8x128xf32>
    tpu.vector_store %arg3[%c0_27, %c0_28, %c0_29], %111 {strides = array<i32>} : memref<1x8x128xf32, #tpu.memory_space<vmem>>, vector<1x8x128xf32>,
    return
  }
  func.func @transform_0(%arg0: i32) -> (i32, i32) {
    %c0_i32 = arith.constant 0 : i32
    %c0_i32_0 = arith.constant 0 : i32
    return %arg0, %c0_i32 : i32, i32
  }
  func.func @transform_1(%arg0: i32) -> (i32, i32) {
    %c0_i32 = arith.constant 0 : i32
    %c0_i32_0 = arith.constant 0 : i32
    %c0_i32_1 = arith.constant 0 : i32
    return %c0_i32, %c0_i32_0 : i32, i32
  }
  func.func @transform_2(%arg0: i32) -> (i32, i32, i32) {
    %c0_i32 = arith.constant 0 : i32
    %c0_i32_0 = arith.constant 0 : i32
    %c0_i32_1 = arith.constant 0 : i32
    return %arg0, %c0_i32, %c0_i32_0 : i32, i32, i32
  }
}

module attributes {stable_mosaic.version = 11 : i64} {
  func.func @_scl_kernel(%arg0: i32, %arg1: memref<32x128xf32, #tpu.memory_space<vmem>>, %arg2: memref<128x128xf32, #tpu.memory_space<vmem>>, %arg3: memref<1x8x128xf32, #tpu.memory_space<vmem>>) attributes {dimension_semantics = [#tpu.dimension_semantics<parallel>], iteration_bounds = array<i64: 1>, scalar_prefetch = 0 : i64, scratch_operands = 0 : i64, tpu.core_type = #tpu.core_type<tc>, window_params = [{transform_indices = @transform_0, window_bounds = array<i64: 32, 128>}, {pipeline_mode = #tpu.pipeline_mode<synchronous>, transform_indices = @transform_1, window_bounds = array<i64: 128, 128>}, {transform_indices = @transform_2, window_bounds = array<i64: 1, 8, 128>}]} {
    %c0 = arith.constant 0 : index
    %c0_0 = arith.constant 0 : index
    %0 = vector.load %arg1[%c0, %c0_0] : memref<32x128xf32, #tpu.memory_space<vmem>>, vector<32x128xf32>
    %c0_1 = arith.constant 0 : index
    %c0_2 = arith.constant 0 : index
    %1 = vector.load %arg2[%c0_1, %c0_2] : memref<128x128xf32, #tpu.memory_space<vmem>>, vector<128x128xf32>
    %cst = arith.constant dense<0.000000e+00> : vector<32x128xf32>
    %2 = tpu.matmul %0, %1, %cst {dimension_numbers = #tpu.dot_dimension_numbers<[1], [0], [0], [1], [0, 0, 1, 1], [], []>, precision = #tpu.contract_precision<fp32>} : vector<32x128xf32>, vector<128x128xf32>, vector<32x128xf32> -> vector<32x128xf32>
    %3 = tpu.iota {dimensions = array<i32: 0>} : vector<8x128xi32>
    %4 = tpu.iota {dimensions = array<i32: 1>} : vector<8x128xi32>
    %5 = arith.sitofp %3 : vector<8x128xi32> to vector<8x128xf32>
    %c1_i32 = arith.constant 1 : i32
    %6 = tpu.dynamic_rotate %5 by %c1_i32 dim 0 : vector<8x128xf32>, i32 -> vector<8x128xf32>
    %c0_i32 = arith.constant 0 : i32
    %7 = vector.broadcast %c0_i32 : i32 to vector<8x128xi32>
    %8 = arith.cmpi eq, %3, %7 : vector<8x128xi32>
    %c0_i32_3 = arith.constant 0 : i32
    %9 = vector.broadcast %c0_i32_3 : i32 to vector<8x128xi32>
    %10 = arith.cmpi eq, %4, %9 : vector<8x128xi32>
    %11 = arith.andi %8, %10 : vector<8x128xi1>
    %cst_4 = arith.constant 0.000000e+00 : f32
    %12 = vector.broadcast %cst_4 : f32 to vector<8x128xf32>
    %13 = arith.select %11, %6, %12 : vector<8x128xi1>, vector<8x128xf32>
    %14 = vector.shape_cast %13 : vector<8x128xf32> to vector<1x8x128xf32>
    %cst_5 = arith.constant dense<0.000000e+00> : vector<1xf32>
    %15 = vector.multi_reduction <add>, %14, %cst_5 [1, 2] : vector<1x8x128xf32> to vector<1xf32>
    %16 = vector.shape_cast %15 : vector<1xf32> to vector<1x1x1xf32>
    %17 = vector.extract %16[0, 0, 0] : f32 from vector<1x1x1xf32>
    %cst_6 = arith.constant 3.500000e+00 : f32
    %18 = arith.cmpf ogt, %17, %cst_6 : f32
    %19 = tpu.iota {dimensions = array<i32: 0>} : vector<32x128xi32>
    %c4_i32 = arith.constant 4 : i32
    %c0_i32_7 = arith.constant 0 : i32
    %20 = arith.cmpi eq, %c4_i32, %c0_i32_7 : i32
    %c1_i32_8 = arith.constant 1 : i32
    %21 = arith.select %20, %c1_i32_8, %c4_i32 : i32
    %22 = vector.broadcast %21 : i32 to vector<32x128xi32>
    %23 = arith.remsi %19, %22 : vector<32x128xi32>
    %c0_i32_9 = arith.constant 0 : i32
    %24 = vector.broadcast %c0_i32_9 : i32 to vector<32x128xi32>
    %25 = arith.cmpi ne, %23, %24 : vector<32x128xi32>
    %c0_i32_10 = arith.constant 0 : i32
    %26 = vector.broadcast %c0_i32_10 : i32 to vector<32x128xi32>
    %27 = arith.cmpi slt, %23, %26 : vector<32x128xi32>
    %c0_i32_11 = arith.constant 0 : i32
    %28 = arith.cmpi slt, %21, %c0_i32_11 : i32
    %29 = vector.broadcast %28 : i1 to vector<32x128xi1>
    %30 = vector.broadcast %29 : vector<32x128xi1> to vector<32x128xi1>
    %31 = arith.xori %27, %30 : vector<32x128xi1>
    %32 = arith.andi %31, %25 : vector<32x128xi1>
    %33 = vector.broadcast %21 : i32 to vector<32x128xi32>
    %34 = arith.addi %23, %33 : vector<32x128xi32>
    %35 = arith.select %32, %34, %23 : vector<32x128xi1>, vector<32x128xi32>
    %cst_12 = arith.constant 0.000000e+00 : f32
    %36 = vector.broadcast %cst_12 : f32 to vector<32x128xf32>
    %c31_i32 = arith.constant 31 : i32
    %37 = tpu.dynamic_rotate %2 by %c31_i32 dim 0 : vector<32x128xf32>, i32 -> vector<32x128xf32>
    %c3_i32 = arith.constant 3 : i32
    %38 = vector.broadcast %c3_i32 : i32 to vector<32x128xi32>
    %39 = arith.cmpi slt, %35, %38 : vector<32x128xi32>
    %40 = arith.extui %39 : vector<32x128xi1> to vector<32x128xi32>
    %41 = arith.sitofp %40 : vector<32x128xi32> to vector<32x128xf32>
    %c1_i32_13 = arith.constant 1 : i32
    %42 = vector.broadcast %c1_i32_13 : i32 to vector<32x128xi32>
    %43 = arith.cmpi sge, %35, %42 : vector<32x128xi32>
    %44 = arith.extui %43 : vector<32x128xi1> to vector<32x128xi32>
    %45 = arith.sitofp %44 : vector<32x128xi32> to vector<32x128xf32>
    %46 = arith.select %18, %41, %45 : vector<32x128xf32>
    %47 = arith.subf %2, %37 : vector<32x128xf32>
    %48 = math.absf %47 : vector<32x128xf32>
    %49 = arith.mulf %46, %48 : vector<32x128xf32>
    %50 = arith.addf %36, %49 : vector<32x128xf32>
    %c30_i32 = arith.constant 30 : i32
    %51 = tpu.dynamic_rotate %2 by %c30_i32 dim 0 : vector<32x128xf32>, i32 -> vector<32x128xf32>
    %c2_i32 = arith.constant 2 : i32
    %52 = vector.broadcast %c2_i32 : i32 to vector<32x128xi32>
    %53 = arith.cmpi slt, %35, %52 : vector<32x128xi32>
    %54 = arith.extui %53 : vector<32x128xi1> to vector<32x128xi32>
    %55 = arith.sitofp %54 : vector<32x128xi32> to vector<32x128xf32>
    %c2_i32_14 = arith.constant 2 : i32
    %56 = vector.broadcast %c2_i32_14 : i32 to vector<32x128xi32>
    %57 = arith.cmpi sge, %35, %56 : vector<32x128xi32>
    %58 = arith.extui %57 : vector<32x128xi1> to vector<32x128xi32>
    %59 = arith.sitofp %58 : vector<32x128xi32> to vector<32x128xf32>
    %60 = arith.select %18, %55, %59 : vector<32x128xf32>
    %61 = arith.subf %2, %51 : vector<32x128xf32>
    %62 = math.absf %61 : vector<32x128xf32>
    %63 = arith.mulf %60, %62 : vector<32x128xf32>
    %64 = arith.addf %50, %63 : vector<32x128xf32>
    %c29_i32 = arith.constant 29 : i32
    %65 = tpu.dynamic_rotate %2 by %c29_i32 dim 0 : vector<32x128xf32>, i32 -> vector<32x128xf32>
    %c1_i32_15 = arith.constant 1 : i32
    %66 = vector.broadcast %c1_i32_15 : i32 to vector<32x128xi32>
    %67 = arith.cmpi slt, %35, %66 : vector<32x128xi32>
    %68 = arith.extui %67 : vector<32x128xi1> to vector<32x128xi32>
    %69 = arith.sitofp %68 : vector<32x128xi32> to vector<32x128xf32>
    %c3_i32_16 = arith.constant 3 : i32
    %70 = vector.broadcast %c3_i32_16 : i32 to vector<32x128xi32>
    %71 = arith.cmpi sge, %35, %70 : vector<32x128xi32>
    %72 = arith.extui %71 : vector<32x128xi1> to vector<32x128xi32>
    %73 = arith.sitofp %72 : vector<32x128xi32> to vector<32x128xf32>
    %74 = arith.select %18, %69, %73 : vector<32x128xf32>
    %75 = arith.subf %2, %65 : vector<32x128xf32>
    %76 = math.absf %75 : vector<32x128xf32>
    %77 = arith.mulf %74, %76 : vector<32x128xf32>
    %78 = arith.addf %64, %77 : vector<32x128xf32>
    %79 = vector.shape_cast %78 : vector<32x128xf32> to vector<1x32x128xf32>
    %cst_17 = arith.constant dense<0.000000e+00> : vector<1xf32>
    %80 = vector.multi_reduction <add>, %79, %cst_17 [1, 2] : vector<1x32x128xf32> to vector<1xf32>
    %81 = vector.shape_cast %80 : vector<1xf32> to vector<1x1x1xf32>
    %82 = vector.extract %81[0, 0, 0] : f32 from vector<1x1x1xf32>
    %83 = vector.extract_strided_slice %2 {offsets = [0, 0], sizes = [4, 128], strides = [1, 1]} : vector<32x128xf32> to vector<4x128xf32>
    %84 = vector.extract_strided_slice %2 {offsets = [4, 0], sizes = [4, 128], strides = [1, 1]} : vector<32x128xf32> to vector<4x128xf32>
    %85 = arith.subf %83, %84 : vector<4x128xf32>
    %86 = math.absf %85 : vector<4x128xf32>
    %87 = vector.shape_cast %86 : vector<4x128xf32> to vector<1x4x128xf32>
    %cst_18 = arith.constant dense<0.000000e+00> : vector<1xf32>
    %88 = vector.multi_reduction <add>, %87, %cst_18 [1, 2] : vector<1x4x128xf32> to vector<1xf32>
    %89 = vector.shape_cast %88 : vector<1xf32> to vector<1x1x1xf32>
    %90 = vector.extract %89[0, 0, 0] : f32 from vector<1x1x1xf32>
    %c0_i32_19 = arith.constant 0 : i32
    %91 = arith.cmpi eq, %arg0, %c0_i32_19 : i32
    %cst_20 = arith.constant 0.000000e+00 : f32
    %92 = arith.select %91, %90, %cst_20 : f32
    %93 = tpu.iota {dimensions = array<i32: 1>} : vector<1x8x128xi32>
    %94 = tpu.iota {dimensions = array<i32: 2>} : vector<1x8x128xi32>
    %c0_i32_21 = arith.constant 0 : i32
    %95 = vector.broadcast %c0_i32_21 : i32 to vector<1x8x128xi32>
    %96 = arith.cmpi eq, %93, %95 : vector<1x8x128xi32>
    %c0_i32_22 = arith.constant 0 : i32
    %97 = vector.broadcast %c0_i32_22 : i32 to vector<1x8x128xi32>
    %98 = arith.cmpi eq, %94, %97 : vector<1x8x128xi32>
    %99 = arith.andi %96, %98 : vector<1x8x128xi1>
    %cst_23 = arith.constant 0.000000e+00 : f32
    %100 = vector.broadcast %82 : f32 to vector<1x8x128xf32>
    %101 = vector.broadcast %cst_23 : f32 to vector<1x8x128xf32>
    %102 = arith.select %99, %100, %101 : vector<1x8x128xi1>, vector<1x8x128xf32>
    %c0_i32_24 = arith.constant 0 : i32
    %103 = vector.broadcast %c0_i32_24 : i32 to vector<1x8x128xi32>
    %104 = arith.cmpi eq, %93, %103 : vector<1x8x128xi32>
    %c1_i32_25 = arith.constant 1 : i32
    %105 = vector.broadcast %c1_i32_25 : i32 to vector<1x8x128xi32>
    %106 = arith.cmpi eq, %94, %105 : vector<1x8x128xi32>
    %107 = arith.andi %104, %106 : vector<1x8x128xi1>
    %cst_26 = arith.constant 0.000000e+00 : f32
    %108 = vector.broadcast %92 : f32 to vector<1x8x128xf32>
    %109 = vector.broadcast %cst_26 : f32 to vector<1x8x128xf32>
    %110 = arith.select %107, %108, %109 : vector<1x8x128xi1>, vector<1x8x128xf32>
    %111 = arith.addf %102, %110 : vector<1x8x128xf32>
    %c0_27 = arith.constant 0 : index
    %c0_28 = arith.constant 0 : index
    %c0_29 = arith.constant 0 : index
    %112 = vector.load %arg3[%c0_27, %c0_28, %c0_29] : memref<1x8x128xf32, #tpu.memory_space<vmem>>, vector<1x8x128xf32>
    tpu.vector_store %arg3[%c0_27, %c0_28, %c0_29], %111 {strides = array<i32>} : memref<1x8x128xf32, #tpu.memory_space<vmem>>, vector<1x8x128xf32>,
    return
  }
  func.func @transform_0(%arg0: i32) -> (i32, i32) {
    %c0_i32 = arith.constant 0 : i32
    %c0_i32_0 = arith.constant 0 : i32
    return %arg0, %c0_i32 : i32, i32
  }
  func.func @transform_1(%arg0: i32) -> (i32, i32) {
    %c0_i32 = arith.constant 0 : i32
    %c0_i32_0 = arith.constant 0 : i32
    %c0_i32_1 = arith.constant 0 : i32
    return %c0_i32, %c0_i32_0 : i32, i32
  }
  func.func @transform_2(%arg0: i32) -> (i32, i32, i32) {
    %c0_i32 = arith.constant 0 : i32
    %c0_i32_0 = arith.constant 0 : i32
    %c0_i32_1 = arith.constant 0 : i32
    return %arg0, %c0_i32, %c0_i32_0 : i32, i32, i32
  }
}

module attributes {stable_mosaic.version = 11 : i64} {
  func.func @_scl_kernel(%arg0: i32, %arg1: memref<32x128xf32, #tpu.memory_space<vmem>>, %arg2: memref<128x128xf32, #tpu.memory_space<vmem>>, %arg3: memref<1x8x128xf32, #tpu.memory_space<vmem>>) attributes {dimension_semantics = [#tpu.dimension_semantics<parallel>], iteration_bounds = array<i64: 1>, scalar_prefetch = 0 : i64, scratch_operands = 0 : i64, tpu.core_type = #tpu.core_type<tc>, window_params = [{transform_indices = @transform_0, window_bounds = array<i64: 32, 128>}, {pipeline_mode = #tpu.pipeline_mode<synchronous>, transform_indices = @transform_1, window_bounds = array<i64: 128, 128>}, {transform_indices = @transform_2, window_bounds = array<i64: 1, 8, 128>}]} {
    %c0 = arith.constant 0 : index
    %c0_0 = arith.constant 0 : index
    %0 = vector.load %arg1[%c0, %c0_0] : memref<32x128xf32, #tpu.memory_space<vmem>>, vector<32x128xf32>
    %c0_1 = arith.constant 0 : index
    %c0_2 = arith.constant 0 : index
    %1 = vector.load %arg2[%c0_1, %c0_2] : memref<128x128xf32, #tpu.memory_space<vmem>>, vector<128x128xf32>
    %cst = arith.constant dense<0.000000e+00> : vector<32x128xf32>
    %2 = tpu.matmul %0, %1, %cst {dimension_numbers = #tpu.dot_dimension_numbers<[1], [0], [0], [1], [0, 0, 1, 1], [], []>} : vector<32x128xf32>, vector<128x128xf32>, vector<32x128xf32> -> vector<32x128xf32>
    %3 = tpu.iota {dimensions = array<i32: 0>} : vector<8x128xi32>
    %4 = tpu.iota {dimensions = array<i32: 1>} : vector<8x128xi32>
    %5 = arith.sitofp %3 : vector<8x128xi32> to vector<8x128xf32>
    %c1_i32 = arith.constant 1 : i32
    %6 = tpu.dynamic_rotate %5 by %c1_i32 dim 0 : vector<8x128xf32>, i32 -> vector<8x128xf32>
    %c0_i32 = arith.constant 0 : i32
    %7 = vector.broadcast %c0_i32 : i32 to vector<8x128xi32>
    %8 = arith.cmpi eq, %3, %7 : vector<8x128xi32>
    %c0_i32_3 = arith.constant 0 : i32
    %9 = vector.broadcast %c0_i32_3 : i32 to vector<8x128xi32>
    %10 = arith.cmpi eq, %4, %9 : vector<8x128xi32>
    %11 = arith.andi %8, %10 : vector<8x128xi1>
    %cst_4 = arith.constant 0.000000e+00 : f32
    %12 = vector.broadcast %cst_4 : f32 to vector<8x128xf32>
    %13 = arith.select %11, %6, %12 : vector<8x128xi1>, vector<8x128xf32>
    %14 = vector.shape_cast %13 : vector<8x128xf32> to vector<1x8x128xf32>
    %cst_5 = arith.constant dense<0.000000e+00> : vector<1xf32>
    %15 = vector.multi_reduction <add>, %14, %cst_5 [1, 2] : vector<1x8x128xf32> to vector<1xf32>
    %16 = vector.shape_cast %15 : vector<1xf32> to vector<1x1x1xf32>
    %17 = vector.extract %16[0, 0, 0] : f32 from vector<1x1x1xf32>
    %cst_6 = arith.constant 3.500000e+00 : f32
    %18 = arith.cmpf ogt, %17, %cst_6 : f32
    %19 = tpu.iota {dimensions = array<i32: 0>} : vector<32x128xi32>
    %c4_i32 = arith.constant 4 : i32
    %c0_i32_7 = arith.constant 0 : i32
    %20 = arith.cmpi eq, %c4_i32, %c0_i32_7 : i32
    %c1_i32_8 = arith.constant 1 : i32
    %21 = arith.select %20, %c1_i32_8, %c4_i32 : i32
    %22 = vector.broadcast %21 : i32 to vector<32x128xi32>
    %23 = arith.remsi %19, %22 : vector<32x128xi32>
    %c0_i32_9 = arith.constant 0 : i32
    %24 = vector.broadcast %c0_i32_9 : i32 to vector<32x128xi32>
    %25 = arith.cmpi ne, %23, %24 : vector<32x128xi32>
    %c0_i32_10 = arith.constant 0 : i32
    %26 = vector.broadcast %c0_i32_10 : i32 to vector<32x128xi32>
    %27 = arith.cmpi slt, %23, %26 : vector<32x128xi32>
    %c0_i32_11 = arith.constant 0 : i32
    %28 = arith.cmpi slt, %21, %c0_i32_11 : i32
    %29 = vector.broadcast %28 : i1 to vector<32x128xi1>
    %30 = vector.broadcast %29 : vector<32x128xi1> to vector<32x128xi1>
    %31 = arith.xori %27, %30 : vector<32x128xi1>
    %32 = arith.andi %31, %25 : vector<32x128xi1>
    %33 = vector.broadcast %21 : i32 to vector<32x128xi32>
    %34 = arith.addi %23, %33 : vector<32x128xi32>
    %35 = arith.select %32, %34, %23 : vector<32x128xi1>, vector<32x128xi32>
    %cst_12 = arith.constant 0.000000e+00 : f32
    %36 = vector.broadcast %cst_12 : f32 to vector<32x128xf32>
    %c31_i32 = arith.constant 31 : i32
    %37 = tpu.dynamic_rotate %2 by %c31_i32 dim 0 : vector<32x128xf32>, i32 -> vector<32x128xf32>
    %c3_i32 = arith.constant 3 : i32
    %38 = vector.broadcast %c3_i32 : i32 to vector<32x128xi32>
    %39 = arith.cmpi slt, %35, %38 : vector<32x128xi32>
    %40 = arith.extui %39 : vector<32x128xi1> to vector<32x128xi32>
    %41 = arith.sitofp %40 : vector<32x128xi32> to vector<32x128xf32>
    %c1_i32_13 = arith.constant 1 : i32
    %42 = vector.broadcast %c1_i32_13 : i32 to vector<32x128xi32>
    %43 = arith.cmpi sge, %35, %42 : vector<32x128xi32>
    %44 = arith.extui %43 : vector<32x128xi1> to vector<32x128xi32>
    %45 = arith.sitofp %44 : vector<32x128xi32> to vector<32x128xf32>
    %46 = arith.select %18, %41, %45 : vector<32x128xf32>
    %47 = arith.subf %2, %37 : vector<32x128xf32>
    %48 = math.absf %47 : vector<32x128xf32>
    %49 = arith.mulf %46, %48 : vector<32x128xf32>
    %50 = arith.addf %36, %49 : vector<32x128xf32>
    %c30_i32 = arith.constant 30 : i32
    %51 = tpu.dynamic_rotate %2 by %c30_i32 dim 0 : vector<32x128xf32>, i32 -> vector<32x128xf32>
    %c2_i32 = arith.constant 2 : i32
    %52 = vector.broadcast %c2_i32 : i32 to vector<32x128xi32>
    %53 = arith.cmpi slt, %35, %52 : vector<32x128xi32>
    %54 = arith.extui %53 : vector<32x128xi1> to vector<32x128xi32>
    %55 = arith.sitofp %54 : vector<32x128xi32> to vector<32x128xf32>
    %c2_i32_14 = arith.constant 2 : i32
    %56 = vector.broadcast %c2_i32_14 : i32 to vector<32x128xi32>
    %57 = arith.cmpi sge, %35, %56 : vector<32x128xi32>
    %58 = arith.extui %57 : vector<32x128xi1> to vector<32x128xi32>
    %59 = arith.sitofp %58 : vector<32x128xi32> to vector<32x128xf32>
    %60 = arith.select %18, %55, %59 : vector<32x128xf32>
    %61 = arith.subf %2, %51 : vector<32x128xf32>
    %62 = math.absf %61 : vector<32x128xf32>
    %63 = arith.mulf %60, %62 : vector<32x128xf32>
    %64 = arith.addf %50, %63 : vector<32x128xf32>
    %c29_i32 = arith.constant 29 : i32
    %65 = tpu.dynamic_rotate %2 by %c29_i32 dim 0 : vector<32x128xf32>, i32 -> vector<32x128xf32>
    %c1_i32_15 = arith.constant 1 : i32
    %66 = vector.broadcast %c1_i32_15 : i32 to vector<32x128xi32>
    %67 = arith.cmpi slt, %35, %66 : vector<32x128xi32>
    %68 = arith.extui %67 : vector<32x128xi1> to vector<32x128xi32>
    %69 = arith.sitofp %68 : vector<32x128xi32> to vector<32x128xf32>
    %c3_i32_16 = arith.constant 3 : i32
    %70 = vector.broadcast %c3_i32_16 : i32 to vector<32x128xi32>
    %71 = arith.cmpi sge, %35, %70 : vector<32x128xi32>
    %72 = arith.extui %71 : vector<32x128xi1> to vector<32x128xi32>
    %73 = arith.sitofp %72 : vector<32x128xi32> to vector<32x128xf32>
    %74 = arith.select %18, %69, %73 : vector<32x128xf32>
    %75 = arith.subf %2, %65 : vector<32x128xf32>
    %76 = math.absf %75 : vector<32x128xf32>
    %77 = arith.mulf %74, %76 : vector<32x128xf32>
    %78 = arith.addf %64, %77 : vector<32x128xf32>
    %79 = vector.shape_cast %78 : vector<32x128xf32> to vector<1x32x128xf32>
    %cst_17 = arith.constant dense<0.000000e+00> : vector<1xf32>
    %80 = vector.multi_reduction <add>, %79, %cst_17 [1, 2] : vector<1x32x128xf32> to vector<1xf32>
    %81 = vector.shape_cast %80 : vector<1xf32> to vector<1x1x1xf32>
    %82 = vector.extract %81[0, 0, 0] : f32 from vector<1x1x1xf32>
    %83 = vector.extract_strided_slice %2 {offsets = [0, 0], sizes = [4, 128], strides = [1, 1]} : vector<32x128xf32> to vector<4x128xf32>
    %84 = vector.extract_strided_slice %2 {offsets = [4, 0], sizes = [4, 128], strides = [1, 1]} : vector<32x128xf32> to vector<4x128xf32>
    %85 = arith.subf %83, %84 : vector<4x128xf32>
    %86 = math.absf %85 : vector<4x128xf32>
    %87 = vector.shape_cast %86 : vector<4x128xf32> to vector<1x4x128xf32>
    %cst_18 = arith.constant dense<0.000000e+00> : vector<1xf32>
    %88 = vector.multi_reduction <add>, %87, %cst_18 [1, 2] : vector<1x4x128xf32> to vector<1xf32>
    %89 = vector.shape_cast %88 : vector<1xf32> to vector<1x1x1xf32>
    %90 = vector.extract %89[0, 0, 0] : f32 from vector<1x1x1xf32>
    %c0_i32_19 = arith.constant 0 : i32
    %91 = arith.cmpi eq, %arg0, %c0_i32_19 : i32
    %cst_20 = arith.constant 0.000000e+00 : f32
    %92 = arith.select %91, %90, %cst_20 : f32
    %93 = tpu.iota {dimensions = array<i32: 1>} : vector<1x8x128xi32>
    %94 = tpu.iota {dimensions = array<i32: 2>} : vector<1x8x128xi32>
    %c0_i32_21 = arith.constant 0 : i32
    %95 = vector.broadcast %c0_i32_21 : i32 to vector<1x8x128xi32>
    %96 = arith.cmpi eq, %93, %95 : vector<1x8x128xi32>
    %c0_i32_22 = arith.constant 0 : i32
    %97 = vector.broadcast %c0_i32_22 : i32 to vector<1x8x128xi32>
    %98 = arith.cmpi eq, %94, %97 : vector<1x8x128xi32>
    %99 = arith.andi %96, %98 : vector<1x8x128xi1>
    %cst_23 = arith.constant 0.000000e+00 : f32
    %100 = vector.broadcast %82 : f32 to vector<1x8x128xf32>
    %101 = vector.broadcast %cst_23 : f32 to vector<1x8x128xf32>
    %102 = arith.select %99, %100, %101 : vector<1x8x128xi1>, vector<1x8x128xf32>
    %c0_i32_24 = arith.constant 0 : i32
    %103 = vector.broadcast %c0_i32_24 : i32 to vector<1x8x128xi32>
    %104 = arith.cmpi eq, %93, %103 : vector<1x8x128xi32>
    %c1_i32_25 = arith.constant 1 : i32
    %105 = vector.broadcast %c1_i32_25 : i32 to vector<1x8x128xi32>
    %106 = arith.cmpi eq, %94, %105 : vector<1x8x128xi32>
    %107 = arith.andi %104, %106 : vector<1x8x128xi1>
    %cst_26 = arith.constant 0.000000e+00 : f32
    %108 = vector.broadcast %92 : f32 to vector<1x8x128xf32>
    %109 = vector.broadcast %cst_26 : f32 to vector<1x8x128xf32>
    %110 = arith.select %107, %108, %109 : vector<1x8x128xi1>, vector<1x8x128xf32>
    %111 = arith.addf %102, %110 : vector<1x8x128xf32>
    %c0_27 = arith.constant 0 : index
    %c0_28 = arith.constant 0 : index
    %c0_29 = arith.constant 0 : index
    %112 = vector.load %arg3[%c0_27, %c0_28, %c0_29] : memref<1x8x128xf32, #tpu.memory_space<vmem>>, vector<1x8x128xf32>
    tpu.vector_store %arg3[%c0_27, %c0_28, %c0_29], %111 {strides = array<i32>} : memref<1x8x128xf32, #tpu.memory_space<vmem>>, vector<1x8x128xf32>,
    return
  }
  func.func @transform_0(%arg0: i32) -> (i32, i32) {
    %c0_i32 = arith.constant 0 : i32
    %c0_i32_0 = arith.constant 0 : i32
    return %arg0, %c0_i32 : i32, i32
  }
  func.func @transform_1(%arg0: i32) -> (i32, i32) {
    %c0_i32 = arith.constant 0 : i32
    %c0_i32_0 = arith.constant 0 : i32
    %c0_i32_1 = arith.constant 0 : i32
    return %c0_i32, %c0_i32_0 : i32, i32
  }
  func.func @transform_2(%arg0: i32) -> (i32, i32, i32) {
    %c0_i32 = arith.constant 0 : i32
    %c0_i32_0 = arith.constant 0 : i32
    %c0_i32_1 = arith.constant 0 : i32
    return %arg0, %c0_i32, %c0_i32_0 : i32, i32, i32
  }
}

</mosaic_0001>

<llo_original>
// kernel: tpu_custom_call.1
$region0: #{tpu_custom_call.1}
  #allocation0 [shape = 'u32[]', space=smem, size = 0x4, offset = 0x4, fixed_abs, tag = 'smem constant byte address 0x4 - core index']
  #allocation1 [shape = 'u32[144,128]{1,0:T(1,128)}', space=vmem, size = 0x12000, scoped, tag = 'internal scratch']
  %s0 = inlined_call_operand.hbm [shape: f32[32,128], index: 0, kind: input, shape index: {}]
  %s1 = inlined_call_operand.hbm [shape: f32[128,128], index: 1, kind: input, shape index: {}]
  %s2 = inlined_call_operand.hbm [shape: f32[1,8,128], index: 2, kind: output, shape index: {}]
  %s3 = sld [smem:[#allocation0]]
  $region26: #{tpu_custom_call.1} parent=0
    _
  %s5 = ssub.s32 1, %s3
  %s6 = scalar_select 0, %s5, %s3
  $region1: #{tpu_custom_call.1} parent=0
    #allocation2 [shape = 'u8[16384]{0}', space=vmem, size = 0x4000, scoped, tag = 'input window, operand 0, single buffered']
    #allocation3 [shape = 's32[1]{0}', space=sflag, size = 0x4, scoped, tag = 'scoped memory for tpu_custom_call.1']
    #allocation4 [shape = 's32[1]{0}', space=sflag, size = 0x4, scoped, tag = 'scoped memory for tpu_custom_call.1']
    #allocation5 [shape = 'u8[65536]{0}', space=vmem, size = 0x10000, scoped, tag = 'input window, operand 1, single buffered']
    #allocation6 [shape = 's32[1]{0}', space=sflag, size = 0x4, scoped, tag = 'scoped memory for tpu_custom_call.1']
    #allocation7 [shape = 'u8[4096]{0}', space=vmem, size = 0x1000, scoped, tag = 'output window, operand 0, single buffered']
    %7 = vsyncpa [#allocation3], 0
    %8 = vsyncpa [#allocation6], 0
    %9 = vsyncpa [#allocation4], 0
    // Predicated region
    $region2: #{tpu_custom_call.1} parent=1 // pred_check
      _
    $region3: #{tpu_custom_call.1} parent=1 // pred_check_branch
      %11 = sbr.rel (0) target = $region5
    $region4: #{tpu_custom_call.1} parent=1 // pred_region
      %s13 = ssub.s32 512, 512
      %14 = vsyncadd [#allocation3], %s13
      %s15 = sshll.u32 [#allocation2], 4
      %s16 = int_to_ptr.vmem [resolvable:$true] %s15
      %21 = dma.hbm_to_vmem [thread:$0]  %s0, 512, %s16, [#allocation3], 128, 128, 8
    $region5: #{tpu_custom_call.1} parent=1 // pred_fallthru
      _
    // Predicated region
    $region6: #{tpu_custom_call.1} parent=1 // pred_check
      _
    $region7: #{tpu_custom_call.1} parent=1 // pred_check_branch
      %23 = sbr.rel (0) target = $region9
    $region8: #{tpu_custom_call.1} parent=1 // pred_region
      %s25 = ssub.s32 2048, 2048
      %26 = vsyncadd [#allocation6], %s25
      %s27 = sshll.u32 [#allocation5], 4
      %s28 = int_to_ptr.vmem [resolvable:$true] %s27
      %33 = dma.hbm_to_vmem [thread:$0]  %s1, 2048, %s28, [#allocation6], 128, 128, 8
    $region9: #{tpu_custom_call.1} parent=1 // pred_fallthru
      _
    // Predicated region
    $region10: #{tpu_custom_call.1} parent=1 // pred_check
      _
    $region11: #{tpu_custom_call.1} parent=1 // pred_check_branch
      %35 = sbr.rel (0) target = $region13
    $region12: #{tpu_custom_call.1} parent=1 // pred_region
      %36 = dma.done [#allocation3], 512
    $region13: #{tpu_custom_call.1} parent=1 // pred_fallthru
      _
    // Predicated region
    $region14: #{tpu_custom_call.1} parent=1 // pred_check
      _
    $region15: #{tpu_custom_call.1} parent=1 // pred_check_branch
      %38 = sbr.rel (0) target = $region17
    $region16: #{tpu_custom_call.1} parent=1 // pred_region
      %39 = dma.done [#allocation6], 2048
    $region17: #{tpu_custom_call.1} parent=1 // pred_fallthru
      _
    %v40 = vld [vmem:[#allocation2] sm:$0xff]
    %v41 = vld [vmem:[#allocation2 + $0x8] sm:$0xff]
    %v42 = vld [vmem:[#allocation2 + $0x10] sm:$0xff]
    %v43 = vld [vmem:[#allocation2 + $0x18] sm:$0xff]
    %v44 = vld [vmem:[#allocation5] sm:$0xff]
    %v45 = vld [vmem:[#allocation5 + $0x8] sm:$0xff]
    %v46 = vld [vmem:[#allocation5 + $0x10] sm:$0xff]
    %v47 = vld [vmem:[#allocation5 + $0x18] sm:$0xff]
    %v48 = vld [vmem:[#allocation5 + $0x20] sm:$0xff]
    %v49 = vld [vmem:[#allocation5 + $0x28] sm:$0xff]
    %v50 = vld [vmem:[#allocation5 + $0x30] sm:$0xff]
    %v51 = vld [vmem:[#allocation5 + $0x38] sm:$0xff]
    %v52 = vld [vmem:[#allocation5 + $0x40] sm:$0xff]
    %v53 = vld [vmem:[#allocation5 + $0x48] sm:$0xff]
    %v54 = vld [vmem:[#allocation5 + $0x50] sm:$0xff]
    %v55 = vld [vmem:[#allocation5 + $0x58] sm:$0xff]
    %v56 = vld [vmem:[#allocation5 + $0x60] sm:$0xff]
    %v57 = vld [vmem:[#allocation5 + $0x68] sm:$0xff]
    %v58 = vld [vmem:[#allocation5 + $0x70] sm:$0xff]
    %v59 = vld [vmem:[#allocation5 + $0x78] sm:$0xff]
    %60 = vmatprep.subr.mxu0 0.0
    %v61 = vand.u32 %v59, 4294901760
    %62 = vmatpush1.msra.mxu0 %v61
    %63 = vmatprep.subr.mxu0 0.0
    %v64 = vand.u32 %v58, 4294901760
    %65 = vmatpush1.msra.mxu0 %v64
    %66 = vmatprep.subr.mxu0 0.0
    %v67 = vand.u32 %v57, 4294901760
    %68 = vmatpush1.msra.mxu0 %v67
    %69 = vmatprep.subr.mxu0 0.0
    %v70 = vand.u32 %v56, 4294901760
    %71 = vmatpush1.msra.mxu0 %v70
    %72 = vmatprep.subr.mxu0 0.0
    %v73 = vand.u32 %v55, 4294901760
    %74 = vmatpush1.msra.mxu0 %v73
    %75 = vmatprep.subr.mxu0 0.0
    %v76 = vand.u32 %v54, 4294901760
    %77 = vmatpush1.msra.mxu0 %v76
    %78 = vmatprep.subr.mxu0 0.0
    %v79 = vand.u32 %v53, 4294901760
    %80 = vmatpush1.msra.mxu0 %v79
    %81 = vmatprep.subr.mxu0 0.0
    %v82 = vand.u32 %v52, 4294901760
    %83 = vmatpush1.msra.mxu0 %v82
    %84 = vmatprep.subr.mxu0 0.0
    %v85 = vand.u32 %v51, 4294901760
    %86 = vmatpush1.msra.mxu0 %v85
    %87 = vmatprep.subr.mxu0 0.0
    %v88 = vand.u32 %v50, 4294901760
    %89 = vmatpush1.msra.mxu0 %v88
    %90 = vmatprep.subr.mxu0 0.0
    %v91 = vand.u32 %v49, 4294901760
    %92 = vmatpush1.msra.mxu0 %v91
    %93 = vmatprep.subr.mxu0 0.0
    %v94 = vand.u32 %v48, 4294901760
    %95 = vmatpush1.msra.mxu0 %v94
    %96 = vmatprep.subr.mxu0 0.0
    %v97 = vand.u32 %v47, 4294901760
    %98 = vmatpush1.msra.mxu0 %v97
    %99 = vmatprep.subr.mxu0 0.0
    %v100 = vand.u32 %v46, 4294901760
    %101 = vmatpush1.msra.mxu0 %v100
    %102 = vmatprep.subr.mxu0 0.0
    %v103 = vand.u32 %v45, 4294901760
    %104 = vmatpush1.msra.mxu0 %v103
    %105 = vmatprep.subr.mxu0 0.0
    %v106 = vand.u32 %v44, 4294901760
    %107 = vmatpush1.msra.mxu0 %v106
    %108 = vmatprep.subr.mxu0 0.0
    %109 = vmatpush2.msra.mxu0 0.0
    %110 = vmatprep.subr.mxu0 0.0
    %111 = vmatpush2.msra.mxu0 0.0
    %112 = vmatprep.subr.mxu0 0.0
    %113 = vmatpush2.msra.mxu0 0.0
    %114 = vmatprep.subr.mxu0 0.0
    %115 = vmatpush2.msra.mxu0 0.0
    %116 = vmatprep.subr.mxu0 0.0
    %117 = vmatpush2.msra.mxu0 0.0
    %118 = vmatprep.subr.mxu0 0.0
    %119 = vmatpush2.msra.mxu0 0.0
    %120 = vmatprep.subr.mxu0 0.0
    %121 = vmatpush2.msra.mxu0 0.0
    %122 = vmatprep.subr.mxu0 0.0
    %123 = vmatpush2.msra.mxu0 0.0
    %124 = vmatprep.subr.mxu0 0.0
    %125 = vmatpush2.msra.mxu0 0.0
    %126 = vmatprep.subr.mxu0 0.0
    %127 = vmatpush2.msra.mxu0 0.0
    %128 = vmatprep.subr.mxu0 0.0
    %129 = vmatpush2.msra.mxu0 0.0
    %130 = vmatprep.subr.mxu0 0.0
    %131 = vmatpush2.msra.mxu0 0.0
    %132 = vmatprep.subr.mxu0 0.0
    %133 = vmatpush2.msra.mxu0 0.0
    %134 = vmatprep.subr.mxu0 0.0
    %135 = vmatpush2.msra.mxu0 0.0
    %136 = vmatprep.subr.mxu0 0.0
    %137 = vmatpush2.msra.mxu0 0.0
    %138 = vmatprep.subr.mxu0 0.0
    %139 = vmatpush2.msra.mxu0 0.0
    %140 = vmatprep.mubr.f32.mxu0 0.0
    %v141 = vand.u32 %v40, 4294901760
    %v142 = vsub.f32 %v40, %v141
    %v143 = vand.u32 %v142, 4294901760
    %v144 = vsub.f32 %v142, %v143
    %v145 = vand.u32 %v144, 4294901760
    %146 = vmatmul.mubr.f32.gmra.mxu0 %v145
    %v147 = vpop.f32.mrf.mxu0
    %v148 = vadd.f32 0.0, %v147
    %v149 = vpop.f32.mrf.mxu0
    %150 = vmatprep.mubr.f32.mxu0 0.0
    %v151 = vand.u32 %v41, 4294901760
    %v152 = vsub.f32 %v41, %v151
    %v153 = vand.u32 %v152, 4294901760
    %v154 = vsub.f32 %v152, %v153
    %v155 = vand.u32 %v154, 4294901760
    %156 = vmatmul.mubr.f32.gmra.mxu0 %v155
    %v157 = vpop.f32.mrf.mxu0
    %v158 = vadd.f32 0.0, %v157
    %v159 = vpop.f32.mrf.mxu0
    %160 = vmatprep.mubr.f32.mxu0 0.0
    %v161 = vand.u32 %v42, 4294901760
    %v162 = vsub.f32 %v42, %v161
    %v163 = vand.u32 %v162, 4294901760
    %v164 = vsub.f32 %v162, %v163
    %v165 = vand.u32 %v164, 4294901760
    %166 = vmatmul.mubr.f32.gmra.mxu0 %v165
    %v167 = vpop.f32.mrf.mxu0
    %v168 = vadd.f32 0.0, %v167
    %v169 = vpop.f32.mrf.mxu0
    %170 = vmatprep.mubr.f32.mxu0 0.0
    %v171 = vand.u32 %v43, 4294901760
    %v172 = vsub.f32 %v43, %v171
    %v173 = vand.u32 %v172, 4294901760
    %v174 = vsub.f32 %v172, %v173
    %v175 = vand.u32 %v174, 4294901760
    %176 = vmatmul.mubr.f32.gmra.mxu0 %v175
    %v177 = vpop.f32.mrf.mxu0
    %v178 = vadd.f32 0.0, %v177
    %v179 = vpop.f32.mrf.mxu0
    %180 = vdwg.mxu0
    %181 = vmatprep.subr.mxu0 0.0
    %v182 = vand.u32 %v59, 4294901760
    %v183 = vsub.f32 %v59, %v182
    %v184 = vand.u32 %v183, 4294901760
    %v185 = vsub.f32 %v183, %v184
    %v186 = vand.u32 %v185, 4294901760
    %187 = vmatpush1.msra.mxu0 %v186
    %188 = vmatprep.subr.mxu0 0.0
    %v189 = vand.u32 %v58, 4294901760
    %v190 = vsub.f32 %v58, %v189
    %v191 = vand.u32 %v190, 4294901760
    %v192 = vsub.f32 %v190, %v191
    %v193 = vand.u32 %v192, 4294901760
    %194 = vmatpush1.msra.mxu0 %v193
    %195 = vmatprep.subr.mxu0 0.0
    %v196 = vand.u32 %v57, 4294901760
    %v197 = vsub.f32 %v57, %v196
    %v198 = vand.u32 %v197, 4294901760
    %v199 = vsub.f32 %v197, %v198
    %v200 = vand.u32 %v199, 4294901760
    %201 = vmatpush1.msra.mxu0 %v200
    %202 = vmatprep.subr.mxu0 0.0
    %v203 = vand.u32 %v56, 4294901760
    %v204 = vsub.f32 %v56, %v203
    %v205 = vand.u32 %v204, 4294901760
    %v206 = vsub.f32 %v204, %v205
    %v207 = vand.u32 %v206, 4294901760
    %208 = vmatpush1.msra.mxu0 %v207
    %209 = vmatprep.subr.mxu0 0.0
    %v210 = vand.u32 %v55, 4294901760
    %v211 = vsub.f32 %v55, %v210
    %v212 = vand.u32 %v211, 4294901760
    %v213 = vsub.f32 %v211, %v212
    %v214 = vand.u32 %v213, 4294901760
    %215 = vmatpush1.msra.mxu0 %v214
    %216 = vmatprep.subr.mxu0 0.0
    %v217 = vand.u32 %v54, 4294901760
    %v218 = vsub.f32 %v54, %v217
    %v219 = vand.u32 %v218, 4294901760
    %v220 = vsub.f32 %v218, %v219
    %v221 = vand.u32 %v220, 4294901760
    %222 = vmatpush1.msra.mxu0 %v221
    %223 = vmatprep.subr.mxu0 0.0
    %v224 = vand.u32 %v53, 4294901760
    %v225 = vsub.f32 %v53, %v224
    %v226 = vand.u32 %v225, 4294901760
    %v227 = vsub.f32 %v225, %v226
    %v228 = vand.u32 %v227, 4294901760
    %229 = vmatpush1.msra.mxu0 %v228
    %230 = vmatprep.subr.mxu0 0.0
    %v231 = vand.u32 %v52, 4294901760
    %v232 = vsub.f32 %v52, %v231
    %v233 = vand.u32 %v232, 4294901760
    %v234 = vsub.f32 %v232, %v233
    %v235 = vand.u32 %v234, 4294901760
    %236 = vmatpush1.msra.mxu0 %v235
    %237 = vmatprep.subr.mxu0 0.0
    %v238 = vand.u32 %v51, 4294901760
    %v239 = vsub.f32 %v51, %v238
    %v240 = vand.u32 %v239, 4294901760
    %v241 = vsub.f32 %v239, %v240
    %v242 = vand.u32 %v241, 4294901760
    %243 = vmatpush1.msra.mxu0 %v242
    %244 = vmatprep.subr.mxu0 0.0
    %v245 = vand.u32 %v50, 4294901760
    %v246 = vsub.f32 %v50, %v245
    %v247 = vand.u32 %v246, 4294901760
    %v248 = vsub.f32 %v246, %v247
    %v249 = vand.u32 %v248, 4294901760
    %250 = vmatpush1.msra.mxu0 %v249
    %251 = vmatprep.subr.mxu0 0.0
    %v252 = vand.u32 %v49, 4294901760
    %v253 = vsub.f32 %v49, %v252
    %v254 = vand.u32 %v253, 4294901760
    %v255 = vsub.f32 %v253, %v254
    %v256 = vand.u32 %v255, 4294901760
    %257 = vmatpush1.msra.mxu0 %v256
    %258 = vmatprep.subr.mxu0 0.0
    %v259 = vand.u32 %v48, 4294901760
    %v260 = vsub.f32 %v48, %v259
    %v261 = vand.u32 %v260, 4294901760
    %v262 = vsub.f32 %v260, %v261
    %v263 = vand.u32 %v262, 4294901760
    %264 = vmatpush1.msra.mxu0 %v263
    %265 = vmatprep.subr.mxu0 0.0
    %v266 = vand.u32 %v47, 4294901760
    %v267 = vsub.f32 %v47, %v266
    %v268 = vand.u32 %v267, 4294901760
    %v269 = vsub.f32 %v267, %v268
    %v270 = vand.u32 %v269, 4294901760
    %271 = vmatpush1.msra.mxu0 %v270
    %272 = vmatprep.subr.mxu0 0.0
    %v273 = vand.u32 %v46, 4294901760
    %v274 = vsub.f32 %v46, %v273
    %v275 = vand.u32 %v274, 4294901760
    %v276 = vsub.f32 %v274, %v275
    %v277 = vand.u32 %v276, 4294901760
    %278 = vmatpush1.msra.mxu0 %v277
    %279 = vmatprep.subr.mxu0 0.0
    %v280 = vand.u32 %v45, 4294901760
    %v281 = vsub.f32 %v45, %v280
    %v282 = vand.u32 %v281, 4294901760
    %v283 = vsub.f32 %v281, %v282
    %v284 = vand.u32 %v283, 4294901760
    %285 = vmatpush1.msra.mxu0 %v284
    %286 = vmatprep.subr.mxu0 0.0
    %v287 = vand.u32 %v44, 4294901760
    %v288 = vsub.f32 %v44, %v287
    %v289 = vand.u32 %v288, 4294901760
    %v290 = vsub.f32 %v288, %v289
    %v291 = vand.u32 %v290, 4294901760
    %292 = vmatpush1.msra.mxu0 %v291
    %293 = vmatprep.subr.mxu0 0.0
    %294 = vmatpush2.msra.mxu0 0.0
    %295 = vmatprep.subr.mxu0 0.0
    %296 = vmatpush2.msra.mxu0 0.0
    %297 = vmatprep.subr.mxu0 0.0
    %298 = vmatpush2.msra.mxu0 0.0
    %299 = vmatprep.subr.mxu0 0.0
    %300 = vmatpush2.msra.mxu0 0.0
    %301 = vmatprep.subr.mxu0 0.0
    %302 = vmatpush2.msra.mxu0 0.0
    %303 = vmatprep.subr.mxu0 0.0
    %304 = vmatpush2.msra.mxu0 0.0
    %305 = vmatprep.subr.mxu0 0.0
    %306 = vmatpush2.msra.mxu0 0.0
    %307 = vmatprep.subr.mxu0 0.0
    %308 = vmatpush2.msra.mxu0 0.0
    %309 = vmatprep.subr.mxu0 0.0
    %310 = vmatpush2.msra.mxu0 0.0
    %311 = vmatprep.subr.mxu0 0.0
    %312 = vmatpush2.msra.mxu0 0.0
    %313 = vmatprep.subr.mxu0 0.0
    %314 = vmatpush2.msra.mxu0 0.0
    %315 = vmatprep.subr.mxu0 0.0
    %316 = vmatpush2.msra.mxu0 0.0
    %317 = vmatprep.subr.mxu0 0.0
    %318 = vmatpush2.msra.mxu0 0.0
    %319 = vmatprep.subr.mxu0 0.0
    %320 = vmatpush2.msra.mxu0 0.0
    %321 = vmatprep.subr.mxu0 0.0
    %322 = vmatpush2.msra.mxu0 0.0
    %323 = vmatprep.subr.mxu0 0.0
    %324 = vmatpush2.msra.mxu0 0.0
    %325 = vmatprep.mubr.f32.mxu0 0.0
    %v326 = vand.u32 %v40, 4294901760
    %327 = vmatmul.mubr.f32.gmra.mxu0 %v326
    %v328 = vpop.f32.mrf.mxu0
    %v329 = vadd.f32 %v148, %v328
    %v330 = vpop.f32.mrf.mxu0
    %331 = vmatprep.mubr.f32.mxu0 0.0
    %v332 = vand.u32 %v41, 4294901760
    %333 = vmatmul.mubr.f32.gmra.mxu0 %v332
    %v334 = vpop.f32.mrf.mxu0
    %v335 = vadd.f32 %v158, %v334
    %v336 = vpop.f32.mrf.mxu0
    %337 = vmatprep.mubr.f32.mxu0 0.0
    %v338 = vand.u32 %v42, 4294901760
    %339 = vmatmul.mubr.f32.gmra.mxu0 %v338
    %v340 = vpop.f32.mrf.mxu0
    %v341 = vadd.f32 %v168, %v340
    %v342 = vpop.f32.mrf.mxu0
    %343 = vmatprep.mubr.f32.mxu0 0.0
    %v344 = vand.u32 %v43, 4294901760
    %345 = vmatmul.mubr.f32.gmra.mxu0 %v344
    %v346 = vpop.f32.mrf.mxu0
    %v347 = vadd.f32 %v178, %v346
    %v348 = vpop.f32.mrf.mxu0
    %349 = vdwg.mxu0
    %350 = vmatprep.subr.mxu0 0.0
    %v351 = vand.u32 %v59, 4294901760
    %v352 = vsub.f32 %v59, %v351
    %353 = vmatpush1.msra.mxu0 %v352
    %354 = vmatprep.subr.mxu0 0.0
    %v355 = vand.u32 %v58, 4294901760
    %v356 = vsub.f32 %v58, %v355
    %357 = vmatpush1.msra.mxu0 %v356
    %358 = vmatprep.subr.mxu0 0.0
    %v359 = vand.u32 %v57, 4294901760
    %v360 = vsub.f32 %v57, %v359
    %361 = vmatpush1.msra.mxu0 %v360
    %362 = vmatprep.subr.mxu0 0.0
    %v363 = vand.u32 %v56, 4294901760
    %v364 = vsub.f32 %v56, %v363
    %365 = vmatpush1.msra.mxu0 %v364
    %366 = vmatprep.subr.mxu0 0.0
    %v367 = vand.u32 %v55, 4294901760
    %v368 = vsub.f32 %v55, %v367
    %369 = vmatpush1.msra.mxu0 %v368
    %370 = vmatprep.subr.mxu0 0.0
    %v371 = vand.u32 %v54, 4294901760
    %v372 = vsub.f32 %v54, %v371
    %373 = vmatpush1.msra.mxu0 %v372
    %374 = vmatprep.subr.mxu0 0.0
    %v375 = vand.u32 %v53, 4294901760
    %v376 = vsub.f32 %v53, %v375
    %377 = vmatpush1.msra.mxu0 %v376
    %378 = vmatprep.subr.mxu0 0.0
    %v379 = vand.u32 %v52, 4294901760
    %v380 = vsub.f32 %v52, %v379
    %381 = vmatpush1.msra.mxu0 %v380
    %382 = vmatprep.subr.mxu0 0.0
    %v383 = vand.u32 %v51, 4294901760
    %v384 = vsub.f32 %v51, %v383
    %385 = vmatpush1.msra.mxu0 %v384
    %386 = vmatprep.subr.mxu0 0.0
    %v387 = vand.u32 %v50, 4294901760
    %v388 = vsub.f32 %v50, %v387
    %389 = vmatpush1.msra.mxu0 %v388
    %390 = vmatprep.subr.mxu0 0.0
    %v391 = vand.u32 %v49, 4294901760
    %v392 = vsub.f32 %v49, %v391
    %393 = vmatpush1.msra.mxu0 %v392
    %394 = vmatprep.subr.mxu0 0.0
    %v395 = vand.u32 %v48, 4294901760
    %v396 = vsub.f32 %v48, %v395
    %397 = vmatpush1.msra.mxu0 %v396
    %398 = vmatprep.subr.mxu0 0.0
    %v399 = vand.u32 %v47, 4294901760
    %v400 = vsub.f32 %v47, %v399
    %401 = vmatpush1.msra.mxu0 %v400
    %402 = vmatprep.subr.mxu0 0.0
    %v403 = vand.u32 %v46, 4294901760
    %v404 = vsub.f32 %v46, %v403
    %405 = vmatpush1.msra.mxu0 %v404
    %406 = vmatprep.subr.mxu0 0.0
    %v407 = vand.u32 %v45, 4294901760
    %v408 = vsub.f32 %v45, %v407
    %409 = vmatpush1.msra.mxu0 %v408
    %410 = vmatprep.subr.mxu0 0.0
    %v411 = vand.u32 %v44, 4294901760
    %v412 = vsub.f32 %v44, %v411
    %413 = vmatpush1.msra.mxu0 %v412
    %414 = vmatprep.subr.mxu0 0.0
    %415 = vmatpush2.msra.mxu0 0.0
    %416 = vmatprep.subr.mxu0 0.0
    %417 = vmatpush2.msra.mxu0 0.0
    %418 = vmatprep.subr.mxu0 0.0
    %419 = vmatpush2.msra.mxu0 0.0
    %420 = vmatprep.subr.mxu0 0.0
    %421 = vmatpush2.msra.mxu0 0.0
    %422 = vmatprep.subr.mxu0 0.0
    %423 = vmatpush2.msra.mxu0 0.0
    %424 = vmatprep.subr.mxu0 0.0
    %425 = vmatpush2.msra.mxu0 0.0
    %426 = vmatprep.subr.mxu0 0.0
    %427 = vmatpush2.msra.mxu0 0.0
    %428 = vmatprep.subr.mxu0 0.0
    %429 = vmatpush2.msra.mxu0 0.0
    %430 = vmatprep.subr.mxu0 0.0
    %431 = vmatpush2.msra.mxu0 0.0
    %432 = vmatprep.subr.mxu0 0.0
    %433 = vmatpush2.msra.mxu0 0.0
    %434 = vmatprep.subr.mxu0 0.0
    %435 = vmatpush2.msra.mxu0 0.0
    %436 = vmatprep.subr.mxu0 0.0
    %437 = vmatpush2.msra.mxu0 0.0
    %438 = vmatprep.subr.mxu0 0.0
    %439 = vmatpush2.msra.mxu0 0.0
    %440 = vmatprep.subr.mxu0 0.0
    %441 = vmatpush2.msra.mxu0 0.0
    %442 = vmatprep.subr.mxu0 0.0
    %443 = vmatpush2.msra.mxu0 0.0
    %444 = vmatprep.subr.mxu0 0.0
    %445 = vmatpush2.msra.mxu0 0.0
    %446 = vmatprep.mubr.f32.mxu0 0.0
    %v447 = vand.u32 %v40, 4294901760
    %v448 = vsub.f32 %v40, %v447
    %449 = vmatmul.mubr.f32.gmra.mxu0 %v448
    %v450 = vpop.f32.mrf.mxu0
    %v451 = vadd.f32 %v329, %v450
    %v452 = vpop.f32.mrf.mxu0
    %453 = vmatprep.mubr.f32.mxu0 0.0
    %v454 = vand.u32 %v41, 4294901760
    %v455 = vsub.f32 %v41, %v454
    %456 = vmatmul.mubr.f32.gmra.mxu0 %v455
    %v457 = vpop.f32.mrf.mxu0
    %v458 = vadd.f32 %v335, %v457
    %v459 = vpop.f32.mrf.mxu0
    %460 = vmatprep.mubr.f32.mxu0 0.0
    %v461 = vand.u32 %v42, 4294901760
    %v462 = vsub.f32 %v42, %v461
    %463 = vmatmul.mubr.f32.gmra.mxu0 %v462
    %v464 = vpop.f32.mrf.mxu0
    %v465 = vadd.f32 %v341, %v464
    %v466 = vpop.f32.mrf.mxu0
    %467 = vmatprep.mubr.f32.mxu0 0.0
    %v468 = vand.u32 %v43, 4294901760
    %v469 = vsub.f32 %v43, %v468
    %470 = vmatmul.mubr.f32.gmra.mxu0 %v469
    %v471 = vpop.f32.mrf.mxu0
    %v472 = vadd.f32 %v347, %v471
    %v473 = vpop.f32.mrf.mxu0
    %474 = vdwg.mxu0
    %475 = vmatprep.subr.mxu0 0.0
    %v476 = vand.u32 %v59, 4294901760
    %477 = vmatpush1.msra.mxu0 %v476
    %478 = vmatprep.subr.mxu0 0.0
    %v479 = vand.u32 %v58, 4294901760
    %480 = vmatpush1.msra.mxu0 %v479
    %481 = vmatprep.subr.mxu0 0.0
    %v482 = vand.u32 %v57, 4294901760
    %483 = vmatpush1.msra.mxu0 %v482
    %484 = vmatprep.subr.mxu0 0.0
    %v485 = vand.u32 %v56, 4294901760
    %486 = vmatpush1.msra.mxu0 %v485
    %487 = vmatprep.subr.mxu0 0.0
    %v488 = vand.u32 %v55, 4294901760
    %489 = vmatpush1.msra.mxu0 %v488
    %490 = vmatprep.subr.mxu0 0.0
    %v491 = vand.u32 %v54, 4294901760
    %492 = vmatpush1.msra.mxu0 %v491
    %493 = vmatprep.subr.mxu0 0.0
    %v494 = vand.u32 %v53, 4294901760
    %495 = vmatpush1.msra.mxu0 %v494
    %496 = vmatprep.subr.mxu0 0.0
    %v497 = vand.u32 %v52, 4294901760
    %498 = vmatpush1.msra.mxu0 %v497
    %499 = vmatprep.subr.mxu0 0.0
    %v500 = vand.u32 %v51, 4294901760
    %501 = vmatpush1.msra.mxu0 %v500
    %502 = vmatprep.subr.mxu0 0.0
    %v503 = vand.u32 %v50, 4294901760
    %504 = vmatpush1.msra.mxu0 %v503
    %505 = vmatprep.subr.mxu0 0.0
    %v506 = vand.u32 %v49, 4294901760
    %507 = vmatpush1.msra.mxu0 %v506
    %508 = vmatprep.subr.mxu0 0.0
    %v509 = vand.u32 %v48, 4294901760
    %510 = vmatpush1.msra.mxu0 %v509
    %511 = vmatprep.subr.mxu0 0.0
    %v512 = vand.u32 %v47, 4294901760
    %513 = vmatpush1.msra.mxu0 %v512
    %514 = vmatprep.subr.mxu0 0.0
    %v515 = vand.u32 %v46, 4294901760
    %516 = vmatpush1.msra.mxu0 %v515
    %517 = vmatprep.subr.mxu0 0.0
    %v518 = vand.u32 %v45, 4294901760
    %519 = vmatpush1.msra.mxu0 %v518
    %520 = vmatprep.subr.mxu0 0.0
    %v521 = vand.u32 %v44, 4294901760
    %522 = vmatpush1.msra.mxu0 %v521
    %523 = vmatprep.subr.mxu0 0.0
    %524 = vmatpush2.msra.mxu0 0.0
    %525 = vmatprep.subr.mxu0 0.0
    %526 = vmatpush2.msra.mxu0 0.0
    %527 = vmatprep.subr.mxu0 0.0
    %528 = vmatpush2.msra.mxu0 0.0
    %529 = vmatprep.subr.mxu0 0.0
    %530 = vmatpush2.msra.mxu0 0.0
    %531 = vmatprep.subr.mxu0 0.0
    %532 = vmatpush2.msra.mxu0 0.0
    %533 = vmatprep.subr.mxu0 0.0
    %534 = vmatpush2.msra.mxu0 0.0
    %535 = vmatprep.subr.mxu0 0.0
    %536 = vmatpush2.msra.mxu0 0.0
    %537 = vmatprep.subr.mxu0 0.0
    %538 = vmatpush2.msra.mxu0 0.0
    %539 = vmatprep.subr.mxu0 0.0
    %540 = vmatpush2.msra.mxu0 0.0
    %541 = vmatprep.subr.mxu0 0.0
    %542 = vmatpush2.msra.mxu0 0.0
    %543 = vmatprep.subr.mxu0 0.0
    %544 = vmatpush2.msra.mxu0 0.0
    %545 = vmatprep.subr.mxu0 0.0
    %546 = vmatpush2.msra.mxu0 0.0
    %547 = vmatprep.subr.mxu0 0.0
    %548 = vmatpush2.msra.mxu0 0.0
    %549 = vmatprep.subr.mxu0 0.0
    %550 = vmatpush2.msra.mxu0 0.0
    %551 = vmatprep.subr.mxu0 0.0
    %552 = vmatpush2.msra.mxu0 0.0
    %553 = vmatprep.subr.mxu0 0.0
    %554 = vmatpush2.msra.mxu0 0.0
    %555 = vmatprep.mubr.f32.mxu0 0.0
    %v556 = vand.u32 %v40, 4294901760
    %v557 = vsub.f32 %v40, %v556
    %v558 = vand.u32 %v557, 4294901760
    %559 = vmatmul.mubr.f32.gmra.mxu0 %v558
    %v560 = vpop.f32.mrf.mxu0
    %v561 = vadd.f32 %v451, %v560
    %v562 = vpop.f32.mrf.mxu0
    %563 = vmatprep.mubr.f32.mxu0 0.0
    %v564 = vand.u32 %v41, 4294901760
    %v565 = vsub.f32 %v41, %v564
    %v566 = vand.u32 %v565, 4294901760
    %567 = vmatmul.mubr.f32.gmra.mxu0 %v566
    %v568 = vpop.f32.mrf.mxu0
    %v569 = vadd.f32 %v458, %v568
    %v570 = vpop.f32.mrf.mxu0
    %571 = vmatprep.mubr.f32.mxu0 0.0
    %v572 = vand.u32 %v42, 4294901760
    %v573 = vsub.f32 %v42, %v572
    %v574 = vand.u32 %v573, 4294901760
    %575 = vmatmul.mubr.f32.gmra.mxu0 %v574
    %v576 = vpop.f32.mrf.mxu0
    %v577 = vadd.f32 %v465, %v576
    %v578 = vpop.f32.mrf.mxu0
    %579 = vmatprep.mubr.f32.mxu0 0.0
    %v580 = vand.u32 %v43, 4294901760
    %v581 = vsub.f32 %v43, %v580
    %v582 = vand.u32 %v581, 4294901760
    %583 = vmatmul.mubr.f32.gmra.mxu0 %v582
    %v584 = vpop.f32.mrf.mxu0
    %v585 = vadd.f32 %v472, %v584
    %v586 = vpop.f32.mrf.mxu0
    %587 = vdwg.mxu0
    %588 = vmatprep.subr.mxu0 0.0
    %v589 = vand.u32 %v59, 4294901760
    %v590 = vsub.f32 %v59, %v589
    %v591 = vand.u32 %v590, 4294901760
    %592 = vmatpush1.msra.mxu0 %v591
    %593 = vmatprep.subr.mxu0 0.0
    %v594 = vand.u32 %v58, 4294901760
    %v595 = vsub.f32 %v58, %v594
    %v596 = vand.u32 %v595, 4294901760
    %597 = vmatpush1.msra.mxu0 %v596
    %598 = vmatprep.subr.mxu0 0.0
    %v599 = vand.u32 %v57, 4294901760
    %v600 = vsub.f32 %v57, %v599
    %v601 = vand.u32 %v600, 4294901760
    %602 = vmatpush1.msra.mxu0 %v601
    %603 = vmatprep.subr.mxu0 0.0
    %v604 = vand.u32 %v56, 4294901760
    %v605 = vsub.f32 %v56, %v604
    %v606 = vand.u32 %v605, 4294901760
    %607 = vmatpush1.msra.mxu0 %v606
    %608 = vmatprep.subr.mxu0 0.0
    %v609 = vand.u32 %v55, 4294901760
    %v610 = vsub.f32 %v55, %v609
    %v611 = vand.u32 %v610, 4294901760
    %612 = vmatpush1.msra.mxu0 %v611
    %613 = vmatprep.subr.mxu0 0.0
    %v614 = vand.u32 %v54, 4294901760
    %v615 = vsub.f32 %v54, %v614
    %v616 = vand.u32 %v615, 4294901760
    %617 = vmatpush1.msra.mxu0 %v616
    %618 = vmatprep.subr.mxu0 0.0
    %v619 = vand.u32 %v53, 4294901760
    %v620 = vsub.f32 %v53, %v619
    %v621 = vand.u32 %v620, 4294901760
    %622 = vmatpush1.msra.mxu0 %v621
    %623 = vmatprep.subr.mxu0 0.0
    %v624 = vand.u32 %v52, 4294901760
    %v625 = vsub.f32 %v52, %v624
    %v626 = vand.u32 %v625, 4294901760
    %627 = vmatpush1.msra.mxu0 %v626
    %628 = vmatprep.subr.mxu0 0.0
    %v629 = vand.u32 %v51, 4294901760
    %v630 = vsub.f32 %v51, %v629
    %v631 = vand.u32 %v630, 4294901760
    %632 = vmatpush1.msra.mxu0 %v631
    %633 = vmatprep.subr.mxu0 0.0
    %v634 = vand.u32 %v50, 4294901760
    %v635 = vsub.f32 %v50, %v634
    %v636 = vand.u32 %v635, 4294901760
    %637 = vmatpush1.msra.mxu0 %v636
    %638 = vmatprep.subr.mxu0 0.0
    %v639 = vand.u32 %v49, 4294901760
    %v640 = vsub.f32 %v49, %v639
    %v641 = vand.u32 %v640, 4294901760
    %642 = vmatpush1.msra.mxu0 %v641
    %643 = vmatprep.subr.mxu0 0.0
    %v644 = vand.u32 %v48, 4294901760
    %v645 = vsub.f32 %v48, %v644
    %v646 = vand.u32 %v645, 4294901760
    %647 = vmatpush1.msra.mxu0 %v646
    %648 = vmatprep.subr.mxu0 0.0
    %v649 = vand.u32 %v47, 4294901760
    %v650 = vsub.f32 %v47, %v649
    %v651 = vand.u32 %v650, 4294901760
    %652 = vmatpush1.msra.mxu0 %v651
    %653 = vmatprep.subr.mxu0 0.0
    %v654 = vand.u32 %v46, 4294901760
    %v655 = vsub.f32 %v46, %v654
    %v656 = vand.u32 %v655, 4294901760
    %657 = vmatpush1.msra.mxu0 %v656
    %658 = vmatprep.subr.mxu0 0.0
    %v659 = vand.u32 %v45, 4294901760
    %v660 = vsub.f32 %v45, %v659
    %v661 = vand.u32 %v660, 4294901760
    %662 = vmatpush1.msra.mxu0 %v661
    %663 = vmatprep.subr.mxu0 0.0
    %v664 = vand.u32 %v44, 4294901760
    %v665 = vsub.f32 %v44, %v664
    %v666 = vand.u32 %v665, 4294901760
    %667 = vmatpush1.msra.mxu0 %v666
    %668 = vmatprep.subr.mxu0 0.0
    %669 = vmatpush2.msra.mxu0 0.0
    %670 = vmatprep.subr.mxu0 0.0
    %671 = vmatpush2.msra.mxu0 0.0
    %672 = vmatprep.subr.mxu0 0.0
    %673 = vmatpush2.msra.mxu0 0.0
    %674 = vmatprep.subr.mxu0 0.0
    %675 = vmatpush2.msra.mxu0 0.0
    %676 = vmatprep.subr.mxu0 0.0
    %677 = vmatpush2.msra.mxu0 0.0
    %678 = vmatprep.subr.mxu0 0.0
    %679 = vmatpush2.msra.mxu0 0.0
    %680 = vmatprep.subr.mxu0 0.0
    %681 = vmatpush2.msra.mxu0 0.0
    %682 = vmatprep.subr.mxu0 0.0
    %683 = vmatpush2.msra.mxu0 0.0
    %684 = vmatprep.subr.mxu0 0.0
    %685 = vmatpush2.msra.mxu0 0.0
    %686 = vmatprep.subr.mxu0 0.0
    %687 = vmatpush2.msra.mxu0 0.0
    %688 = vmatprep.subr.mxu0 0.0
    %689 = vmatpush2.msra.mxu0 0.0
    %690 = vmatprep.subr.mxu0 0.0
    %691 = vmatpush2.msra.mxu0 0.0
    %692 = vmatprep.subr.mxu0 0.0
    %693 = vmatpush2.msra.mxu0 0.0
    %694 = vmatprep.subr.mxu0 0.0
    %695 = vmatpush2.msra.mxu0 0.0
    %696 = vmatprep.subr.mxu0 0.0
    %697 = vmatpush2.msra.mxu0 0.0
    %698 = vmatprep.subr.mxu0 0.0
    %699 = vmatpush2.msra.mxu0 0.0
    %700 = vmatprep.mubr.f32.mxu0 0.0
    %v701 = vand.u32 %v40, 4294901760
    %702 = vmatmul.mubr.f32.gmra.mxu0 %v701
    %v703 = vpop.f32.mrf.mxu0
    %v704 = vadd.f32 %v561, %v703
    %v705 = vpop.f32.mrf.mxu0
    %706 = vmatprep.mubr.f32.mxu0 0.0
    %v707 = vand.u32 %v41, 4294901760
    %708 = vmatmul.mubr.f32.gmra.mxu0 %v707
    %v709 = vpop.f32.mrf.mxu0
    %v710 = vadd.f32 %v569, %v709
    %v711 = vpop.f32.mrf.mxu0
    %712 = vmatprep.mubr.f32.mxu0 0.0
    %v713 = vand.u32 %v42, 4294901760
    %714 = vmatmul.mubr.f32.gmra.mxu0 %v713
    %v715 = vpop.f32.mrf.mxu0
    %v716 = vadd.f32 %v577, %v715
    %v717 = vpop.f32.mrf.mxu0
    %718 = vmatprep.mubr.f32.mxu0 0.0
    %v719 = vand.u32 %v43, 4294901760
    %720 = vmatmul.mubr.f32.gmra.mxu0 %v719
    %v721 = vpop.f32.mrf.mxu0
    %v722 = vadd.f32 %v585, %v721
    %v723 = vpop.f32.mrf.mxu0
    %724 = vdwg.mxu0
    %725 = vmatprep.subr.mxu0 0.0
    %v726 = vand.u32 %v59, 4294901760
    %727 = vmatpush1.msra.mxu0 %v726
    %728 = vmatprep.subr.mxu0 0.0
    %v729 = vand.u32 %v58, 4294901760
    %730 = vmatpush1.msra.mxu0 %v729
    %731 = vmatprep.subr.mxu0 0.0
    %v732 = vand.u32 %v57, 4294901760
    %733 = vmatpush1.msra.mxu0 %v732
    %734 = vmatprep.subr.mxu0 0.0
    %v735 = vand.u32 %v56, 4294901760
    %736 = vmatpush1.msra.mxu0 %v735
    %737 = vmatprep.subr.mxu0 0.0
    %v738 = vand.u32 %v55, 4294901760
    %739 = vmatpush1.msra.mxu0 %v738
    %740 = vmatprep.subr.mxu0 0.0
    %v741 = vand.u32 %v54, 4294901760
    %742 = vmatpush1.msra.mxu0 %v741
    %743 = vmatprep.subr.mxu0 0.0
    %v744 = vand.u32 %v53, 4294901760
    %745 = vmatpush1.msra.mxu0 %v744
    %746 = vmatprep.subr.mxu0 0.0
    %v747 = vand.u32 %v52, 4294901760
    %748 = vmatpush1.msra.mxu0 %v747
    %749 = vmatprep.subr.mxu0 0.0
    %v750 = vand.u32 %v51, 4294901760
    %751 = vmatpush1.msra.mxu0 %v750
    %752 = vmatprep.subr.mxu0 0.0
    %v753 = vand.u32 %v50, 4294901760
    %754 = vmatpush1.msra.mxu0 %v753
    %755 = vmatprep.subr.mxu0 0.0
    %v756 = vand.u32 %v49, 4294901760
    %757 = vmatpush1.msra.mxu0 %v756
    %758 = vmatprep.subr.mxu0 0.0
    %v759 = vand.u32 %v48, 4294901760
    %760 = vmatpush1.msra.mxu0 %v759
    %761 = vmatprep.subr.mxu0 0.0
    %v762 = vand.u32 %v47, 4294901760
    %763 = vmatpush1.msra.mxu0 %v762
    %764 = vmatprep.subr.mxu0 0.0
    %v765 = vand.u32 %v46, 4294901760
    %766 = vmatpush1.msra.mxu0 %v765
    %767 = vmatprep.subr.mxu0 0.0
    %v768 = vand.u32 %v45, 4294901760
    %769 = vmatpush1.msra.mxu0 %v768
    %770 = vmatprep.subr.mxu0 0.0
    %v771 = vand.u32 %v44, 4294901760
    %772 = vmatpush1.msra.mxu0 %v771
    %773 = vmatprep.subr.mxu0 0.0
    %774 = vmatpush2.msra.mxu0 0.0
    %775 = vmatprep.subr.mxu0 0.0
    %776 = vmatpush2.msra.mxu0 0.0
    %777 = vmatprep.subr.mxu0 0.0
    %778 = vmatpush2.msra.mxu0 0.0
    %779 = vmatprep.subr.mxu0 0.0
    %780 = vmatpush2.msra.mxu0 0.0
    %781 = vmatprep.subr.mxu0 0.0
    %782 = vmatpush2.msra.mxu0 0.0
    %783 = vmatprep.subr.mxu0 0.0
    %784 = vmatpush2.msra.mxu0 0.0
    %785 = vmatprep.subr.mxu0 0.0
    %786 = vmatpush2.msra.mxu0 0.0
    %787 = vmatprep.subr.mxu0 0.0
    %788 = vmatpush2.msra.mxu0 0.0
    %789 = vmatprep.subr.mxu0 0.0
    %790 = vmatpush2.msra.mxu0 0.0
    %791 = vmatprep.subr.mxu0 0.0
    %792 = vmatpush2.msra.mxu0 0.0
    %793 = vmatprep.subr.mxu0 0.0
    %794 = vmatpush2.msra.mxu0 0.0
    %795 = vmatprep.subr.mxu0 0.0
    %796 = vmatpush2.msra.mxu0 0.0
    %797 = vmatprep.subr.mxu0 0.0
    %798 = vmatpush2.msra.mxu0 0.0
    %799 = vmatprep.subr.mxu0 0.0
    %800 = vmatpush2.msra.mxu0 0.0
    %801 = vmatprep.subr.mxu0 0.0
    %802 = vmatpush2.msra.mxu0 0.0
    %803 = vmatprep.subr.mxu0 0.0
    %804 = vmatpush2.msra.mxu0 0.0
    %805 = vmatprep.mubr.f32.mxu0 0.0
    %v806 = vand.u32 %v40, 4294901760
    %807 = vmatmul.mubr.f32.gmra.mxu0 %v806
    %v808 = vpop.f32.mrf.mxu0
    %v809 = vadd.f32 %v704, %v808
    %v810 = vpop.f32.mrf.mxu0
    %811 = vmatprep.mubr.f32.mxu0 0.0
    %v812 = vand.u32 %v41, 4294901760
    %813 = vmatmul.mubr.f32.gmra.mxu0 %v812
    %v814 = vpop.f32.mrf.mxu0
    %v815 = vadd.f32 %v710, %v814
    %v816 = vpop.f32.mrf.mxu0
    %817 = vmatprep.mubr.f32.mxu0 0.0
    %v818 = vand.u32 %v42, 4294901760
    %819 = vmatmul.mubr.f32.gmra.mxu0 %v818
    %v820 = vpop.f32.mrf.mxu0
    %v821 = vadd.f32 %v716, %v820
    %v822 = vpop.f32.mrf.mxu0
    %823 = vmatprep.mubr.f32.mxu0 0.0
    %v824 = vand.u32 %v43, 4294901760
    %825 = vmatmul.mubr.f32.gmra.mxu0 %v824
    %v826 = vpop.f32.mrf.mxu0
    %v827 = vadd.f32 %v722, %v826
    %v828 = vpop.f32.mrf.mxu0
    %829 = vdwg.mxu0
    %v830 = vlaneseq
    %v831 = vshrl.u32 %v830, 7
    %v832 = vlaneseq
    %v833 = vand.u32 %v832, 127
    %v834 = vcvt.s32.f32 %v831
    %v835 = vrot.slane %v834, 7
    %vm836 = vcmp.eq.s32.totalorder %v831, 0
    %vm837 = vcmp.eq.s32.totalorder %v833, 0
    %vm838 = vmand %vm836, %vm837
    %v839 = vsel %vm838, %v835, 0.0
    %840 = vadd.xlane.f32.xlu0 %v839
    %v841 = vpop.xlane.xlu0 %840
    %v842 = vrot.slane %v841, 4
    %v843 = vadd.f32 %v841, %v842
    %v844 = vrot.slane %v843, 2
    %v845 = vadd.f32 %v843, %v844
    %v846 = vrot.slane %v845, 1
    %v847 = vadd.f32 %v845, %v846
    %s848 = vtos %v847
    %p849 = scmp.gt.f32.partialorder %s848, 3.5
    %v850 = vadd.s32 %v831, 8
    %v851 = vadd.s32 %v831, 16
    %v852 = vadd.s32 %v831, 24
    %vm853 = vcmp.lt.s32.totalorder %v831, 0
    %v854 = vsub.s32 0, %v831
    %v855 = vsel %vm853, %v854, %v831
    %v856 = vshrl.u32 %v855, 2
    %v857 = vand.u32 %v855, 3
    %v858 = vsub.s32 0, %v857
    %v859 = vsel %vm853, %v858, %v857
    %vm860 = vcmp.lt.s32.totalorder %v850, 0
    %v861 = vsub.s32 0, %v850
    %v862 = vsel %vm860, %v861, %v850
    %v863 = vshrl.u32 %v862, 2
    %v864 = vand.u32 %v862, 3
    %v865 = vsub.s32 0, %v864
    %v866 = vsel %vm860, %v865, %v864
    %vm867 = vcmp.lt.s32.totalorder %v851, 0
    %v868 = vsub.s32 0, %v851
    %v869 = vsel %vm867, %v868, %v851
    %v870 = vshrl.u32 %v869, 2
    %v871 = vand.u32 %v869, 3
    %v872 = vsub.s32 0, %v871
    %v873 = vsel %vm867, %v872, %v871
    %vm874 = vcmp.lt.s32.totalorder %v852, 0
    %v875 = vsub.s32 0, %v852
    %v876 = vsel %vm874, %v875, %v852
    %v877 = vshrl.u32 %v876, 2
    %v878 = vand.u32 %v876, 3
    %v879 = vsub.s32 0, %v878
    %v880 = vsel %vm874, %v879, %v878
    %vm881 = vcmp.ne.s32.totalorder %v859, 0
    %vm882 = vcmp.ne.s32.totalorder %v866, 0
    %vm883 = vcmp.ne.s32.totalorder %v873, 0
    %vm884 = vcmp.ne.s32.totalorder %v880, 0
    %vm885 = vcmp.lt.s32.totalorder %v859, 0
    %vm886 = vcmp.lt.s32.totalorder %v866, 0
    %vm887 = vcmp.lt.s32.totalorder %v873, 0
    %vm888 = vcmp.lt.s32.totalorder %v880, 0
    %vm889 = vmand %vm885, %vm881
    %vm890 = vmand %vm886, %vm882
    %vm891 = vmand %vm887, %vm883
    %vm892 = vmand %vm888, %vm884
    %v893 = vadd.s32 %v859, 4
    %v894 = vadd.s32 %v866, 4
    %v895 = vadd.s32 %v873, 4
    %v896 = vadd.s32 %v880, 4
    %v897 = vsel %vm889, %v893, %v859
    %v898 = vsel %vm890, %v894, %v866
    %v899 = vsel %vm891, %v895, %v873
    %v900 = vsel %vm892, %v896, %v880
    %v901 = vrot.slane %v809, 1
    %v902 = vrot.slane %v815, 1
    %v903 = vrot.slane %v821, 1
    %v904 = vrot.slane %v827, 1
    %vm905 = vcmp.lt.s32.totalorder %v831, 7
    %v906 = vsel %vm905, %v903, %v904
    %v907 = vsel %vm905, %v902, %v903
    %v908 = vsel %vm905, %v901, %v902
    %v909 = vsel %vm905, %v904, %v901
    %vm910 = vcmp.lt.s32.totalorder %v897, 3
    %vm911 = vcmp.lt.s32.totalorder %v898, 3
    %vm912 = vcmp.lt.s32.totalorder %v899, 3
    %vm913 = vcmp.lt.s32.totalorder %v900, 3
    %v914 = vsel %vm910, 1, 0
    %v915 = vsel %vm911, 1, 0
    %v916 = vsel %vm912, 1, 0
    %v917 = vsel %vm913, 1, 0
    %v918 = vcvt.s32.f32 %v914
    %v919 = vcvt.s32.f32 %v915
    %v920 = vcvt.s32.f32 %v916
    %v921 = vcvt.s32.f32 %v917
    %vm922 = vcmp.ge.s32.totalorder %v897, 1
    %vm923 = vcmp.ge.s32.totalorder %v898, 1
    %vm924 = vcmp.ge.s32.totalorder %v899, 1
    %vm925 = vcmp.ge.s32.totalorder %v900, 1
    %v926 = vsel %vm922, 1, 0
    %v927 = vsel %vm923, 1, 0
    %v928 = vsel %vm924, 1, 0
    %v929 = vsel %vm925, 1, 0
    %v930 = vcvt.s32.f32 %v926
    %v931 = vcvt.s32.f32 %v927
    %v932 = vcvt.s32.f32 %v928
    %v933 = vcvt.s32.f32 %v929
    %s934 = scalar_select %p849, 1, 0
    %v935 = vstv %s934
    %vm936 = vcmp.eq.s32.totalorder %v935, 1
    %v937 = vsel %vm936, %v918, %v930
    %v938 = vsel %vm936, %v919, %v931
    %v939 = vsel %vm936, %v920, %v932
    %v940 = vsel %vm936, %v921, %v933
    %v941 = vsub.f32 %v809, %v908
    %v942 = vsub.f32 %v815, %v907
    %v943 = vsub.f32 %v821, %v906
    %v944 = vsub.f32 %v827, %v909
    %v945 = vand.u32 2147483647, %v941
    %v946 = vand.u32 2147483647, %v942
    %v947 = vand.u32 2147483647, %v943
    %v948 = vand.u32 2147483647, %v944
    %v949 = vmul.f32 %v937, %v945
    %v950 = vmul.f32 %v938, %v946
    %v951 = vmul.f32 %v939, %v947
    %v952 = vmul.f32 %v940, %v948
    %v953 = vadd.f32 %v949, 0.0
    %v954 = vadd.f32 %v950, 0.0
    %v955 = vadd.f32 %v951, 0.0
    %v956 = vadd.f32 %v952, 0.0
    %v957 = vrot.slane %v809, 2
    %v958 = vrot.slane %v815, 2
    %v959 = vrot.slane %v821, 2
    %v960 = vrot.slane %v827, 2
    %vm961 = vcmp.lt.s32.totalorder %v831, 6
    %v962 = vsel %vm961, %v959, %v960
    %v963 = vsel %vm961, %v958, %v959
    %v964 = vsel %vm961, %v957, %v958
    %v965 = vsel %vm961, %v960, %v957
    %vm966 = vcmp.lt.s32.totalorder %v897, 2
    %vm967 = vcmp.lt.s32.totalorder %v898, 2
    %vm968 = vcmp.lt.s32.totalorder %v899, 2
    %vm969 = vcmp.lt.s32.totalorder %v900, 2
    %v970 = vsel %vm966, 1, 0
    %v971 = vsel %vm967, 1, 0
    %v972 = vsel %vm968, 1, 0
    %v973 = vsel %vm969, 1, 0
    %v974 = vcvt.s32.f32 %v970
    %v975 = vcvt.s32.f32 %v971
    %v976 = vcvt.s32.f32 %v972
    %v977 = vcvt.s32.f32 %v973
    %vm978 = vcmp.ge.s32.totalorder %v897, 2
    %vm979 = vcmp.ge.s32.totalorder %v898, 2
    %vm980 = vcmp.ge.s32.totalorder %v899, 2
    %vm981 = vcmp.ge.s32.totalorder %v900, 2
    %v982 = vsel %vm978, 1, 0
    %v983 = vsel %vm979, 1, 0
    %v984 = vsel %vm980, 1, 0
    %v985 = vsel %vm981, 1, 0
    %v986 = vcvt.s32.f32 %v982
    %v987 = vcvt.s32.f32 %v983
    %v988 = vcvt.s32.f32 %v984
    %v989 = vcvt.s32.f32 %v985
    %v990 = vsel %vm936, %v974, %v986
    %v991 = vsel %vm936, %v975, %v987
    %v992 = vsel %vm936, %v976, %v988
    %v993 = vsel %vm936, %v977, %v989
    %v994 = vsub.f32 %v809, %v964
    %v995 = vsub.f32 %v815, %v963
    %v996 = vsub.f32 %v821, %v962
    %v997 = vsub.f32 %v827, %v965
    %v998 = vand.u32 2147483647, %v994
    %v999 = vand.u32 2147483647, %v995
    %v1000 = vand.u32 2147483647, %v996
    %v1001 = vand.u32 2147483647, %v997
    %v1002 = vmul.f32 %v990, %v998
    %v1003 = vmul.f32 %v991, %v999
    %v1004 = vmul.f32 %v992, %v1000
    %v1005 = vmul.f32 %v993, %v1001
    %v1006 = vadd.f32 %v953, %v1002
    %v1007 = vadd.f32 %v954, %v1003
    %v1008 = vadd.f32 %v955, %v1004
    %v1009 = vadd.f32 %v956, %v1005
    %v1010 = vrot.slane %v809, 3
    %v1011 = vrot.slane %v815, 3
    %v1012 = vrot.slane %v821, 3
    %v1013 = vrot.slane %v827, 3
    %vm1014 = vcmp.lt.s32.totalorder %v831, 5
    %v1015 = vsel %vm1014, %v1012, %v1013
    %v1016 = vsel %vm1014, %v1011, %v1012
    %v1017 = vsel %vm1014, %v1010, %v1011
    %v1018 = vsel %vm1014, %v1013, %v1010
    %vm1019 = vcmp.lt.s32.totalorder %v897, 1
    %vm1020 = vcmp.lt.s32.totalorder %v898, 1
    %vm1021 = vcmp.lt.s32.totalorder %v899, 1
    %vm1022 = vcmp.lt.s32.totalorder %v900, 1
    %v1023 = vsel %vm1019, 1, 0
    %v1024 = vsel %vm1020, 1, 0
    %v1025 = vsel %vm1021, 1, 0
    %v1026 = vsel %vm1022, 1, 0
    %v1027 = vcvt.s32.f32 %v1023
    %v1028 = vcvt.s32.f32 %v1024
    %v1029 = vcvt.s32.f32 %v1025
    %v1030 = vcvt.s32.f32 %v1026
    %vm1031 = vcmp.ge.s32.totalorder %v897, 3
    %vm1032 = vcmp.ge.s32.totalorder %v898, 3
    %vm1033 = vcmp.ge.s32.totalorder %v899, 3
    %vm1034 = vcmp.ge.s32.totalorder %v900, 3
    %v1035 = vsel %vm1031, 1, 0
    %v1036 = vsel %vm1032, 1, 0
    %v1037 = vsel %vm1033, 1, 0
    %v1038 = vsel %vm1034, 1, 0
    %v1039 = vcvt.s32.f32 %v1035
    %v1040 = vcvt.s32.f32 %v1036
    %v1041 = vcvt.s32.f32 %v1037
    %v1042 = vcvt.s32.f32 %v1038
    %v1043 = vsel %vm936, %v1027, %v1039
    %v1044 = vsel %vm936, %v1028, %v1040
    %v1045 = vsel %vm936, %v1029, %v1041
    %v1046 = vsel %vm936, %v1030, %v1042
    %v1047 = vsub.f32 %v809, %v1017
    %v1048 = vsub.f32 %v815, %v1016
    %v1049 = vsub.f32 %v821, %v1015
    %v1050 = vsub.f32 %v827, %v1018
    %v1051 = vand.u32 2147483647, %v1047
    %v1052 = vand.u32 2147483647, %v1048
    %v1053 = vand.u32 2147483647, %v1049
    %v1054 = vand.u32 2147483647, %v1050
    %v1055 = vmul.f32 %v1043, %v1051
    %v1056 = vmul.f32 %v1044, %v1052
    %v1057 = vmul.f32 %v1045, %v1053
    %v1058 = vmul.f32 %v1046, %v1054
    %v1059 = vadd.f32 %v1006, %v1055
    %v1060 = vadd.f32 %v1007, %v1056
    %v1061 = vadd.f32 %v1008, %v1057
    %v1062 = vadd.f32 %v1009, %v1058
    %v1063 = vadd.f32 %v1059, %v1060
    %v1064 = vadd.f32 %v1063, %v1061
    %v1065 = vadd.f32 %v1064, %v1062
    %1066 = vadd.xlane.f32.xlu0 %v1065
    %v1067 = vpop.xlane.xlu0 %1066
    %v1068 = vrot.slane %v1067, 4
    %v1069 = vadd.f32 %v1067, %v1068
    %v1070 = vrot.slane %v1069, 2
    %v1071 = vadd.f32 %v1069, %v1070
    %v1072 = vrot.slane %v1071, 1
    %v1073 = vadd.f32 %v1071, %v1072
    %s1074 = vtos %v1073
    %v1076 = vrot.slane %v809, 4
    %v1078 = vsub.f32 %v809, %v1076
    %v1079 = vand.u32 2147483647, %v1078
    %vm1080 = vcmask 1043456
    %v1081 = vsel %vm1080, %v1079, 0.0
    %1082 = vadd.xlane.f32.xlu0 %v1081
    %v1083 = vpop.xlane.xlu0 %1082
    %v1084 = vrot.slane %v1083, 4
    %v1085 = vadd.f32 %v1083, %v1084
    %v1086 = vrot.slane %v1085, 2
    %v1087 = vadd.f32 %v1085, %v1086
    %v1088 = vrot.slane %v1087, 1
    %v1089 = vadd.f32 %v1087, %v1088
    %s1090 = vtos %v1089
    %p1091 = scmp.eq.s32.totalorder 0, 0
    %s1092 = scalar_select %p1091, %s1090, 0.0
    %v1093 = vstv %s1074
    %v1094 = vsel %vm838, %v1093, 0.0
    %vm1095 = vcmp.eq.s32.totalorder %v833, 1
    %vm1096 = vmand %vm836, %vm1095
    %v1097 = vstv %s1092
    %v1098 = vsel %vm1096, %v1097, 0.0
    %v1099 = vadd.f32 %v1094, %v1098
    %1100 = vst [vmem:[#allocation7] sm:$0xff] %v1099
    // Predicated region
    $region18: #{tpu_custom_call.1} parent=1 // pred_check
      _
    $region19: #{tpu_custom_call.1} parent=1 // pred_check_branch
      %1102 = sbr.rel (0) target = $region21
    $region20: #{tpu_custom_call.1} parent=1 // pred_region
      %s1104 = ssub.s32 128, 128
      %1105 = vsyncadd [#allocation4], %s1104
      %s1107 = sshll.u32 [#allocation7], 4
      %s1108 = int_to_ptr.vmem [resolvable:$true] %s1107
      %1110 = dma.vmem_to_hbm [thread:$0]  %s1108, 128, %s2, [#allocation4]
    $region21: #{tpu_custom_call.1} parent=1 // pred_fallthru
      _
    // Predicated region
    $region22: #{tpu_custom_call.1} parent=1 // pred_check
      _
    $region23: #{tpu_custom_call.1} parent=1 // pred_check_branch
      %1112 = sbr.rel (0) target = $region25
    $region24: #{tpu_custom_call.1} parent=1 // pred_region
      %1113 = dma.done [#allocation4], 128
    $region25: #{tpu_custom_call.1} parent=1 // pred_fallthru
      _
    %1114 = vsyncpa [#allocation3], 1
    %1115 = vsyncpa [#allocation6], 1
    %1116 = vsyncpa [#allocation4], 1

// kernel: tpu_custom_call.1
$region0: #{tpu_custom_call.1}
  #allocation0 [shape = 'u32[]', space=smem, size = 0x4, offset = 0x4, fixed_abs, tag = 'smem constant byte address 0x4 - core index']
  #allocation1 [shape = 'u32[144,128]{1,0:T(1,128)}', space=vmem, size = 0x12000, scoped, tag = 'internal scratch']
  %s0 = inlined_call_operand.hbm [shape: f32[32,128], index: 0, kind: input, shape index: {}]
  %s1 = inlined_call_operand.hbm [shape: f32[128,128], index: 1, kind: input, shape index: {}]
  %s2 = inlined_call_operand.hbm [shape: f32[1,8,128], index: 2, kind: output, shape index: {}]
  %s3 = sld [smem:[#allocation0]]
  $region26: #{tpu_custom_call.1} parent=0
    _
  %s5 = ssub.s32 1, %s3
  %s6 = scalar_select 0, %s5, %s3
  $region1: #{tpu_custom_call.1} parent=0
    #allocation2 [shape = 'u8[16384]{0}', space=vmem, size = 0x4000, scoped, tag = 'input window, operand 0, single buffered']
    #allocation3 [shape = 's32[1]{0}', space=sflag, size = 0x4, scoped, tag = 'scoped memory for tpu_custom_call.1']
    #allocation4 [shape = 's32[1]{0}', space=sflag, size = 0x4, scoped, tag = 'scoped memory for tpu_custom_call.1']
    #allocation5 [shape = 'u8[65536]{0}', space=vmem, size = 0x10000, scoped, tag = 'input window, operand 1, single buffered']
    #allocation6 [shape = 's32[1]{0}', space=sflag, size = 0x4, scoped, tag = 'scoped memory for tpu_custom_call.1']
    #allocation7 [shape = 'u8[4096]{0}', space=vmem, size = 0x1000, scoped, tag = 'output window, operand 0, single buffered']
    %7 = vsyncpa [#allocation3], 0
    %8 = vsyncpa [#allocation6], 0
    %9 = vsyncpa [#allocation4], 0
    // Predicated region
    $region2: #{tpu_custom_call.1} parent=1 // pred_check
      _
    $region3: #{tpu_custom_call.1} parent=1 // pred_check_branch
      %11 = sbr.rel (0) target = $region5
    $region4: #{tpu_custom_call.1} parent=1 // pred_region
      %s13 = ssub.s32 512, 512
      %14 = vsyncadd [#allocation3], %s13
      %s15 = sshll.u32 [#allocation2], 4
      %s16 = int_to_ptr.vmem [resolvable:$true] %s15
      %21 = dma.hbm_to_vmem [thread:$0]  %s0, 512, %s16, [#allocation3], 128, 128, 8
    $region5: #{tpu_custom_call.1} parent=1 // pred_fallthru
      _
    // Predicated region
    $region6: #{tpu_custom_call.1} parent=1 // pred_check
      _
    $region7: #{tpu_custom_call.1} parent=1 // pred_check_branch
      %23 = sbr.rel (0) target = $region9
    $region8: #{tpu_custom_call.1} parent=1 // pred_region
      %s25 = ssub.s32 2048, 2048
      %26 = vsyncadd [#allocation6], %s25
      %s27 = sshll.u32 [#allocation5], 4
      %s28 = int_to_ptr.vmem [resolvable:$true] %s27
      %33 = dma.hbm_to_vmem [thread:$0]  %s1, 2048, %s28, [#allocation6], 128, 128, 8
    $region9: #{tpu_custom_call.1} parent=1 // pred_fallthru
      _
    // Predicated region
    $region10: #{tpu_custom_call.1} parent=1 // pred_check
      _
    $region11: #{tpu_custom_call.1} parent=1 // pred_check_branch
      %35 = sbr.rel (0) target = $region13
    $region12: #{tpu_custom_call.1} parent=1 // pred_region
      %36 = dma.done [#allocation3], 512
    $region13: #{tpu_custom_call.1} parent=1 // pred_fallthru
      _
    // Predicated region
    $region14: #{tpu_custom_call.1} parent=1 // pred_check
      _
    $region15: #{tpu_custom_call.1} parent=1 // pred_check_branch
      %38 = sbr.rel (0) target = $region17
    $region16: #{tpu_custom_call.1} parent=1 // pred_region
      %39 = dma.done [#allocation6], 2048
    $region17: #{tpu_custom_call.1} parent=1 // pred_fallthru
      _
    %v40 = vld [vmem:[#allocation2] sm:$0xff]
    %v41 = vld [vmem:[#allocation2 + $0x8] sm:$0xff]
    %v42 = vld [vmem:[#allocation2 + $0x10] sm:$0xff]
    %v43 = vld [vmem:[#allocation2 + $0x18] sm:$0xff]
    %v44 = vld [vmem:[#allocation5] sm:$0xff]
    %v45 = vld [vmem:[#allocation5 + $0x8] sm:$0xff]
    %v46 = vld [vmem:[#allocation5 + $0x10] sm:$0xff]
    %v47 = vld [vmem:[#allocation5 + $0x18] sm:$0xff]
    %v48 = vld [vmem:[#allocation5 + $0x20] sm:$0xff]
    %v49 = vld [vmem:[#allocation5 + $0x28] sm:$0xff]
    %v50 = vld [vmem:[#allocation5 + $0x30] sm:$0xff]
    %v51 = vld [vmem:[#allocation5 + $0x38] sm:$0xff]
    %v52 = vld [vmem:[#allocation5 + $0x40] sm:$0xff]
    %v53 = vld [vmem:[#allocation5 + $0x48] sm:$0xff]
    %v54 = vld [vmem:[#allocation5 + $0x50] sm:$0xff]
    %v55 = vld [vmem:[#allocation5 + $0x58] sm:$0xff]
    %v56 = vld [vmem:[#allocation5 + $0x60] sm:$0xff]
    %v57 = vld [vmem:[#allocation5 + $0x68] sm:$0xff]
    %v58 = vld [vmem:[#allocation5 + $0x70] sm:$0xff]
    %v59 = vld [vmem:[#allocation5 + $0x78] sm:$0xff]
    %60 = vmatprep.subr.mxu0 0.0
    %v61 = vand.u32 %v59, 4294901760
    %62 = vmatpush1.msra.mxu0 %v61
    %63 = vmatprep.subr.mxu0 0.0
    %v64 = vand.u32 %v58, 4294901760
    %65 = vmatpush1.msra.mxu0 %v64
    %66 = vmatprep.subr.mxu0 0.0
    %v67 = vand.u32 %v57, 4294901760
    %68 = vmatpush1.msra.mxu0 %v67
    %69 = vmatprep.subr.mxu0 0.0
    %v70 = vand.u32 %v56, 4294901760
    %71 = vmatpush1.msra.mxu0 %v70
    %72 = vmatprep.subr.mxu0 0.0
    %v73 = vand.u32 %v55, 4294901760
    %74 = vmatpush1.msra.mxu0 %v73
    %75 = vmatprep.subr.mxu0 0.0
    %v76 = vand.u32 %v54, 4294901760
    %77 = vmatpush1.msra.mxu0 %v76
    %78 = vmatprep.subr.mxu0 0.0
    %v79 = vand.u32 %v53, 4294901760
    %80 = vmatpush1.msra.mxu0 %v79
    %81 = vmatprep.subr.mxu0 0.0
    %v82 = vand.u32 %v52, 4294901760
    %83 = vmatpush1.msra.mxu0 %v82
    %84 = vmatprep.subr.mxu0 0.0
    %v85 = vand.u32 %v51, 4294901760
    %86 = vmatpush1.msra.mxu0 %v85
    %87 = vmatprep.subr.mxu0 0.0
    %v88 = vand.u32 %v50, 4294901760
    %89 = vmatpush1.msra.mxu0 %v88
    %90 = vmatprep.subr.mxu0 0.0
    %v91 = vand.u32 %v49, 4294901760
    %92 = vmatpush1.msra.mxu0 %v91
    %93 = vmatprep.subr.mxu0 0.0
    %v94 = vand.u32 %v48, 4294901760
    %95 = vmatpush1.msra.mxu0 %v94
    %96 = vmatprep.subr.mxu0 0.0
    %v97 = vand.u32 %v47, 4294901760
    %98 = vmatpush1.msra.mxu0 %v97
    %99 = vmatprep.subr.mxu0 0.0
    %v100 = vand.u32 %v46, 4294901760
    %101 = vmatpush1.msra.mxu0 %v100
    %102 = vmatprep.subr.mxu0 0.0
    %v103 = vand.u32 %v45, 4294901760
    %104 = vmatpush1.msra.mxu0 %v103
    %105 = vmatprep.subr.mxu0 0.0
    %v106 = vand.u32 %v44, 4294901760
    %107 = vmatpush1.msra.mxu0 %v106
    %108 = vmatprep.subr.mxu0 0.0
    %109 = vmatpush2.msra.mxu0 0.0
    %110 = vmatprep.subr.mxu0 0.0
    %111 = vmatpush2.msra.mxu0 0.0
    %112 = vmatprep.subr.mxu0 0.0
    %113 = vmatpush2.msra.mxu0 0.0
    %114 = vmatprep.subr.mxu0 0.0
    %115 = vmatpush2.msra.mxu0 0.0
    %116 = vmatprep.subr.mxu0 0.0
    %117 = vmatpush2.msra.mxu0 0.0
    %118 = vmatprep.subr.mxu0 0.0
    %119 = vmatpush2.msra.mxu0 0.0
    %120 = vmatprep.subr.mxu0 0.0
    %121 = vmatpush2.msra.mxu0 0.0
    %122 = vmatprep.subr.mxu0 0.0
    %123 = vmatpush2.msra.mxu0 0.0
    %124 = vmatprep.subr.mxu0 0.0
    %125 = vmatpush2.msra.mxu0 0.0
    %126 = vmatprep.subr.mxu0 0.0
    %127 = vmatpush2.msra.mxu0 0.0
    %128 = vmatprep.subr.mxu0 0.0
    %129 = vmatpush2.msra.mxu0 0.0
    %130 = vmatprep.subr.mxu0 0.0
    %131 = vmatpush2.msra.mxu0 0.0
    %132 = vmatprep.subr.mxu0 0.0
    %133 = vmatpush2.msra.mxu0 0.0
    %134 = vmatprep.subr.mxu0 0.0
    %135 = vmatpush2.msra.mxu0 0.0
    %136 = vmatprep.subr.mxu0 0.0
    %137 = vmatpush2.msra.mxu0 0.0
    %138 = vmatprep.subr.mxu0 0.0
    %139 = vmatpush2.msra.mxu0 0.0
    %140 = vmatprep.mubr.f32.mxu0 0.0
    %v141 = vand.u32 %v40, 4294901760
    %v142 = vsub.f32 %v40, %v141
    %v143 = vand.u32 %v142, 4294901760
    %v144 = vsub.f32 %v142, %v143
    %v145 = vand.u32 %v144, 4294901760
    %146 = vmatmul.mubr.f32.gmra.mxu0 %v145
    %v147 = vpop.f32.mrf.mxu0
    %v148 = vadd.f32 0.0, %v147
    %v149 = vpop.f32.mrf.mxu0
    %150 = vmatprep.mubr.f32.mxu0 0.0
    %v151 = vand.u32 %v41, 4294901760
    %v152 = vsub.f32 %v41, %v151
    %v153 = vand.u32 %v152, 4294901760
    %v154 = vsub.f32 %v152, %v153
    %v155 = vand.u32 %v154, 4294901760
    %156 = vmatmul.mubr.f32.gmra.mxu0 %v155
    %v157 = vpop.f32.mrf.mxu0
    %v158 = vadd.f32 0.0, %v157
    %v159 = vpop.f32.mrf.mxu0
    %160 = vmatprep.mubr.f32.mxu0 0.0
    %v161 = vand.u32 %v42, 4294901760
    %v162 = vsub.f32 %v42, %v161
    %v163 = vand.u32 %v162, 4294901760
    %v164 = vsub.f32 %v162, %v163
    %v165 = vand.u32 %v164, 4294901760
    %166 = vmatmul.mubr.f32.gmra.mxu0 %v165
    %v167 = vpop.f32.mrf.mxu0
    %v168 = vadd.f32 0.0, %v167
    %v169 = vpop.f32.mrf.mxu0
    %170 = vmatprep.mubr.f32.mxu0 0.0
    %v171 = vand.u32 %v43, 4294901760
    %v172 = vsub.f32 %v43, %v171
    %v173 = vand.u32 %v172, 4294901760
    %v174 = vsub.f32 %v172, %v173
    %v175 = vand.u32 %v174, 4294901760
    %176 = vmatmul.mubr.f32.gmra.mxu0 %v175
    %v177 = vpop.f32.mrf.mxu0
    %v178 = vadd.f32 0.0, %v177
    %v179 = vpop.f32.mrf.mxu0
    %180 = vdwg.mxu0
    %181 = vmatprep.subr.mxu0 0.0
    %v182 = vand.u32 %v59, 4294901760
    %v183 = vsub.f32 %v59, %v182
    %v184 = vand.u32 %v183, 4294901760
    %v185 = vsub.f32 %v183, %v184
    %v186 = vand.u32 %v185, 4294901760
    %187 = vmatpush1.msra.mxu0 %v186
    %188 = vmatprep.subr.mxu0 0.0
    %v189 = vand.u32 %v58, 4294901760
    %v190 = vsub.f32 %v58, %v189
    %v191 = vand.u32 %v190, 4294901760
    %v192 = vsub.f32 %v190, %v191
    %v193 = vand.u32 %v192, 4294901760
    %194 = vmatpush1.msra.mxu0 %v193
    %195 = vmatprep.subr.mxu0 0.0
    %v196 = vand.u32 %v57, 4294901760
    %v197 = vsub.f32 %v57, %v196
    %v198 = vand.u32 %v197, 4294901760
    %v199 = vsub.f32 %v197, %v198
    %v200 = vand.u32 %v199, 4294901760
    %201 = vmatpush1.msra.mxu0 %v200
    %202 = vmatprep.subr.mxu0 0.0
    %v203 = vand.u32 %v56, 4294901760
    %v204 = vsub.f32 %v56, %v203
    %v205 = vand.u32 %v204, 4294901760
    %v206 = vsub.f32 %v204, %v205
    %v207 = vand.u32 %v206, 4294901760
    %208 = vmatpush1.msra.mxu0 %v207
    %209 = vmatprep.subr.mxu0 0.0
    %v210 = vand.u32 %v55, 4294901760
    %v211 = vsub.f32 %v55, %v210
    %v212 = vand.u32 %v211, 4294901760
    %v213 = vsub.f32 %v211, %v212
    %v214 = vand.u32 %v213, 4294901760
    %215 = vmatpush1.msra.mxu0 %v214
    %216 = vmatprep.subr.mxu0 0.0
    %v217 = vand.u32 %v54, 4294901760
    %v218 = vsub.f32 %v54, %v217
    %v219 = vand.u32 %v218, 4294901760
    %v220 = vsub.f32 %v218, %v219
    %v221 = vand.u32 %v220, 4294901760
    %222 = vmatpush1.msra.mxu0 %v221
    %223 = vmatprep.subr.mxu0 0.0
    %v224 = vand.u32 %v53, 4294901760
    %v225 = vsub.f32 %v53, %v224
    %v226 = vand.u32 %v225, 4294901760
    %v227 = vsub.f32 %v225, %v226
    %v228 = vand.u32 %v227, 4294901760
    %229 = vmatpush1.msra.mxu0 %v228
    %230 = vmatprep.subr.mxu0 0.0
    %v231 = vand.u32 %v52, 4294901760
    %v232 = vsub.f32 %v52, %v231
    %v233 = vand.u32 %v232, 4294901760
    %v234 = vsub.f32 %v232, %v233
    %v235 = vand.u32 %v234, 4294901760
    %236 = vmatpush1.msra.mxu0 %v235
    %237 = vmatprep.subr.mxu0 0.0
    %v238 = vand.u32 %v51, 4294901760
    %v239 = vsub.f32 %v51, %v238
    %v240 = vand.u32 %v239, 4294901760
    %v241 = vsub.f32 %v239, %v240
    %v242 = vand.u32 %v241, 4294901760
    %243 = vmatpush1.msra.mxu0 %v242
    %244 = vmatprep.subr.mxu0 0.0
    %v245 = vand.u32 %v50, 4294901760
    %v246 = vsub.f32 %v50, %v245
    %v247 = vand.u32 %v246, 4294901760
    %v248 = vsub.f32 %v246, %v247
    %v249 = vand.u32 %v248, 4294901760
    %250 = vmatpush1.msra.mxu0 %v249
    %251 = vmatprep.subr.mxu0 0.0
    %v252 = vand.u32 %v49, 4294901760
    %v253 = vsub.f32 %v49, %v252
    %v254 = vand.u32 %v253, 4294901760
    %v255 = vsub.f32 %v253, %v254
    %v256 = vand.u32 %v255, 4294901760
    %257 = vmatpush1.msra.mxu0 %v256
    %258 = vmatprep.subr.mxu0 0.0
    %v259 = vand.u32 %v48, 4294901760
    %v260 = vsub.f32 %v48, %v259
    %v261 = vand.u32 %v260, 4294901760
    %v262 = vsub.f32 %v260, %v261
    %v263 = vand.u32 %v262, 4294901760
    %264 = vmatpush1.msra.mxu0 %v263
    %265 = vmatprep.subr.mxu0 0.0
    %v266 = vand.u32 %v47, 4294901760
    %v267 = vsub.f32 %v47, %v266
    %v268 = vand.u32 %v267, 4294901760
    %v269 = vsub.f32 %v267, %v268
    %v270 = vand.u32 %v269, 4294901760
    %271 = vmatpush1.msra.mxu0 %v270
    %272 = vmatprep.subr.mxu0 0.0
    %v273 = vand.u32 %v46, 4294901760
    %v274 = vsub.f32 %v46, %v273
    %v275 = vand.u32 %v274, 4294901760
    %v276 = vsub.f32 %v274, %v275
    %v277 = vand.u32 %v276, 4294901760
    %278 = vmatpush1.msra.mxu0 %v277
    %279 = vmatprep.subr.mxu0 0.0
    %v280 = vand.u32 %v45, 4294901760
    %v281 = vsub.f32 %v45, %v280
    %v282 = vand.u32 %v281, 4294901760
    %v283 = vsub.f32 %v281, %v282
    %v284 = vand.u32 %v283, 4294901760
    %285 = vmatpush1.msra.mxu0 %v284
    %286 = vmatprep.subr.mxu0 0.0
    %v287 = vand.u32 %v44, 4294901760
    %v288 = vsub.f32 %v44, %v287
    %v289 = vand.u32 %v288, 4294901760
    %v290 = vsub.f32 %v288, %v289
    %v291 = vand.u32 %v290, 4294901760
    %292 = vmatpush1.msra.mxu0 %v291
    %293 = vmatprep.subr.mxu0 0.0
    %294 = vmatpush2.msra.mxu0 0.0
    %295 = vmatprep.subr.mxu0 0.0
    %296 = vmatpush2.msra.mxu0 0.0
    %297 = vmatprep.subr.mxu0 0.0
    %298 = vmatpush2.msra.mxu0 0.0
    %299 = vmatprep.subr.mxu0 0.0
    %300 = vmatpush2.msra.mxu0 0.0
    %301 = vmatprep.subr.mxu0 0.0
    %302 = vmatpush2.msra.mxu0 0.0
    %303 = vmatprep.subr.mxu0 0.0
    %304 = vmatpush2.msra.mxu0 0.0
    %305 = vmatprep.subr.mxu0 0.0
    %306 = vmatpush2.msra.mxu0 0.0
    %307 = vmatprep.subr.mxu0 0.0
    %308 = vmatpush2.msra.mxu0 0.0
    %309 = vmatprep.subr.mxu0 0.0
    %310 = vmatpush2.msra.mxu0 0.0
    %311 = vmatprep.subr.mxu0 0.0
    %312 = vmatpush2.msra.mxu0 0.0
    %313 = vmatprep.subr.mxu0 0.0
    %314 = vmatpush2.msra.mxu0 0.0
    %315 = vmatprep.subr.mxu0 0.0
    %316 = vmatpush2.msra.mxu0 0.0
    %317 = vmatprep.subr.mxu0 0.0
    %318 = vmatpush2.msra.mxu0 0.0
    %319 = vmatprep.subr.mxu0 0.0
    %320 = vmatpush2.msra.mxu0 0.0
    %321 = vmatprep.subr.mxu0 0.0
    %322 = vmatpush2.msra.mxu0 0.0
    %323 = vmatprep.subr.mxu0 0.0
    %324 = vmatpush2.msra.mxu0 0.0
    %325 = vmatprep.mubr.f32.mxu0 0.0
    %v326 = vand.u32 %v40, 4294901760
    %327 = vmatmul.mubr.f32.gmra.mxu0 %v326
    %v328 = vpop.f32.mrf.mxu0
    %v329 = vadd.f32 %v148, %v328
    %v330 = vpop.f32.mrf.mxu0
    %331 = vmatprep.mubr.f32.mxu0 0.0
    %v332 = vand.u32 %v41, 4294901760
    %333 = vmatmul.mubr.f32.gmra.mxu0 %v332
    %v334 = vpop.f32.mrf.mxu0
    %v335 = vadd.f32 %v158, %v334
    %v336 = vpop.f32.mrf.mxu0
    %337 = vmatprep.mubr.f32.mxu0 0.0
    %v338 = vand.u32 %v42, 4294901760
    %339 = vmatmul.mubr.f32.gmra.mxu0 %v338
    %v340 = vpop.f32.mrf.mxu0
    %v341 = vadd.f32 %v168, %v340
    %v342 = vpop.f32.mrf.mxu0
    %343 = vmatprep.mubr.f32.mxu0 0.0
    %v344 = vand.u32 %v43, 4294901760
    %345 = vmatmul.mubr.f32.gmra.mxu0 %v344
    %v346 = vpop.f32.mrf.mxu0
    %v347 = vadd.f32 %v178, %v346
    %v348 = vpop.f32.mrf.mxu0
    %349 = vdwg.mxu0
    %350 = vmatprep.subr.mxu0 0.0
    %v351 = vand.u32 %v59, 4294901760
    %v352 = vsub.f32 %v59, %v351
    %353 = vmatpush1.msra.mxu0 %v352
    %354 = vmatprep.subr.mxu0 0.0
    %v355 = vand.u32 %v58, 4294901760
    %v356 = vsub.f32 %v58, %v355
    %357 = vmatpush1.msra.mxu0 %v356
    %358 = vmatprep.subr.mxu0 0.0
    %v359 = vand.u32 %v57, 4294901760
    %v360 = vsub.f32 %v57, %v359
    %361 = vmatpush1.msra.mxu0 %v360
    %362 = vmatprep.subr.mxu0 0.0
    %v363 = vand.u32 %v56, 4294901760
    %v364 = vsub.f32 %v56, %v363
    %365 = vmatpush1.msra.mxu0 %v364
    %366 = vmatprep.subr.mxu0 0.0
    %v367 = vand.u32 %v55, 4294901760
    %v368 = vsub.f32 %v55, %v367
    %369 = vmatpush1.msra.mxu0 %v368
    %370 = vmatprep.subr.mxu0 0.0
    %v371 = vand.u32 %v54, 4294901760
    %v372 = vsub.f32 %v54, %v371
    %373 = vmatpush1.msra.mxu0 %v372
    %374 = vmatprep.subr.mxu0 0.0
    %v375 = vand.u32 %v53, 4294901760
    %v376 = vsub.f32 %v53, %v375
    %377 = vmatpush1.msra.mxu0 %v376
    %378 = vmatprep.subr.mxu0 0.0
    %v379 = vand.u32 %v52, 4294901760
    %v380 = vsub.f32 %v52, %v379
    %381 = vmatpush1.msra.mxu0 %v380
    %382 = vmatprep.subr.mxu0 0.0
    %v383 = vand.u32 %v51, 4294901760
    %v384 = vsub.f32 %v51, %v383
    %385 = vmatpush1.msra.mxu0 %v384
    %386 = vmatprep.subr.mxu0 0.0
    %v387 = vand.u32 %v50, 4294901760
    %v388 = vsub.f32 %v50, %v387
    %389 = vmatpush1.msra.mxu0 %v388
    %390 = vmatprep.subr.mxu0 0.0
    %v391 = vand.u32 %v49, 4294901760
    %v392 = vsub.f32 %v49, %v391
    %393 = vmatpush1.msra.mxu0 %v392
    %394 = vmatprep.subr.mxu0 0.0
    %v395 = vand.u32 %v48, 4294901760
    %v396 = vsub.f32 %v48, %v395
    %397 = vmatpush1.msra.mxu0 %v396
    %398 = vmatprep.subr.mxu0 0.0
    %v399 = vand.u32 %v47, 4294901760
    %v400 = vsub.f32 %v47, %v399
    %401 = vmatpush1.msra.mxu0 %v400
    %402 = vmatprep.subr.mxu0 0.0
    %v403 = vand.u32 %v46, 4294901760
    %v404 = vsub.f32 %v46, %v403
    %405 = vmatpush1.msra.mxu0 %v404
    %406 = vmatprep.subr.mxu0 0.0
    %v407 = vand.u32 %v45, 4294901760
    %v408 = vsub.f32 %v45, %v407
    %409 = vmatpush1.msra.mxu0 %v408
    %410 = vmatprep.subr.mxu0 0.0
    %v411 = vand.u32 %v44, 4294901760
    %v412 = vsub.f32 %v44, %v411
    %413 = vmatpush1.msra.mxu0 %v412
    %414 = vmatprep.subr.mxu0 0.0
    %415 = vmatpush2.msra.mxu0 0.0
    %416 = vmatprep.subr.mxu0 0.0
    %417 = vmatpush2.msra.mxu0 0.0
    %418 = vmatprep.subr.mxu0 0.0
    %419 = vmatpush2.msra.mxu0 0.0
    %420 = vmatprep.subr.mxu0 0.0
    %421 = vmatpush2.msra.mxu0 0.0
    %422 = vmatprep.subr.mxu0 0.0
    %423 = vmatpush2.msra.mxu0 0.0
    %424 = vmatprep.subr.mxu0 0.0
    %425 = vmatpush2.msra.mxu0 0.0
    %426 = vmatprep.subr.mxu0 0.0
    %427 = vmatpush2.msra.mxu0 0.0
    %428 = vmatprep.subr.mxu0 0.0
    %429 = vmatpush2.msra.mxu0 0.0
    %430 = vmatprep.subr.mxu0 0.0
    %431 = vmatpush2.msra.mxu0 0.0
    %432 = vmatprep.subr.mxu0 0.0
    %433 = vmatpush2.msra.mxu0 0.0
    %434 = vmatprep.subr.mxu0 0.0
    %435 = vmatpush2.msra.mxu0 0.0
    %436 = vmatprep.subr.mxu0 0.0
    %437 = vmatpush2.msra.mxu0 0.0
    %438 = vmatprep.subr.mxu0 0.0
    %439 = vmatpush2.msra.mxu0 0.0
    %440 = vmatprep.subr.mxu0 0.0
    %441 = vmatpush2.msra.mxu0 0.0
    %442 = vmatprep.subr.mxu0 0.0
    %443 = vmatpush2.msra.mxu0 0.0
    %444 = vmatprep.subr.mxu0 0.0
    %445 = vmatpush2.msra.mxu0 0.0
    %446 = vmatprep.mubr.f32.mxu0 0.0
    %v447 = vand.u32 %v40, 4294901760
    %v448 = vsub.f32 %v40, %v447
    %449 = vmatmul.mubr.f32.gmra.mxu0 %v448
    %v450 = vpop.f32.mrf.mxu0
    %v451 = vadd.f32 %v329, %v450
    %v452 = vpop.f32.mrf.mxu0
    %453 = vmatprep.mubr.f32.mxu0 0.0
    %v454 = vand.u32 %v41, 4294901760
    %v455 = vsub.f32 %v41, %v454
    %456 = vmatmul.mubr.f32.gmra.mxu0 %v455
    %v457 = vpop.f32.mrf.mxu0
    %v458 = vadd.f32 %v335, %v457
    %v459 = vpop.f32.mrf.mxu0
    %460 = vmatprep.mubr.f32.mxu0 0.0
    %v461 = vand.u32 %v42, 4294901760
    %v462 = vsub.f32 %v42, %v461
    %463 = vmatmul.mubr.f32.gmra.mxu0 %v462
    %v464 = vpop.f32.mrf.mxu0
    %v465 = vadd.f32 %v341, %v464
    %v466 = vpop.f32.mrf.mxu0
    %467 = vmatprep.mubr.f32.mxu0 0.0
    %v468 = vand.u32 %v43, 4294901760
    %v469 = vsub.f32 %v43, %v468
    %470 = vmatmul.mubr.f32.gmra.mxu0 %v469
    %v471 = vpop.f32.mrf.mxu0
    %v472 = vadd.f32 %v347, %v471
    %v473 = vpop.f32.mrf.mxu0
    %474 = vdwg.mxu0
    %475 = vmatprep.subr.mxu0 0.0
    %v476 = vand.u32 %v59, 4294901760
    %477 = vmatpush1.msra.mxu0 %v476
    %478 = vmatprep.subr.mxu0 0.0
    %v479 = vand.u32 %v58, 4294901760
    %480 = vmatpush1.msra.mxu0 %v479
    %481 = vmatprep.subr.mxu0 0.0
    %v482 = vand.u32 %v57, 4294901760
    %483 = vmatpush1.msra.mxu0 %v482
    %484 = vmatprep.subr.mxu0 0.0
    %v485 = vand.u32 %v56, 4294901760
    %486 = vmatpush1.msra.mxu0 %v485
    %487 = vmatprep.subr.mxu0 0.0
    %v488 = vand.u32 %v55, 4294901760
    %489 = vmatpush1.msra.mxu0 %v488
    %490 = vmatprep.subr.mxu0 0.0
    %v491 = vand.u32 %v54, 4294901760
    %492 = vmatpush1.msra.mxu0 %v491
    %493 = vmatprep.subr.mxu0 0.0
    %v494 = vand.u32 %v53, 4294901760
    %495 = vmatpush1.msra.mxu0 %v494
    %496 = vmatprep.subr.mxu0 0.0
    %v497 = vand.u32 %v52, 4294901760
    %498 = vmatpush1.msra.mxu0 %v497
    %499 = vmatprep.subr.mxu0 0.0
    %v500 = vand.u32 %v51, 4294901760
    %501 = vmatpush1.msra.mxu0 %v500
    %502 = vmatprep.subr.mxu0 0.0
    %v503 = vand.u32 %v50, 4294901760
    %504 = vmatpush1.msra.mxu0 %v503
    %505 = vmatprep.subr.mxu0 0.0
    %v506 = vand.u32 %v49, 4294901760
    %507 = vmatpush1.msra.mxu0 %v506
    %508 = vmatprep.subr.mxu0 0.0
    %v509 = vand.u32 %v48, 4294901760
    %510 = vmatpush1.msra.mxu0 %v509
    %511 = vmatprep.subr.mxu0 0.0
    %v512 = vand.u32 %v47, 4294901760
    %513 = vmatpush1.msra.mxu0 %v512
    %514 = vmatprep.subr.mxu0 0.0
    %v515 = vand.u32 %v46, 4294901760
    %516 = vmatpush1.msra.mxu0 %v515
    %517 = vmatprep.subr.mxu0 0.0
    %v518 = vand.u32 %v45, 4294901760
    %519 = vmatpush1.msra.mxu0 %v518
    %520 = vmatprep.subr.mxu0 0.0
    %v521 = vand.u32 %v44, 4294901760
    %522 = vmatpush1.msra.mxu0 %v521
    %523 = vmatprep.subr.mxu0 0.0
    %524 = vmatpush2.msra.mxu0 0.0
    %525 = vmatprep.subr.mxu0 0.0
    %526 = vmatpush2.msra.mxu0 0.0
    %527 = vmatprep.subr.mxu0 0.0
    %528 = vmatpush2.msra.mxu0 0.0
    %529 = vmatprep.subr.mxu0 0.0
    %530 = vmatpush2.msra.mxu0 0.0
    %531 = vmatprep.subr.mxu0 0.0
    %532 = vmatpush2.msra.mxu0 0.0
    %533 = vmatprep.subr.mxu0 0.0
    %534 = vmatpush2.msra.mxu0 0.0
    %535 = vmatprep.subr.mxu0 0.0
    %536 = vmatpush2.msra.mxu0 0.0
    %537 = vmatprep.subr.mxu0 0.0
    %538 = vmatpush2.msra.mxu0 0.0
    %539 = vmatprep.subr.mxu0 0.0
    %540 = vmatpush2.msra.mxu0 0.0
    %541 = vmatprep.subr.mxu0 0.0
    %542 = vmatpush2.msra.mxu0 0.0
    %543 = vmatprep.subr.mxu0 0.0
    %544 = vmatpush2.msra.mxu0 0.0
    %545 = vmatprep.subr.mxu0 0.0
    %546 = vmatpush2.msra.mxu0 0.0
    %547 = vmatprep.subr.mxu0 0.0
    %548 = vmatpush2.msra.mxu0 0.0
    %549 = vmatprep.subr.mxu0 0.0
    %550 = vmatpush2.msra.mxu0 0.0
    %551 = vmatprep.subr.mxu0 0.0
    %552 = vmatpush2.msra.mxu0 0.0
    %553 = vmatprep.subr.mxu0 0.0
    %554 = vmatpush2.msra.mxu0 0.0
    %555 = vmatprep.mubr.f32.mxu0 0.0
    %v556 = vand.u32 %v40, 4294901760
    %v557 = vsub.f32 %v40, %v556
    %v558 = vand.u32 %v557, 4294901760
    %559 = vmatmul.mubr.f32.gmra.mxu0 %v558
    %v560 = vpop.f32.mrf.mxu0
    %v561 = vadd.f32 %v451, %v560
    %v562 = vpop.f32.mrf.mxu0
    %563 = vmatprep.mubr.f32.mxu0 0.0
    %v564 = vand.u32 %v41, 4294901760
    %v565 = vsub.f32 %v41, %v564
    %v566 = vand.u32 %v565, 4294901760
    %567 = vmatmul.mubr.f32.gmra.mxu0 %v566
    %v568 = vpop.f32.mrf.mxu0
    %v569 = vadd.f32 %v458, %v568
    %v570 = vpop.f32.mrf.mxu0
    %571 = vmatprep.mubr.f32.mxu0 0.0
    %v572 = vand.u32 %v42, 4294901760
    %v573 = vsub.f32 %v42, %v572
    %v574 = vand.u32 %v573, 4294901760
    %575 = vmatmul.mubr.f32.gmra.mxu0 %v574
    %v576 = vpop.f32.mrf.mxu0
    %v577 = vadd.f32 %v465, %v576
    %v578 = vpop.f32.mrf.mxu0
    %579 = vmatprep.mubr.f32.mxu0 0.0
    %v580 = vand.u32 %v43, 4294901760
    %v581 = vsub.f32 %v43, %v580
    %v582 = vand.u32 %v581, 4294901760
    %583 = vmatmul.mubr.f32.gmra.mxu0 %v582
    %v584 = vpop.f32.mrf.mxu0
    %v585 = vadd.f32 %v472, %v584
    %v586 = vpop.f32.mrf.mxu0
    %587 = vdwg.mxu0
    %588 = vmatprep.subr.mxu0 0.0
    %v589 = vand.u32 %v59, 4294901760
    %v590 = vsub.f32 %v59, %v589
    %v591 = vand.u32 %v590, 4294901760
    %592 = vmatpush1.msra.mxu0 %v591
    %593 = vmatprep.subr.mxu0 0.0
    %v594 = vand.u32 %v58, 4294901760
    %v595 = vsub.f32 %v58, %v594
    %v596 = vand.u32 %v595, 4294901760
    %597 = vmatpush1.msra.mxu0 %v596
    %598 = vmatprep.subr.mxu0 0.0
    %v599 = vand.u32 %v57, 4294901760
    %v600 = vsub.f32 %v57, %v599
    %v601 = vand.u32 %v600, 4294901760
    %602 = vmatpush1.msra.mxu0 %v601
    %603 = vmatprep.subr.mxu0 0.0
    %v604 = vand.u32 %v56, 4294901760
    %v605 = vsub.f32 %v56, %v604
    %v606 = vand.u32 %v605, 4294901760
    %607 = vmatpush1.msra.mxu0 %v606
    %608 = vmatprep.subr.mxu0 0.0
    %v609 = vand.u32 %v55, 4294901760
    %v610 = vsub.f32 %v55, %v609
    %v611 = vand.u32 %v610, 4294901760
    %612 = vmatpush1.msra.mxu0 %v611
    %613 = vmatprep.subr.mxu0 0.0
    %v614 = vand.u32 %v54, 4294901760
    %v615 = vsub.f32 %v54, %v614
    %v616 = vand.u32 %v615, 4294901760
    %617 = vmatpush1.msra.mxu0 %v616
    %618 = vmatprep.subr.mxu0 0.0
    %v619 = vand.u32 %v53, 4294901760
    %v620 = vsub.f32 %v53, %v619
    %v621 = vand.u32 %v620, 4294901760
    %622 = vmatpush1.msra.mxu0 %v621
    %623 = vmatprep.subr.mxu0 0.0
    %v624 = vand.u32 %v52, 4294901760
    %v625 = vsub.f32 %v52, %v624
    %v626 = vand.u32 %v625, 4294901760
    %627 = vmatpush1.msra.mxu0 %v626
    %628 = vmatprep.subr.mxu0 0.0
    %v629 = vand.u32 %v51, 4294901760
    %v630 = vsub.f32 %v51, %v629
    %v631 = vand.u32 %v630, 4294901760
    %632 = vmatpush1.msra.mxu0 %v631
    %633 = vmatprep.subr.mxu0 0.0
    %v634 = vand.u32 %v50, 4294901760
    %v635 = vsub.f32 %v50, %v634
    %v636 = vand.u32 %v635, 4294901760
    %637 = vmatpush1.msra.mxu0 %v636
    %638 = vmatprep.subr.mxu0 0.0
    %v639 = vand.u32 %v49, 4294901760
    %v640 = vsub.f32 %v49, %v639
    %v641 = vand.u32 %v640, 4294901760
    %642 = vmatpush1.msra.mxu0 %v641
    %643 = vmatprep.subr.mxu0 0.0
    %v644 = vand.u32 %v48, 4294901760
    %v645 = vsub.f32 %v48, %v644
    %v646 = vand.u32 %v645, 4294901760
    %647 = vmatpush1.msra.mxu0 %v646
    %648 = vmatprep.subr.mxu0 0.0
    %v649 = vand.u32 %v47, 4294901760
    %v650 = vsub.f32 %v47, %v649
    %v651 = vand.u32 %v650, 4294901760
    %652 = vmatpush1.msra.mxu0 %v651
    %653 = vmatprep.subr.mxu0 0.0
    %v654 = vand.u32 %v46, 4294901760
    %v655 = vsub.f32 %v46, %v654
    %v656 = vand.u32 %v655, 4294901760
    %657 = vmatpush1.msra.mxu0 %v656
    %658 = vmatprep.subr.mxu0 0.0
    %v659 = vand.u32 %v45, 4294901760
    %v660 = vsub.f32 %v45, %v659
    %v661 = vand.u32 %v660, 4294901760
    %662 = vmatpush1.msra.mxu0 %v661
    %663 = vmatprep.subr.mxu0 0.0
    %v664 = vand.u32 %v44, 4294901760
    %v665 = vsub.f32 %v44, %v664
    %v666 = vand.u32 %v665, 4294901760
    %667 = vmatpush1.msra.mxu0 %v666
    %668 = vmatprep.subr.mxu0 0.0
    %669 = vmatpush2.msra.mxu0 0.0
    %670 = vmatprep.subr.mxu0 0.0
    %671 = vmatpush2.msra.mxu0 0.0
    %672 = vmatprep.subr.mxu0 0.0
    %673 = vmatpush2.msra.mxu0 0.0
    %674 = vmatprep.subr.mxu0 0.0
    %675 = vmatpush2.msra.mxu0 0.0
    %676 = vmatprep.subr.mxu0 0.0
    %677 = vmatpush2.msra.mxu0 0.0
    %678 = vmatprep.subr.mxu0 0.0
    %679 = vmatpush2.msra.mxu0 0.0
    %680 = vmatprep.subr.mxu0 0.0
    %681 = vmatpush2.msra.mxu0 0.0
    %682 = vmatprep.subr.mxu0 0.0
    %683 = vmatpush2.msra.mxu0 0.0
    %684 = vmatprep.subr.mxu0 0.0
    %685 = vmatpush2.msra.mxu0 0.0
    %686 = vmatprep.subr.mxu0 0.0
    %687 = vmatpush2.msra.mxu0 0.0
    %688 = vmatprep.subr.mxu0 0.0
    %689 = vmatpush2.msra.mxu0 0.0
    %690 = vmatprep.subr.mxu0 0.0
    %691 = vmatpush2.msra.mxu0 0.0
    %692 = vmatprep.subr.mxu0 0.0
    %693 = vmatpush2.msra.mxu0 0.0
    %694 = vmatprep.subr.mxu0 0.0
    %695 = vmatpush2.msra.mxu0 0.0
    %696 = vmatprep.subr.mxu0 0.0
    %697 = vmatpush2.msra.mxu0 0.0
    %698 = vmatprep.subr.mxu0 0.0
    %699 = vmatpush2.msra.mxu0 0.0
    %700 = vmatprep.mubr.f32.mxu0 0.0
    %v701 = vand.u32 %v40, 4294901760
    %702 = vmatmul.mubr.f32.gmra.mxu0 %v701
    %v703 = vpop.f32.mrf.mxu0
    %v704 = vadd.f32 %v561, %v703
    %v705 = vpop.f32.mrf.mxu0
    %706 = vmatprep.mubr.f32.mxu0 0.0
    %v707 = vand.u32 %v41, 4294901760
    %708 = vmatmul.mubr.f32.gmra.mxu0 %v707
    %v709 = vpop.f32.mrf.mxu0
    %v710 = vadd.f32 %v569, %v709
    %v711 = vpop.f32.mrf.mxu0
    %712 = vmatprep.mubr.f32.mxu0 0.0
    %v713 = vand.u32 %v42, 4294901760
    %714 = vmatmul.mubr.f32.gmra.mxu0 %v713
    %v715 = vpop.f32.mrf.mxu0
    %v716 = vadd.f32 %v577, %v715
    %v717 = vpop.f32.mrf.mxu0
    %718 = vmatprep.mubr.f32.mxu0 0.0
    %v719 = vand.u32 %v43, 4294901760
    %720 = vmatmul.mubr.f32.gmra.mxu0 %v719
    %v721 = vpop.f32.mrf.mxu0
    %v722 = vadd.f32 %v585, %v721
    %v723 = vpop.f32.mrf.mxu0
    %724 = vdwg.mxu0
    %725 = vmatprep.subr.mxu0 0.0
    %v726 = vand.u32 %v59, 4294901760
    %727 = vmatpush1.msra.mxu0 %v726
    %728 = vmatprep.subr.mxu0 0.0
    %v729 = vand.u32 %v58, 4294901760
    %730 = vmatpush1.msra.mxu0 %v729
    %731 = vmatprep.subr.mxu0 0.0
    %v732 = vand.u32 %v57, 4294901760
    %733 = vmatpush1.msra.mxu0 %v732
    %734 = vmatprep.subr.mxu0 0.0
    %v735 = vand.u32 %v56, 4294901760
    %736 = vmatpush1.msra.mxu0 %v735
    %737 = vmatprep.subr.mxu0 0.0
    %v738 = vand.u32 %v55, 4294901760
    %739 = vmatpush1.msra.mxu0 %v738
    %740 = vmatprep.subr.mxu0 0.0
    %v741 = vand.u32 %v54, 4294901760
    %742 = vmatpush1.msra.mxu0 %v741
    %743 = vmatprep.subr.mxu0 0.0
    %v744 = vand.u32 %v53, 4294901760
    %745 = vmatpush1.msra.mxu0 %v744
    %746 = vmatprep.subr.mxu0 0.0
    %v747 = vand.u32 %v52, 4294901760
    %748 = vmatpush1.msra.mxu0 %v747
    %749 = vmatprep.subr.mxu0 0.0
    %v750 = vand.u32 %v51, 4294901760
    %751 = vmatpush1.msra.mxu0 %v750
    %752 = vmatprep.subr.mxu0 0.0
    %v753 = vand.u32 %v50, 4294901760
    %754 = vmatpush1.msra.mxu0 %v753
    %755 = vmatprep.subr.mxu0 0.0
    %v756 = vand.u32 %v49, 4294901760
    %757 = vmatpush1.msra.mxu0 %v756
    %758 = vmatprep.subr.mxu0 0.0
    %v759 = vand.u32 %v48, 4294901760
    %760 = vmatpush1.msra.mxu0 %v759
    %761 = vmatprep.subr.mxu0 0.0
    %v762 = vand.u32 %v47, 4294901760
    %763 = vmatpush1.msra.mxu0 %v762
    %764 = vmatprep.subr.mxu0 0.0
    %v765 = vand.u32 %v46, 4294901760
    %766 = vmatpush1.msra.mxu0 %v765
    %767 = vmatprep.subr.mxu0 0.0
    %v768 = vand.u32 %v45, 4294901760
    %769 = vmatpush1.msra.mxu0 %v768
    %770 = vmatprep.subr.mxu0 0.0
    %v771 = vand.u32 %v44, 4294901760
    %772 = vmatpush1.msra.mxu0 %v771
    %773 = vmatprep.subr.mxu0 0.0
    %774 = vmatpush2.msra.mxu0 0.0
    %775 = vmatprep.subr.mxu0 0.0
    %776 = vmatpush2.msra.mxu0 0.0
    %777 = vmatprep.subr.mxu0 0.0
    %778 = vmatpush2.msra.mxu0 0.0
    %779 = vmatprep.subr.mxu0 0.0
    %780 = vmatpush2.msra.mxu0 0.0
    %781 = vmatprep.subr.mxu0 0.0
    %782 = vmatpush2.msra.mxu0 0.0
    %783 = vmatprep.subr.mxu0 0.0
    %784 = vmatpush2.msra.mxu0 0.0
    %785 = vmatprep.subr.mxu0 0.0
    %786 = vmatpush2.msra.mxu0 0.0
    %787 = vmatprep.subr.mxu0 0.0
    %788 = vmatpush2.msra.mxu0 0.0
    %789 = vmatprep.subr.mxu0 0.0
    %790 = vmatpush2.msra.mxu0 0.0
    %791 = vmatprep.subr.mxu0 0.0
    %792 = vmatpush2.msra.mxu0 0.0
    %793 = vmatprep.subr.mxu0 0.0
    %794 = vmatpush2.msra.mxu0 0.0
    %795 = vmatprep.subr.mxu0 0.0
    %796 = vmatpush2.msra.mxu0 0.0
    %797 = vmatprep.subr.mxu0 0.0
    %798 = vmatpush2.msra.mxu0 0.0
    %799 = vmatprep.subr.mxu0 0.0
    %800 = vmatpush2.msra.mxu0 0.0
    %801 = vmatprep.subr.mxu0 0.0
    %802 = vmatpush2.msra.mxu0 0.0
    %803 = vmatprep.subr.mxu0 0.0
    %804 = vmatpush2.msra.mxu0 0.0
    %805 = vmatprep.mubr.f32.mxu0 0.0
    %v806 = vand.u32 %v40, 4294901760
    %807 = vmatmul.mubr.f32.gmra.mxu0 %v806
    %v808 = vpop.f32.mrf.mxu0
    %v809 = vadd.f32 %v704, %v808
    %v810 = vpop.f32.mrf.mxu0
    %811 = vmatprep.mubr.f32.mxu0 0.0
    %v812 = vand.u32 %v41, 4294901760
    %813 = vmatmul.mubr.f32.gmra.mxu0 %v812
    %v814 = vpop.f32.mrf.mxu0
    %v815 = vadd.f32 %v710, %v814
    %v816 = vpop.f32.mrf.mxu0
    %817 = vmatprep.mubr.f32.mxu0 0.0
    %v818 = vand.u32 %v42, 4294901760
    %819 = vmatmul.mubr.f32.gmra.mxu0 %v818
    %v820 = vpop.f32.mrf.mxu0
    %v821 = vadd.f32 %v716, %v820
    %v822 = vpop.f32.mrf.mxu0
    %823 = vmatprep.mubr.f32.mxu0 0.0
    %v824 = vand.u32 %v43, 4294901760
    %825 = vmatmul.mubr.f32.gmra.mxu0 %v824
    %v826 = vpop.f32.mrf.mxu0
    %v827 = vadd.f32 %v722, %v826
    %v828 = vpop.f32.mrf.mxu0
    %829 = vdwg.mxu0
    %v830 = vlaneseq
    %v831 = vshrl.u32 %v830, 7
    %v832 = vlaneseq
    %v833 = vand.u32 %v832, 127
    %v834 = vcvt.s32.f32 %v831
    %v835 = vrot.slane %v834, 7
    %vm836 = vcmp.eq.s32.totalorder %v831, 0
    %vm837 = vcmp.eq.s32.totalorder %v833, 0
    %vm838 = vmand %vm836, %vm837
    %v839 = vsel %vm838, %v835, 0.0
    %840 = vadd.xlane.f32.xlu0 %v839
    %v841 = vpop.xlane.xlu0 %840
    %v842 = vrot.slane %v841, 4
    %v843 = vadd.f32 %v841, %v842
    %v844 = vrot.slane %v843, 2
    %v845 = vadd.f32 %v843, %v844
    %v846 = vrot.slane %v845, 1
    %v847 = vadd.f32 %v845, %v846
    %s848 = vtos %v847
    %p849 = scmp.gt.f32.partialorder %s848, 3.5
    %v850 = vadd.s32 %v831, 8
    %v851 = vadd.s32 %v831, 16
    %v852 = vadd.s32 %v831, 24
    %vm853 = vcmp.lt.s32.totalorder %v831, 0
    %v854 = vsub.s32 0, %v831
    %v855 = vsel %vm853, %v854, %v831
    %v856 = vshrl.u32 %v855, 2
    %v857 = vand.u32 %v855, 3
    %v858 = vsub.s32 0, %v857
    %v859 = vsel %vm853, %v858, %v857
    %vm860 = vcmp.lt.s32.totalorder %v850, 0
    %v861 = vsub.s32 0, %v850
    %v862 = vsel %vm860, %v861, %v850
    %v863 = vshrl.u32 %v862, 2
    %v864 = vand.u32 %v862, 3
    %v865 = vsub.s32 0, %v864
    %v866 = vsel %vm860, %v865, %v864
    %vm867 = vcmp.lt.s32.totalorder %v851, 0
    %v868 = vsub.s32 0, %v851
    %v869 = vsel %vm867, %v868, %v851
    %v870 = vshrl.u32 %v869, 2
    %v871 = vand.u32 %v869, 3
    %v872 = vsub.s32 0, %v871
    %v873 = vsel %vm867, %v872, %v871
    %vm874 = vcmp.lt.s32.totalorder %v852, 0
    %v875 = vsub.s32 0, %v852
    %v876 = vsel %vm874, %v875, %v852
    %v877 = vshrl.u32 %v876, 2
    %v878 = vand.u32 %v876, 3
    %v879 = vsub.s32 0, %v878
    %v880 = vsel %vm874, %v879, %v878
    %vm881 = vcmp.ne.s32.totalorder %v859, 0
    %vm882 = vcmp.ne.s32.totalorder %v866, 0
    %vm883 = vcmp.ne.s32.totalorder %v873, 0
    %vm884 = vcmp.ne.s32.totalorder %v880, 0
    %vm885 = vcmp.lt.s32.totalorder %v859, 0
    %vm886 = vcmp.lt.s32.totalorder %v866, 0
    %vm887 = vcmp.lt.s32.totalorder %v873, 0
    %vm888 = vcmp.lt.s32.totalorder %v880, 0
    %vm889 = vmand %vm885, %vm881
    %vm890 = vmand %vm886, %vm882
    %vm891 = vmand %vm887, %vm883
    %vm892 = vmand %vm888, %vm884
    %v893 = vadd.s32 %v859, 4
    %v894 = vadd.s32 %v866, 4
    %v895 = vadd.s32 %v873, 4
    %v896 = vadd.s32 %v880, 4
    %v897 = vsel %vm889, %v893, %v859
    %v898 = vsel %vm890, %v894, %v866
    %v899 = vsel %vm891, %v895, %v873
    %v900 = vsel %vm892, %v896, %v880
    %v901 = vrot.slane %v809, 1
    %v902 = vrot.slane %v815, 1
    %v903 = vrot.slane %v821, 1
    %v904 = vrot.slane %v827, 1
    %vm905 = vcmp.lt.s32.totalorder %v831, 7
    %v906 = vsel %vm905, %v903, %v904
    %v907 = vsel %vm905, %v902, %v903
    %v908 = vsel %vm905, %v901, %v902
    %v909 = vsel %vm905, %v904, %v901
    %vm910 = vcmp.lt.s32.totalorder %v897, 3
    %vm911 = vcmp.lt.s32.totalorder %v898, 3
    %vm912 = vcmp.lt.s32.totalorder %v899, 3
    %vm913 = vcmp.lt.s32.totalorder %v900, 3
    %v914 = vsel %vm910, 1, 0
    %v915 = vsel %vm911, 1, 0
    %v916 = vsel %vm912, 1, 0
    %v917 = vsel %vm913, 1, 0
    %v918 = vcvt.s32.f32 %v914
    %v919 = vcvt.s32.f32 %v915
    %v920 = vcvt.s32.f32 %v916
    %v921 = vcvt.s32.f32 %v917
    %vm922 = vcmp.ge.s32.totalorder %v897, 1
    %vm923 = vcmp.ge.s32.totalorder %v898, 1
    %vm924 = vcmp.ge.s32.totalorder %v899, 1
    %vm925 = vcmp.ge.s32.totalorder %v900, 1
    %v926 = vsel %vm922, 1, 0
    %v927 = vsel %vm923, 1, 0
    %v928 = vsel %vm924, 1, 0
    %v929 = vsel %vm925, 1, 0
    %v930 = vcvt.s32.f32 %v926
    %v931 = vcvt.s32.f32 %v927
    %v932 = vcvt.s32.f32 %v928
    %v933 = vcvt.s32.f32 %v929
    %s934 = scalar_select %p849, 1, 0
    %v935 = vstv %s934
    %vm936 = vcmp.eq.s32.totalorder %v935, 1
    %v937 = vsel %vm936, %v918, %v930
    %v938 = vsel %vm936, %v919, %v931
    %v939 = vsel %vm936, %v920, %v932
    %v940 = vsel %vm936, %v921, %v933
    %v941 = vsub.f32 %v809, %v908
    %v942 = vsub.f32 %v815, %v907
    %v943 = vsub.f32 %v821, %v906
    %v944 = vsub.f32 %v827, %v909
    %v945 = vand.u32 2147483647, %v941
    %v946 = vand.u32 2147483647, %v942
    %v947 = vand.u32 2147483647, %v943
    %v948 = vand.u32 2147483647, %v944
    %v949 = vmul.f32 %v937, %v945
    %v950 = vmul.f32 %v938, %v946
    %v951 = vmul.f32 %v939, %v947
    %v952 = vmul.f32 %v940, %v948
    %v953 = vadd.f32 %v949, 0.0
    %v954 = vadd.f32 %v950, 0.0
    %v955 = vadd.f32 %v951, 0.0
    %v956 = vadd.f32 %v952, 0.0
    %v957 = vrot.slane %v809, 2
    %v958 = vrot.slane %v815, 2
    %v959 = vrot.slane %v821, 2
    %v960 = vrot.slane %v827, 2
    %vm961 = vcmp.lt.s32.totalorder %v831, 6
    %v962 = vsel %vm961, %v959, %v960
    %v963 = vsel %vm961, %v958, %v959
    %v964 = vsel %vm961, %v957, %v958
    %v965 = vsel %vm961, %v960, %v957
    %vm966 = vcmp.lt.s32.totalorder %v897, 2
    %vm967 = vcmp.lt.s32.totalorder %v898, 2
    %vm968 = vcmp.lt.s32.totalorder %v899, 2
    %vm969 = vcmp.lt.s32.totalorder %v900, 2
    %v970 = vsel %vm966, 1, 0
    %v971 = vsel %vm967, 1, 0
    %v972 = vsel %vm968, 1, 0
    %v973 = vsel %vm969, 1, 0
    %v974 = vcvt.s32.f32 %v970
    %v975 = vcvt.s32.f32 %v971
    %v976 = vcvt.s32.f32 %v972
    %v977 = vcvt.s32.f32 %v973
    %vm978 = vcmp.ge.s32.totalorder %v897, 2
    %vm979 = vcmp.ge.s32.totalorder %v898, 2
    %vm980 = vcmp.ge.s32.totalorder %v899, 2
    %vm981 = vcmp.ge.s32.totalorder %v900, 2
    %v982 = vsel %vm978, 1, 0
    %v983 = vsel %vm979, 1, 0
    %v984 = vsel %vm980, 1, 0
    %v985 = vsel %vm981, 1, 0
    %v986 = vcvt.s32.f32 %v982
    %v987 = vcvt.s32.f32 %v983
    %v988 = vcvt.s32.f32 %v984
    %v989 = vcvt.s32.f32 %v985
    %v990 = vsel %vm936, %v974, %v986
    %v991 = vsel %vm936, %v975, %v987
    %v992 = vsel %vm936, %v976, %v988
    %v993 = vsel %vm936, %v977, %v989
    %v994 = vsub.f32 %v809, %v964
    %v995 = vsub.f32 %v815, %v963
    %v996 = vsub.f32 %v821, %v962
    %v997 = vsub.f32 %v827, %v965
    %v998 = vand.u32 2147483647, %v994
    %v999 = vand.u32 2147483647, %v995
    %v1000 = vand.u32 2147483647, %v996
    %v1001 = vand.u32 2147483647, %v997
    %v1002 = vmul.f32 %v990, %v998
    %v1003 = vmul.f32 %v991, %v999
    %v1004 = vmul.f32 %v992, %v1000
    %v1005 = vmul.f32 %v993, %v1001
    %v1006 = vadd.f32 %v953, %v1002
    %v1007 = vadd.f32 %v954, %v1003
    %v1008 = vadd.f32 %v955, %v1004
    %v1009 = vadd.f32 %v956, %v1005
    %v1010 = vrot.slane %v809, 3
    %v1011 = vrot.slane %v815, 3
    %v1012 = vrot.slane %v821, 3
    %v1013 = vrot.slane %v827, 3
    %vm1014 = vcmp.lt.s32.totalorder %v831, 5
    %v1015 = vsel %vm1014, %v1012, %v1013
    %v1016 = vsel %vm1014, %v1011, %v1012
    %v1017 = vsel %vm1014, %v1010, %v1011
    %v1018 = vsel %vm1014, %v1013, %v1010
    %vm1019 = vcmp.lt.s32.totalorder %v897, 1
    %vm1020 = vcmp.lt.s32.totalorder %v898, 1
    %vm1021 = vcmp.lt.s32.totalorder %v899, 1
    %vm1022 = vcmp.lt.s32.totalorder %v900, 1
    %v1023 = vsel %vm1019, 1, 0
    %v1024 = vsel %vm1020, 1, 0
    %v1025 = vsel %vm1021, 1, 0
    %v1026 = vsel %vm1022, 1, 0
    %v1027 = vcvt.s32.f32 %v1023
    %v1028 = vcvt.s32.f32 %v1024
    %v1029 = vcvt.s32.f32 %v1025
    %v1030 = vcvt.s32.f32 %v1026
    %vm1031 = vcmp.ge.s32.totalorder %v897, 3
    %vm1032 = vcmp.ge.s32.totalorder %v898, 3
    %vm1033 = vcmp.ge.s32.totalorder %v899, 3
    %vm1034 = vcmp.ge.s32.totalorder %v900, 3
    %v1035 = vsel %vm1031, 1, 0
    %v1036 = vsel %vm1032, 1, 0
    %v1037 = vsel %vm1033, 1, 0
    %v1038 = vsel %vm1034, 1, 0
    %v1039 = vcvt.s32.f32 %v1035
    %v1040 = vcvt.s32.f32 %v1036
    %v1041 = vcvt.s32.f32 %v1037
    %v1042 = vcvt.s32.f32 %v1038
    %v1043 = vsel %vm936, %v1027, %v1039
    %v1044 = vsel %vm936, %v1028, %v1040
    %v1045 = vsel %vm936, %v1029, %v1041
    %v1046 = vsel %vm936, %v1030, %v1042
    %v1047 = vsub.f32 %v809, %v1017
    %v1048 = vsub.f32 %v815, %v1016
    %v1049 = vsub.f32 %v821, %v1015
    %v1050 = vsub.f32 %v827, %v1018
    %v1051 = vand.u32 2147483647, %v1047
    %v1052 = vand.u32 2147483647, %v1048
    %v1053 = vand.u32 2147483647, %v1049
    %v1054 = vand.u32 2147483647, %v1050
    %v1055 = vmul.f32 %v1043, %v1051
    %v1056 = vmul.f32 %v1044, %v1052
    %v1057 = vmul.f32 %v1045, %v1053
    %v1058 = vmul.f32 %v1046, %v1054
    %v1059 = vadd.f32 %v1006, %v1055
    %v1060 = vadd.f32 %v1007, %v1056
    %v1061 = vadd.f32 %v1008, %v1057
    %v1062 = vadd.f32 %v1009, %v1058
    %v1063 = vadd.f32 %v1059, %v1060
    %v1064 = vadd.f32 %v1063, %v1061
    %v1065 = vadd.f32 %v1064, %v1062
    %1066 = vadd.xlane.f32.xlu0 %v1065
    %v1067 = vpop.xlane.xlu0 %1066
    %v1068 = vrot.slane %v1067, 4
    %v1069 = vadd.f32 %v1067, %v1068
    %v1070 = vrot.slane %v1069, 2
    %v1071 = vadd.f32 %v1069, %v1070
    %v1072 = vrot.slane %v1071, 1
    %v1073 = vadd.f32 %v1071, %v1072
    %s1074 = vtos %v1073
    %v1076 = vrot.slane %v809, 4
    %v1078 = vsub.f32 %v809, %v1076
    %v1079 = vand.u32 2147483647, %v1078
    %vm1080 = vcmask 1043456
    %v1081 = vsel %vm1080, %v1079, 0.0
    %1082 = vadd.xlane.f32.xlu0 %v1081
    %v1083 = vpop.xlane.xlu0 %1082
    %v1084 = vrot.slane %v1083, 4
    %v1085 = vadd.f32 %v1083, %v1084
    %v1086 = vrot.slane %v1085, 2
    %v1087 = vadd.f32 %v1085, %v1086
    %v1088 = vrot.slane %v1087, 1
    %v1089 = vadd.f32 %v1087, %v1088
    %s1090 = vtos %v1089
    %p1091 = scmp.eq.s32.totalorder 0, 0
    %s1092 = scalar_select %p1091, %s1090, 0.0
    %v1093 = vstv %s1074
    %v1094 = vsel %vm838, %v1093, 0.0
    %vm1095 = vcmp.eq.s32.totalorder %v833, 1
    %vm1096 = vmand %vm836, %vm1095
    %v1097 = vstv %s1092
    %v1098 = vsel %vm1096, %v1097, 0.0
    %v1099 = vadd.f32 %v1094, %v1098
    %1100 = vst [vmem:[#allocation7] sm:$0xff] %v1099
    // Predicated region
    $region18: #{tpu_custom_call.1} parent=1 // pred_check
      _
    $region19: #{tpu_custom_call.1} parent=1 // pred_check_branch
      %1102 = sbr.rel (0) target = $region21
    $region20: #{tpu_custom_call.1} parent=1 // pred_region
      %s1104 = ssub.s32 128, 128
      %1105 = vsyncadd [#allocation4], %s1104
      %s1107 = sshll.u32 [#allocation7], 4
      %s1108 = int_to_ptr.vmem [resolvable:$true] %s1107
      %1110 = dma.vmem_to_hbm [thread:$0]  %s1108, 128, %s2, [#allocation4]
    $region21: #{tpu_custom_call.1} parent=1 // pred_fallthru
      _
    // Predicated region
    $region22: #{tpu_custom_call.1} parent=1 // pred_check
      _
    $region23: #{tpu_custom_call.1} parent=1 // pred_check_branch
      %1112 = sbr.rel (0) target = $region25
    $region24: #{tpu_custom_call.1} parent=1 // pred_region
      %1113 = dma.done [#allocation4], 128
    $region25: #{tpu_custom_call.1} parent=1 // pred_fallthru
      _
    %1114 = vsyncpa [#allocation3], 1
    %1115 = vsyncpa [#allocation6], 1
    %1116 = vsyncpa [#allocation4], 1

// kernel: tpu_custom_call.1
$region0: #{tpu_custom_call.1}
  #allocation0 [shape = 'u32[]', space=smem, size = 0x4, offset = 0x4, fixed_abs, tag = 'smem constant byte address 0x4 - core index']
  #allocation1 [shape = 'u32[144,128]{1,0:T(1,128)}', space=vmem, size = 0x12000, scoped, tag = 'internal scratch']
  %s0 = inlined_call_operand.hbm [shape: f32[32,128], index: 0, kind: input, shape index: {}]
  %s1 = inlined_call_operand.hbm [shape: f32[128,128], index: 1, kind: input, shape index: {}]
  %s2 = inlined_call_operand.hbm [shape: f32[1,8,128], index: 2, kind: output, shape index: {}]
  %s3 = sld [smem:[#allocation0]]
  $region26: #{tpu_custom_call.1} parent=0
    _
  %s5 = ssub.s32 1, %s3
  %s6 = scalar_select 0, %s5, %s3
  $region1: #{tpu_custom_call.1} parent=0
    #allocation2 [shape = 'u8[16384]{0}', space=vmem, size = 0x4000, scoped, tag = 'input window, operand 0, single buffered']
    #allocation3 [shape = 's32[1]{0}', space=sflag, size = 0x4, scoped, tag = 'scoped memory for tpu_custom_call.1']
    #allocation4 [shape = 's32[1]{0}', space=sflag, size = 0x4, scoped, tag = 'scoped memory for tpu_custom_call.1']
    #allocation5 [shape = 'u8[65536]{0}', space=vmem, size = 0x10000, scoped, tag = 'input window, operand 1, single buffered']
    #allocation6 [shape = 's32[1]{0}', space=sflag, size = 0x4, scoped, tag = 'scoped memory for tpu_custom_call.1']
    #allocation7 [shape = 'u8[4096]{0}', space=vmem, size = 0x1000, scoped, tag = 'output window, operand 0, single buffered']
    %7 = vsyncpa [#allocation3], 0
    %8 = vsyncpa [#allocation6], 0
    %9 = vsyncpa [#allocation4], 0
    // Predicated region
    $region2: #{tpu_custom_call.1} parent=1 // pred_check
      _
    $region3: #{tpu_custom_call.1} parent=1 // pred_check_branch
      %11 = sbr.rel (0) target = $region5
    $region4: #{tpu_custom_call.1} parent=1 // pred_region
      %s13 = ssub.s32 512, 512
      %14 = vsyncadd [#allocation3], %s13
      %s15 = sshll.u32 [#allocation2], 4
      %s16 = int_to_ptr.vmem [resolvable:$true] %s15
      %21 = dma.hbm_to_vmem [thread:$0]  %s0, 512, %s16, [#allocation3], 128, 128, 8
    $region5: #{tpu_custom_call.1} parent=1 // pred_fallthru
      _
    // Predicated region
    $region6: #{tpu_custom_call.1} parent=1 // pred_check
      _
    $region7: #{tpu_custom_call.1} parent=1 // pred_check_branch
      %23 = sbr.rel (0) target = $region9
    $region8: #{tpu_custom_call.1} parent=1 // pred_region
      %s25 = ssub.s32 2048, 2048
      %26 = vsyncadd [#allocation6], %s25
      %s27 = sshll.u32 [#allocation5], 4
      %s28 = int_to_ptr.vmem [resolvable:$true] %s27
      %33 = dma.hbm_to_vmem [thread:$0]  %s1, 2048, %s28, [#allocation6], 128, 128, 8
    $region9: #{tpu_custom_call.1} parent=1 // pred_fallthru
      _
    // Predicated region
    $region10: #{tpu_custom_call.1} parent=1 // pred_check
      _
    $region11: #{tpu_custom_call.1} parent=1 // pred_check_branch
      %35 = sbr.rel (0) target = $region13
    $region12: #{tpu_custom_call.1} parent=1 // pred_region
      %36 = dma.done [#allocation3], 512
    $region13: #{tpu_custom_call.1} parent=1 // pred_fallthru
      _
    // Predicated region
    $region14: #{tpu_custom_call.1} parent=1 // pred_check
      _
    $region15: #{tpu_custom_call.1} parent=1 // pred_check_branch
      %38 = sbr.rel (0) target = $region17
    $region16: #{tpu_custom_call.1} parent=1 // pred_region
      %39 = dma.done [#allocation6], 2048
    $region17: #{tpu_custom_call.1} parent=1 // pred_fallthru
      _
    %v40 = vld [vmem:[#allocation2] sm:$0xff]
    %v41 = vld [vmem:[#allocation2 + $0x8] sm:$0xff]
    %v42 = vld [vmem:[#allocation2 + $0x10] sm:$0xff]
    %v43 = vld [vmem:[#allocation2 + $0x18] sm:$0xff]
    %v44 = vld [vmem:[#allocation5] sm:$0xff]
    %v45 = vld [vmem:[#allocation5 + $0x8] sm:$0xff]
    %v46 = vld [vmem:[#allocation5 + $0x10] sm:$0xff]
    %v47 = vld [vmem:[#allocation5 + $0x18] sm:$0xff]
    %v48 = vld [vmem:[#allocation5 + $0x20] sm:$0xff]
    %v49 = vld [vmem:[#allocation5 + $0x28] sm:$0xff]
    %v50 = vld [vmem:[#allocation5 + $0x30] sm:$0xff]
    %v51 = vld [vmem:[#allocation5 + $0x38] sm:$0xff]
    %v52 = vld [vmem:[#allocation5 + $0x40] sm:$0xff]
    %v53 = vld [vmem:[#allocation5 + $0x48] sm:$0xff]
    %v54 = vld [vmem:[#allocation5 + $0x50] sm:$0xff]
    %v55 = vld [vmem:[#allocation5 + $0x58] sm:$0xff]
    %v56 = vld [vmem:[#allocation5 + $0x60] sm:$0xff]
    %v57 = vld [vmem:[#allocation5 + $0x68] sm:$0xff]
    %v58 = vld [vmem:[#allocation5 + $0x70] sm:$0xff]
    %v59 = vld [vmem:[#allocation5 + $0x78] sm:$0xff]
    %60 = vmatprep.subr.mxu0 0.0
    %61 = vmatpush1.msra.mxu0 %v59
    %62 = vmatprep.subr.mxu0 0.0
    %63 = vmatpush1.msra.mxu0 %v58
    %64 = vmatprep.subr.mxu0 0.0
    %65 = vmatpush1.msra.mxu0 %v57
    %66 = vmatprep.subr.mxu0 0.0
    %67 = vmatpush1.msra.mxu0 %v56
    %68 = vmatprep.subr.mxu0 0.0
    %69 = vmatpush1.msra.mxu0 %v55
    %70 = vmatprep.subr.mxu0 0.0
    %71 = vmatpush1.msra.mxu0 %v54
    %72 = vmatprep.subr.mxu0 0.0
    %73 = vmatpush1.msra.mxu0 %v53
    %74 = vmatprep.subr.mxu0 0.0
    %75 = vmatpush1.msra.mxu0 %v52
    %76 = vmatprep.subr.mxu0 0.0
    %77 = vmatpush1.msra.mxu0 %v51
    %78 = vmatprep.subr.mxu0 0.0
    %79 = vmatpush1.msra.mxu0 %v50
    %80 = vmatprep.subr.mxu0 0.0
    %81 = vmatpush1.msra.mxu0 %v49
    %82 = vmatprep.subr.mxu0 0.0
    %83 = vmatpush1.msra.mxu0 %v48
    %84 = vmatprep.subr.mxu0 0.0
    %85 = vmatpush1.msra.mxu0 %v47
    %86 = vmatprep.subr.mxu0 0.0
    %87 = vmatpush1.msra.mxu0 %v46
    %88 = vmatprep.subr.mxu0 0.0
    %89 = vmatpush1.msra.mxu0 %v45
    %90 = vmatprep.subr.mxu0 0.0
    %91 = vmatpush1.msra.mxu0 %v44
    %92 = vmatprep.subr.mxu0 0.0
    %93 = vmatpush2.msra.mxu0 0.0
    %94 = vmatprep.subr.mxu0 0.0
    %95 = vmatpush2.msra.mxu0 0.0
    %96 = vmatprep.subr.mxu0 0.0
    %97 = vmatpush2.msra.mxu0 0.0
    %98 = vmatprep.subr.mxu0 0.0
    %99 = vmatpush2.msra.mxu0 0.0
    %100 = vmatprep.subr.mxu0 0.0
    %101 = vmatpush2.msra.mxu0 0.0
    %102 = vmatprep.subr.mxu0 0.0
    %103 = vmatpush2.msra.mxu0 0.0
    %104 = vmatprep.subr.mxu0 0.0
    %105 = vmatpush2.msra.mxu0 0.0
    %106 = vmatprep.subr.mxu0 0.0
    %107 = vmatpush2.msra.mxu0 0.0
    %108 = vmatprep.subr.mxu0 0.0
    %109 = vmatpush2.msra.mxu0 0.0
    %110 = vmatprep.subr.mxu0 0.0
    %111 = vmatpush2.msra.mxu0 0.0
    %112 = vmatprep.subr.mxu0 0.0
    %113 = vmatpush2.msra.mxu0 0.0
    %114 = vmatprep.subr.mxu0 0.0
    %115 = vmatpush2.msra.mxu0 0.0
    %116 = vmatprep.subr.mxu0 0.0
    %117 = vmatpush2.msra.mxu0 0.0
    %118 = vmatprep.subr.mxu0 0.0
    %119 = vmatpush2.msra.mxu0 0.0
    %120 = vmatprep.subr.mxu0 0.0
    %121 = vmatpush2.msra.mxu0 0.0
    %122 = vmatprep.subr.mxu0 0.0
    %123 = vmatpush2.msra.mxu0 0.0
    %124 = vmatprep.mubr.f32.mxu0 0.0
    %125 = vmatmul.mubr.f32.gmra.mxu0 %v40
    %v126 = vpop.f32.mrf.mxu0
    %v127 = vadd.f32 0.0, %v126
    %v128 = vpop.f32.mrf.mxu0
    %129 = vmatprep.mubr.f32.mxu0 0.0
    %130 = vmatmul.mubr.f32.gmra.mxu0 %v41
    %v131 = vpop.f32.mrf.mxu0
    %v132 = vadd.f32 0.0, %v131
    %v133 = vpop.f32.mrf.mxu0
    %134 = vmatprep.mubr.f32.mxu0 0.0
    %135 = vmatmul.mubr.f32.gmra.mxu0 %v42
    %v136 = vpop.f32.mrf.mxu0
    %v137 = vadd.f32 0.0, %v136
    %v138 = vpop.f32.mrf.mxu0
    %139 = vmatprep.mubr.f32.mxu0 0.0
    %140 = vmatmul.mubr.f32.gmra.mxu0 %v43
    %v141 = vpop.f32.mrf.mxu0
    %v142 = vadd.f32 0.0, %v141
    %v143 = vpop.f32.mrf.mxu0
    %144 = vdwg.mxu0
    %v145 = vlaneseq
    %v146 = vshrl.u32 %v145, 7
    %v147 = vlaneseq
    %v148 = vand.u32 %v147, 127
    %v149 = vcvt.s32.f32 %v146
    %v150 = vrot.slane %v149, 7
    %vm151 = vcmp.eq.s32.totalorder %v146, 0
    %vm152 = vcmp.eq.s32.totalorder %v148, 0
    %vm153 = vmand %vm151, %vm152
    %v154 = vsel %vm153, %v150, 0.0
    %155 = vadd.xlane.f32.xlu0 %v154
    %v156 = vpop.xlane.xlu0 %155
    %v157 = vrot.slane %v156, 4
    %v158 = vadd.f32 %v156, %v157
    %v159 = vrot.slane %v158, 2
    %v160 = vadd.f32 %v158, %v159
    %v161 = vrot.slane %v160, 1
    %v162 = vadd.f32 %v160, %v161
    %s163 = vtos %v162
    %p164 = scmp.gt.f32.partialorder %s163, 3.5
    %v165 = vadd.s32 %v146, 8
    %v166 = vadd.s32 %v146, 16
    %v167 = vadd.s32 %v146, 24
    %vm168 = vcmp.lt.s32.totalorder %v146, 0
    %v169 = vsub.s32 0, %v146
    %v170 = vsel %vm168, %v169, %v146
    %v171 = vshrl.u32 %v170, 2
    %v172 = vand.u32 %v170, 3
    %v173 = vsub.s32 0, %v172
    %v174 = vsel %vm168, %v173, %v172
    %vm175 = vcmp.lt.s32.totalorder %v165, 0
    %v176 = vsub.s32 0, %v165
    %v177 = vsel %vm175, %v176, %v165
    %v178 = vshrl.u32 %v177, 2
    %v179 = vand.u32 %v177, 3
    %v180 = vsub.s32 0, %v179
    %v181 = vsel %vm175, %v180, %v179
    %vm182 = vcmp.lt.s32.totalorder %v166, 0
    %v183 = vsub.s32 0, %v166
    %v184 = vsel %vm182, %v183, %v166
    %v185 = vshrl.u32 %v184, 2
    %v186 = vand.u32 %v184, 3
    %v187 = vsub.s32 0, %v186
    %v188 = vsel %vm182, %v187, %v186
    %vm189 = vcmp.lt.s32.totalorder %v167, 0
    %v190 = vsub.s32 0, %v167
    %v191 = vsel %vm189, %v190, %v167
    %v192 = vshrl.u32 %v191, 2
    %v193 = vand.u32 %v191, 3
    %v194 = vsub.s32 0, %v193
    %v195 = vsel %vm189, %v194, %v193
    %vm196 = vcmp.ne.s32.totalorder %v174, 0
    %vm197 = vcmp.ne.s32.totalorder %v181, 0
    %vm198 = vcmp.ne.s32.totalorder %v188, 0
    %vm199 = vcmp.ne.s32.totalorder %v195, 0
    %vm200 = vcmp.lt.s32.totalorder %v174, 0
    %vm201 = vcmp.lt.s32.totalorder %v181, 0
    %vm202 = vcmp.lt.s32.totalorder %v188, 0
    %vm203 = vcmp.lt.s32.totalorder %v195, 0
    %vm204 = vmand %vm200, %vm196
    %vm205 = vmand %vm201, %vm197
    %vm206 = vmand %vm202, %vm198
    %vm207 = vmand %vm203, %vm199
    %v208 = vadd.s32 %v174, 4
    %v209 = vadd.s32 %v181, 4
    %v210 = vadd.s32 %v188, 4
    %v211 = vadd.s32 %v195, 4
    %v212 = vsel %vm204, %v208, %v174
    %v213 = vsel %vm205, %v209, %v181
    %v214 = vsel %vm206, %v210, %v188
    %v215 = vsel %vm207, %v211, %v195
    %v216 = vrot.slane %v127, 1
    %v217 = vrot.slane %v132, 1
    %v218 = vrot.slane %v137, 1
    %v219 = vrot.slane %v142, 1
    %vm220 = vcmp.lt.s32.totalorder %v146, 7
    %v221 = vsel %vm220, %v218, %v219
    %v222 = vsel %vm220, %v217, %v218
    %v223 = vsel %vm220, %v216, %v217
    %v224 = vsel %vm220, %v219, %v216
    %vm225 = vcmp.lt.s32.totalorder %v212, 3
    %vm226 = vcmp.lt.s32.totalorder %v213, 3
    %vm227 = vcmp.lt.s32.totalorder %v214, 3
    %vm228 = vcmp.lt.s32.totalorder %v215, 3
    %v229 = vsel %vm225, 1, 0
    %v230 = vsel %vm226, 1, 0
    %v231 = vsel %vm227, 1, 0
    %v232 = vsel %vm228, 1, 0
    %v233 = vcvt.s32.f32 %v229
    %v234 = vcvt.s32.f32 %v230
    %v235 = vcvt.s32.f32 %v231
    %v236 = vcvt.s32.f32 %v232
    %vm237 = vcmp.ge.s32.totalorder %v212, 1
    %vm238 = vcmp.ge.s32.totalorder %v213, 1
    %vm239 = vcmp.ge.s32.totalorder %v214, 1
    %vm240 = vcmp.ge.s32.totalorder %v215, 1
    %v241 = vsel %vm237, 1, 0
    %v242 = vsel %vm238, 1, 0
    %v243 = vsel %vm239, 1, 0
    %v244 = vsel %vm240, 1, 0
    %v245 = vcvt.s32.f32 %v241
    %v246 = vcvt.s32.f32 %v242
    %v247 = vcvt.s32.f32 %v243
    %v248 = vcvt.s32.f32 %v244
    %s249 = scalar_select %p164, 1, 0
    %v250 = vstv %s249
    %vm251 = vcmp.eq.s32.totalorder %v250, 1
    %v252 = vsel %vm251, %v233, %v245
    %v253 = vsel %vm251, %v234, %v246
    %v254 = vsel %vm251, %v235, %v247
    %v255 = vsel %vm251, %v236, %v248
    %v256 = vsub.f32 %v127, %v223
    %v257 = vsub.f32 %v132, %v222
    %v258 = vsub.f32 %v137, %v221
    %v259 = vsub.f32 %v142, %v224
    %v260 = vand.u32 2147483647, %v256
    %v261 = vand.u32 2147483647, %v257
    %v262 = vand.u32 2147483647, %v258
    %v263 = vand.u32 2147483647, %v259
    %v264 = vmul.f32 %v252, %v260
    %v265 = vmul.f32 %v253, %v261
    %v266 = vmul.f32 %v254, %v262
    %v267 = vmul.f32 %v255, %v263
    %v268 = vadd.f32 %v264, 0.0
    %v269 = vadd.f32 %v265, 0.0
    %v270 = vadd.f32 %v266, 0.0
    %v271 = vadd.f32 %v267, 0.0
    %v272 = vrot.slane %v127, 2
    %v273 = vrot.slane %v132, 2
    %v274 = vrot.slane %v137, 2
    %v275 = vrot.slane %v142, 2
    %vm276 = vcmp.lt.s32.totalorder %v146, 6
    %v277 = vsel %vm276, %v274, %v275
    %v278 = vsel %vm276, %v273, %v274
    %v279 = vsel %vm276, %v272, %v273
    %v280 = vsel %vm276, %v275, %v272
    %vm281 = vcmp.lt.s32.totalorder %v212, 2
    %vm282 = vcmp.lt.s32.totalorder %v213, 2
    %vm283 = vcmp.lt.s32.totalorder %v214, 2
    %vm284 = vcmp.lt.s32.totalorder %v215, 2
    %v285 = vsel %vm281, 1, 0
    %v286 = vsel %vm282, 1, 0
    %v287 = vsel %vm283, 1, 0
    %v288 = vsel %vm284, 1, 0
    %v289 = vcvt.s32.f32 %v285
    %v290 = vcvt.s32.f32 %v286
    %v291 = vcvt.s32.f32 %v287
    %v292 = vcvt.s32.f32 %v288
    %vm293 = vcmp.ge.s32.totalorder %v212, 2
    %vm294 = vcmp.ge.s32.totalorder %v213, 2
    %vm295 = vcmp.ge.s32.totalorder %v214, 2
    %vm296 = vcmp.ge.s32.totalorder %v215, 2
    %v297 = vsel %vm293, 1, 0
    %v298 = vsel %vm294, 1, 0
    %v299 = vsel %vm295, 1, 0
    %v300 = vsel %vm296, 1, 0
    %v301 = vcvt.s32.f32 %v297
    %v302 = vcvt.s32.f32 %v298
    %v303 = vcvt.s32.f32 %v299
    %v304 = vcvt.s32.f32 %v300
    %v305 = vsel %vm251, %v289, %v301
    %v306 = vsel %vm251, %v290, %v302
    %v307 = vsel %vm251, %v291, %v303
    %v308 = vsel %vm251, %v292, %v304
    %v309 = vsub.f32 %v127, %v279
    %v310 = vsub.f32 %v132, %v278
    %v311 = vsub.f32 %v137, %v277
    %v312 = vsub.f32 %v142, %v280
    %v313 = vand.u32 2147483647, %v309
    %v314 = vand.u32 2147483647, %v310
    %v315 = vand.u32 2147483647, %v311
    %v316 = vand.u32 2147483647, %v312
    %v317 = vmul.f32 %v305, %v313
    %v318 = vmul.f32 %v306, %v314
    %v319 = vmul.f32 %v307, %v315
    %v320 = vmul.f32 %v308, %v316
    %v321 = vadd.f32 %v268, %v317
    %v322 = vadd.f32 %v269, %v318
    %v323 = vadd.f32 %v270, %v319
    %v324 = vadd.f32 %v271, %v320
    %v325 = vrot.slane %v127, 3
    %v326 = vrot.slane %v132, 3
    %v327 = vrot.slane %v137, 3
    %v328 = vrot.slane %v142, 3
    %vm329 = vcmp.lt.s32.totalorder %v146, 5
    %v330 = vsel %vm329, %v327, %v328
    %v331 = vsel %vm329, %v326, %v327
    %v332 = vsel %vm329, %v325, %v326
    %v333 = vsel %vm329, %v328, %v325
    %vm334 = vcmp.lt.s32.totalorder %v212, 1
    %vm335 = vcmp.lt.s32.totalorder %v213, 1
    %vm336 = vcmp.lt.s32.totalorder %v214, 1
    %vm337 = vcmp.lt.s32.totalorder %v215, 1
    %v338 = vsel %vm334, 1, 0
    %v339 = vsel %vm335, 1, 0
    %v340 = vsel %vm336, 1, 0
    %v341 = vsel %vm337, 1, 0
    %v342 = vcvt.s32.f32 %v338
    %v343 = vcvt.s32.f32 %v339
    %v344 = vcvt.s32.f32 %v340
    %v345 = vcvt.s32.f32 %v341
    %vm346 = vcmp.ge.s32.totalorder %v212, 3
    %vm347 = vcmp.ge.s32.totalorder %v213, 3
    %vm348 = vcmp.ge.s32.totalorder %v214, 3
    %vm349 = vcmp.ge.s32.totalorder %v215, 3
    %v350 = vsel %vm346, 1, 0
    %v351 = vsel %vm347, 1, 0
    %v352 = vsel %vm348, 1, 0
    %v353 = vsel %vm349, 1, 0
    %v354 = vcvt.s32.f32 %v350
    %v355 = vcvt.s32.f32 %v351
    %v356 = vcvt.s32.f32 %v352
    %v357 = vcvt.s32.f32 %v353
    %v358 = vsel %vm251, %v342, %v354
    %v359 = vsel %vm251, %v343, %v355
    %v360 = vsel %vm251, %v344, %v356
    %v361 = vsel %vm251, %v345, %v357
    %v362 = vsub.f32 %v127, %v332
    %v363 = vsub.f32 %v132, %v331
    %v364 = vsub.f32 %v137, %v330
    %v365 = vsub.f32 %v142, %v333
    %v366 = vand.u32 2147483647, %v362
    %v367 = vand.u32 2147483647, %v363
    %v368 = vand.u32 2147483647, %v364
    %v369 = vand.u32 2147483647, %v365
    %v370 = vmul.f32 %v358, %v366
    %v371 = vmul.f32 %v359, %v367
    %v372 = vmul.f32 %v360, %v368
    %v373 = vmul.f32 %v361, %v369
    %v374 = vadd.f32 %v321, %v370
    %v375 = vadd.f32 %v322, %v371
    %v376 = vadd.f32 %v323, %v372
    %v377 = vadd.f32 %v324, %v373
    %v378 = vadd.f32 %v374, %v375
    %v379 = vadd.f32 %v378, %v376
    %v380 = vadd.f32 %v379, %v377
    %381 = vadd.xlane.f32.xlu0 %v380
    %v382 = vpop.xlane.xlu0 %381
    %v383 = vrot.slane %v382, 4
    %v384 = vadd.f32 %v382, %v383
    %v385 = vrot.slane %v384, 2
    %v386 = vadd.f32 %v384, %v385
    %v387 = vrot.slane %v386, 1
    %v388 = vadd.f32 %v386, %v387
    %s389 = vtos %v388
    %v391 = vrot.slane %v127, 4
    %v393 = vsub.f32 %v127, %v391
    %v394 = vand.u32 2147483647, %v393
    %vm395 = vcmask 1043456
    %v396 = vsel %vm395, %v394, 0.0
    %397 = vadd.xlane.f32.xlu0 %v396
    %v398 = vpop.xlane.xlu0 %397
    %v399 = vrot.slane %v398, 4
    %v400 = vadd.f32 %v398, %v399
    %v401 = vrot.slane %v400, 2
    %v402 = vadd.f32 %v400, %v401
    %v403 = vrot.slane %v402, 1
    %v404 = vadd.f32 %v402, %v403
    %s405 = vtos %v404
    %p406 = scmp.eq.s32.totalorder 0, 0
    %s407 = scalar_select %p406, %s405, 0.0
    %v408 = vstv %s389
    %v409 = vsel %vm153, %v408, 0.0
    %vm410 = vcmp.eq.s32.totalorder %v148, 1
    %vm411 = vmand %vm151, %vm410
    %v412 = vstv %s407
    %v413 = vsel %vm411, %v412, 0.0
    %v414 = vadd.f32 %v409, %v413
    %415 = vst [vmem:[#allocation7] sm:$0xff] %v414
    // Predicated region
    $region18: #{tpu_custom_call.1} parent=1 // pred_check
      _
    $region19: #{tpu_custom_call.1} parent=1 // pred_check_branch
      %417 = sbr.rel (0) target = $region21
    $region20: #{tpu_custom_call.1} parent=1 // pred_region
      %s419 = ssub.s32 128, 128
      %420 = vsyncadd [#allocation4], %s419
      %s422 = sshll.u32 [#allocation7], 4
      %s423 = int_to_ptr.vmem [resolvable:$true] %s422
      %425 = dma.vmem_to_hbm [thread:$0]  %s423, 128, %s2, [#allocation4]
    $region21: #{tpu_custom_call.1} parent=1 // pred_fallthru
      _
    // Predicated region
    $region22: #{tpu_custom_call.1} parent=1 // pred_check
      _
    $region23: #{tpu_custom_call.1} parent=1 // pred_check_branch
      %427 = sbr.rel (0) target = $region25
    $region24: #{tpu_custom_call.1} parent=1 // pred_region
      %428 = dma.done [#allocation4], 128
    $region25: #{tpu_custom_call.1} parent=1 // pred_fallthru
      _
    %429 = vsyncpa [#allocation3], 1
    %430 = vsyncpa [#allocation6], 1
    %431 = vsyncpa [#allocation4], 1

</llo_original>
